<compile_context>
chip_gen: v7x
topology: tpu7x:2x2x1
jax: 0.10.0
libtpu: 0.0.40
codegen_flags: <defaults>
</compile_context>

<pallas_src>
import functools

import jax
import jax.numpy as jnp
from jax.experimental import pallas as pl
from jax.experimental.pallas import tpu as pltpu


def _round_up(n, m):
    return ((n + m - 1) // m) * m


def _choose_tb(B, tb_max=512, min_steps=4):
    """Pick a 128-multiple batch tile: big enough to amortize per-step overhead,
    never padding past the next 128-lane multiple of B, and small enough to give
    the grid >= min_steps steps (for v7x's two TensorCores) when B allows."""
    b128 = _round_up(B, 128)
    tb = min(_round_up(tb_max, 128), b128)
    while tb > 128 and -(-b128 // tb) < min_steps:
        tb -= 128
    return tb


def funnet_kernel(xT_ref, w1T_ref, whT_ref, bhT_ref, wlT_ref, blT_ref, o_ref,
                  *, n_dim, num_layers, dp, matmul_dtype):
    """One batch tile of FunNet, feature-major / batch-on-lanes.

    xT_ref : (nd_pad, tb)    transposed inputs; row n_dim is the constant-1 row
                             (first-layer bias), remaining padded rows are 0
    w1T_ref: (F, nd_pad)     first layer (f32), w0_initial and b1 folded in
    whT_ref: (L-1, F, F)     hidden layers, block-diagonal, w0 folded in
    bhT_ref: (L-1, F, 1)     hidden biases (f32), w0 folded in
    wlT_ref: (n_dim*dp, F)   final linear layer, dim_out padded to dp per dim
    blT_ref: (n_dim*dp, 1)
    o_ref  : (1, tb)         lane-dense output row for this batch tile
    """
    # First Siren layer: f32, bias folded via the ones row of xT.
    h = jnp.sin(jnp.dot(w1T_ref[...], xT_ref[...],
                        preferred_element_type=jnp.float32))
    # Hidden Siren layers: one block-diagonal MXU matmul per layer for ALL dims.
    for l in range(num_layers - 1):
        h = jnp.sin(jnp.dot(whT_ref[l], h.astype(matmul_dtype),
                            preferred_element_type=jnp.float32) + bhT_ref[l])
    # Final linear layer (Identity activation): (n_dim*dp, tb).
    y = jnp.dot(wlT_ref[...], h.astype(matmul_dtype),
                preferred_element_type=jnp.float32) + blT_ref[...]
    # Multip: product over dims (8-aligned sublane segments; zero-padded rows
    # multiply to 0 and drop out of the sum), then sum over dim_out -> (1, tb).
    prod = y[0:dp, :]
    for d in range(1, n_dim):
        prod = prod * y[d * dp:(d + 1) * dp, :]
    o_ref[...] = jnp.sum(prod, axis=0, keepdims=True)


def funnet_forward(x, params, *, num_layers, w0=10.0, w0_initial=10.0,
                   tb=512, matmul_dtype=jnp.bfloat16):
    w1, b1, wh, bh, wl, bl = params
    B, n_dim = x.shape
    H = w1.shape[-1]
    dim_out = wl.shape[-1]
    assert num_layers >= 2, "need at least one hidden Siren layer"
    lm1 = num_layers - 1
    F = n_dim * H
    dp = _round_up(dim_out, 8)          # pad each dim's output to the 8-sublane tile
    nd_pad = _round_up(n_dim + 1, 8)    # +1 reserves a constant-1 row for b1 folding
    f32 = jnp.float32

    # ---- pack / fold parameters once, wrapper-side (plain JAX) -------------
    # First layer: transposed, per-dim block structure, w0_initial folded in,
    # bias folded into column n_dim (multiplied by the constant-1 input row).
    w1T = jnp.zeros((F, nd_pad), f32)
    for d in range(n_dim):
        w1T = w1T.at[d * H:(d + 1) * H, d].set(w0_initial * w1[d, 0, :])
    w1T = w1T.at[:, n_dim].set((w0_initial * b1).astype(f32).reshape(F))
    # Hidden layers: block-diagonal transposed weights, w0 folded in.
    whT = jnp.zeros((lm1, F, F), f32)
    for l in range(lm1):
        for d in range(n_dim):
            whT = whT.at[l, d * H:(d + 1) * H, d * H:(d + 1) * H].set(
                (w0 * wh[d, l]).T)
    bhT = (w0 * bh).astype(f32).transpose(1, 0, 2, 3).reshape(lm1, F, 1)
    # Final layer: per-dim blocks, rows zero-padded to dp sublanes per dim.
    wlT = jnp.zeros((n_dim * dp, F), f32)
    blT = jnp.zeros((n_dim * dp, 1), f32)
    for d in range(n_dim):
        wlT = wlT.at[d * dp:d * dp + dim_out, d * H:(d + 1) * H].set(wl[d].T)
        blT = blT.at[d * dp:d * dp + dim_out, 0].set(bl[d, 0, :])
    # Hidden / final matmul operands in the (possibly reduced) matmul dtype.
    whT = whT.astype(matmul_dtype)
    wlT = wlT.astype(matmul_dtype)

    # ---- batch tiling: bounded padding + enough grid steps ------------------
    tb = _choose_tb(B, tb_max=tb)
    num_tiles = pl.cdiv(B, tb)
    B_pad = num_tiles * tb
    xp = jnp.pad(x.astype(f32), ((0, B_pad - B), (0, nd_pad - n_dim)))
    xp = xp.at[:, n_dim].set(1.0)       # constant-1 column -> first-layer bias
    xT = xp.T                           # (nd_pad, B_pad), batch on lanes

    kernel = functools.partial(funnet_kernel, n_dim=n_dim,
                               num_layers=num_layers, dp=dp,
                               matmul_dtype=matmul_dtype)

    def const_spec(a):
        nd = a.ndim
        return pl.BlockSpec(a.shape, lambda i, _nd=nd: (0,) * _nd)

    out = pl.pallas_call(
        kernel,
        out_shape=jax.ShapeDtypeStruct((1, B_pad), f32),
        grid=(num_tiles,),
        in_specs=[
            pl.BlockSpec((nd_pad, tb), lambda i: (0, i)),   # x tile, batch on lanes
            const_spec(w1T),
            const_spec(whT), const_spec(bhT),
            const_spec(wlT), const_spec(blT),
        ],
        out_specs=pl.BlockSpec((1, tb), lambda i: (0, i)),  # lane-dense output
        compiler_params=pltpu.CompilerParams(
            dimension_semantics=("parallel",),
            vmem_limit_bytes=32 * 1024 * 1024),
    )(xT, w1T, whT, bhT, wlT, blT)

    # (1, B_pad) lane-major row -> (B, 1), dropping the padded tail.
    return out.reshape(B_pad, 1)[:B]


def funnet_reference(x, params, *, num_layers, w0=10.0, w0_initial=10.0):
    """Plain-JAX per-dim reference (mirrors the torch module) for correctness."""
    w1, b1, wh, bh, wl, bl = params
    n_dim = x.shape[1]
    prod = None
    for d in range(n_dim):
        x_d = x[:, d:d + 1]
        h = jnp.sin(w0_initial * (x_d * w1[d] + b1[d]))
        for l in range(num_layers - 1):
            h = jnp.sin(w0 * (h @ wh[d, l] + bh[d, l]))
        y = h @ wl[d] + bl[d]
        prod = y if prod is None else prod * y
    return jnp.sum(prod, axis=1, keepdims=True)


def init_params(key, n_dim, num_layers, dim_hidden, dim_out, w0=10.0):
    """Deterministic SIREN-style init (shapes match the torch module)."""
    ks = jax.random.split(key, 6)
    lm1 = num_layers - 1
    # first layer (dim_in=1): U(-1/fan_in, 1/fan_in) = U(-1, 1)
    w1 = jax.random.uniform(ks[0], (n_dim, 1, dim_hidden), jnp.float32, -1.0, 1.0)
    b1 = jax.random.uniform(ks[1], (n_dim, 1, dim_hidden), jnp.float32, -1.0, 1.0)
    c = (6.0 / dim_hidden) ** 0.5 / w0
    wh = jax.random.uniform(ks[2], (n_dim, lm1, dim_hidden, dim_hidden),
                            jnp.float32, -c, c)
    bh = jax.random.uniform(ks[3], (n_dim, lm1, 1, dim_hidden),
                            jnp.float32, -c, c)
    wl = jax.random.uniform(ks[4], (n_dim, dim_hidden, dim_out),
                            jnp.float32, -c, c)
    bl = jax.random.uniform(ks[5], (n_dim, 1, dim_out), jnp.float32, -c, c)
    return (w1, b1, wh, bh, wl, bl)


if __name__ == "__main__":
    # Small, FunNet-consistent sizes; B deliberately NOT a multiple of 128 so the
    # padded-tail path and the tb auto-selection (128 here -> 3 grid steps,
    # padding only to the next 128-lane multiple) are both exercised.
    N_dim, num_layers, dim_hidden, dim_out = 2, 3, 32, 4
    B = 300

    key = jax.random.PRNGKey(0)
    k_x, k_p = jax.random.split(key)
    # Inputs in [0, 1], like torch.linspace(left_end, right_end, N_part).
    x = jax.random.uniform(k_x, (B, N_dim), jnp.float32, 0.0, 1.0)
    params = init_params(k_p, N_dim, num_layers, dim_hidden, dim_out, w0=10.0)

    ref = funnet_reference(x, params, num_layers=num_layers,
                           w0=10.0, w0_initial=10.0)

    # 1) exact path (f32 matmul operands) -> strict tolerance.
    out_f32 = funnet_forward(x, params, num_layers=num_layers, w0=10.0,
                             w0_initial=10.0, tb=512, matmul_dtype=jnp.float32)
    out_f32 = jax.block_until_ready(out_f32)
    assert out_f32.shape == (B, 1)
    assert jnp.allclose(out_f32, ref, rtol=1e-4, atol=1e-4), "f32 mismatch vs reference"

    # 2) production path (bf16 hidden/final matmul operands, f32 accumulation)
    #    -> looser tolerance: w0=10 folded into the weights amplifies operand
    #    rounding inside sin, so bit-level agreement is not expected.
    out_bf16 = funnet_forward(x, params, num_layers=num_layers, w0=10.0,
                              w0_initial=10.0, tb=512)
    out_bf16 = jax.block_until_ready(out_bf16)
    assert out_bf16.shape == (B, 1)
    assert jnp.allclose(out_bf16, ref, rtol=1e-1, atol=1e-2), "bf16 mismatch vs reference"

    print("KERNEL_OK")
</pallas_src>

<mosaic_0001>
module attributes {stable_mosaic.version = 11 : i64} {
  func.func @funnet_kernel(%arg0: i32, %arg1: memref<8x128xf32, #tpu.memory_space<vmem>>, %arg2: memref<64x8xf32, #tpu.memory_space<vmem>>, %arg3: memref<2x64x64xf32, #tpu.memory_space<vmem>>, %arg4: memref<2x64x1xf32, #tpu.memory_space<vmem>>, %arg5: memref<16x64xf32, #tpu.memory_space<vmem>>, %arg6: memref<16x1xf32, #tpu.memory_space<vmem>>, %arg7: memref<1x128xf32, #tpu.memory_space<vmem>>) attributes {dimension_semantics = [#tpu.dimension_semantics<parallel>], iteration_bounds = array<i64: 3>, scalar_prefetch = 0 : i64, scratch_operands = 0 : i64, tpu.core_type = #tpu.core_type<tc>, window_params = [{transform_indices = @transform_0, window_bounds = array<i64: 8, 128>}, {pipeline_mode = #tpu.pipeline_mode<synchronous>, transform_indices = @transform_1, window_bounds = array<i64: 64, 8>}, {pipeline_mode = #tpu.pipeline_mode<synchronous>, transform_indices = @transform_2, window_bounds = array<i64: 2, 64, 64>}, {pipeline_mode = #tpu.pipeline_mode<synchronous>, transform_indices = @transform_3, window_bounds = array<i64: 2, 64, 1>}, {pipeline_mode = #tpu.pipeline_mode<synchronous>, transform_indices = @transform_4, window_bounds = array<i64: 16, 64>}, {pipeline_mode = #tpu.pipeline_mode<synchronous>, transform_indices = @transform_5, window_bounds = array<i64: 16, 1>}, {transform_indices = @transform_6, window_bounds = array<i64: 1, 128>}]} {
    %c0 = arith.constant 0 : index
    %c0_0 = arith.constant 0 : index
    %0 = vector.load %arg2[%c0, %c0_0] : memref<64x8xf32, #tpu.memory_space<vmem>>, vector<64x8xf32>
    %c0_1 = arith.constant 0 : index
    %c0_2 = arith.constant 0 : index
    %1 = vector.load %arg1[%c0_1, %c0_2] : memref<8x128xf32, #tpu.memory_space<vmem>>, vector<8x128xf32>
    %cst = arith.constant dense<0.000000e+00> : vector<64x128xf32>
    %2 = tpu.matmul %0, %1, %cst {dimension_numbers = #tpu.dot_dimension_numbers<[1], [0], [0], [1], [0, 0, 1, 1], [], []>} : vector<64x8xf32>, vector<8x128xf32>, vector<64x128xf32> -> vector<64x128xf32>
    %3 = math.sin %2 : vector<64x128xf32>
    %c0_3 = arith.constant 0 : index
    %c0_4 = arith.constant 0 : index
    %c0_5 = arith.constant 0 : index
    %4 = vector.load %arg3[%c0_3, %c0_4, %c0_5] : memref<2x64x64xf32, #tpu.memory_space<vmem>>, vector<1x64x64xf32>
    %5 = vector.shape_cast %4 : vector<1x64x64xf32> to vector<64x64xf32>
    %cst_6 = arith.constant dense<0.000000e+00> : vector<64x128xf32>
    %6 = tpu.matmul %5, %3, %cst_6 {dimension_numbers = #tpu.dot_dimension_numbers<[1], [0], [0], [1], [0, 0, 1, 1], [], []>} : vector<64x64xf32>, vector<64x128xf32>, vector<64x128xf32> -> vector<64x128xf32>
    %c0_7 = arith.constant 0 : index
    %c0_8 = arith.constant 0 : index
    %c0_9 = arith.constant 0 : index
    %7 = vector.load %arg4[%c0_7, %c0_8, %c0_9] : memref<2x64x1xf32, #tpu.memory_space<vmem>>, vector<1x64x1xf32>
    %8 = vector.shape_cast %7 : vector<1x64x1xf32> to vector<64x1xf32>
    %9 = vector.broadcast %8 : vector<64x1xf32> to vector<64x128xf32>
    %10 = arith.addf %6, %9 : vector<64x128xf32>
    %11 = math.sin %10 : vector<64x128xf32>
    %c1 = arith.constant 1 : index
    %c0_10 = arith.constant 0 : index
    %c0_11 = arith.constant 0 : index
    %12 = vector.load %arg3[%c1, %c0_10, %c0_11] : memref<2x64x64xf32, #tpu.memory_space<vmem>>, vector<1x64x64xf32>
    %13 = vector.shape_cast %12 : vector<1x64x64xf32> to vector<64x64xf32>
    %cst_12 = arith.constant dense<0.000000e+00> : vector<64x128xf32>
    %14 = tpu.matmul %13, %11, %cst_12 {dimension_numbers = #tpu.dot_dimension_numbers<[1], [0], [0], [1], [0, 0, 1, 1], [], []>} : vector<64x64xf32>, vector<64x128xf32>, vector<64x128xf32> -> vector<64x128xf32>
    %c1_13 = arith.constant 1 : index
    %c0_14 = arith.constant 0 : index
    %c0_15 = arith.constant 0 : index
    %15 = vector.load %arg4[%c1_13, %c0_14, %c0_15] : memref<2x64x1xf32, #tpu.memory_space<vmem>>, vector<1x64x1xf32>
    %16 = vector.shape_cast %15 : vector<1x64x1xf32> to vector<64x1xf32>
    %17 = vector.broadcast %16 : vector<64x1xf32> to vector<64x128xf32>
    %18 = arith.addf %14, %17 : vector<64x128xf32>
    %19 = math.sin %18 : vector<64x128xf32>
    %c0_16 = arith.constant 0 : index
    %c0_17 = arith.constant 0 : index
    %20 = vector.load %arg5[%c0_16, %c0_17] : memref<16x64xf32, #tpu.memory_space<vmem>>, vector<16x64xf32>
    %cst_18 = arith.constant dense<0.000000e+00> : vector<16x128xf32>
    %21 = tpu.matmul %20, %19, %cst_18 {dimension_numbers = #tpu.dot_dimension_numbers<[1], [0], [0], [1], [0, 0, 1, 1], [], []>} : vector<16x64xf32>, vector<64x128xf32>, vector<16x128xf32> -> vector<16x128xf32>
    %c0_19 = arith.constant 0 : index
    %c0_20 = arith.constant 0 : index
    %22 = vector.load %arg6[%c0_19, %c0_20] : memref<16x1xf32, #tpu.memory_space<vmem>>, vector<16x1xf32>
    %23 = vector.broadcast %22 : vector<16x1xf32> to vector<16x128xf32>
    %24 = arith.addf %21, %23 : vector<16x128xf32>
    %25 = vector.extract_strided_slice %24 {offsets = [0, 0], sizes = [8, 128], strides = [1, 1]} : vector<16x128xf32> to vector<8x128xf32>
    %26 = vector.extract_strided_slice %24 {offsets = [8, 0], sizes = [8, 128], strides = [1, 1]} : vector<16x128xf32> to vector<8x128xf32>
    %27 = arith.mulf %25, %26 : vector<8x128xf32>
    %cst_21 = arith.constant dense<0.000000e+00> : vector<128xf32>
    %28 = vector.multi_reduction <add>, %27, %cst_21 [0] : vector<8x128xf32> to vector<128xf32>
    %29 = vector.shape_cast %28 : vector<128xf32> to vector<1x128xf32>
    %c0_22 = arith.constant 0 : index
    %c0_23 = arith.constant 0 : index
    %30 = vector.load %arg7[%c0_22, %c0_23] : memref<1x128xf32, #tpu.memory_space<vmem>>, vector<1x128xf32>
    tpu.vector_store %arg7[%c0_22, %c0_23], %29 {strides = array<i32>} : memref<1x128xf32, #tpu.memory_space<vmem>>, vector<1x128xf32>,
    return
  }
  func.func @transform_0(%arg0: i32) -> (i32, i32) {
    %c0_i32 = arith.constant 0 : i32
    %c0_i32_0 = arith.constant 0 : i32
    return %c0_i32, %arg0 : i32, i32
  }
  func.func @transform_1(%arg0: i32) -> (i32, i32) {
    %c0_i32 = arith.constant 0 : i32
    %c0_i32_0 = arith.constant 0 : i32
    %c0_i32_1 = arith.constant 0 : i32
    return %c0_i32, %c0_i32_0 : i32, i32
  }
  func.func @transform_2(%arg0: i32) -> (i32, i32, i32) {
    %c0_i32 = arith.constant 0 : i32
    %c0_i32_0 = arith.constant 0 : i32
    %c0_i32_1 = arith.constant 0 : i32
    %c0_i32_2 = arith.constant 0 : i32
    return %c0_i32, %c0_i32_0, %c0_i32_1 : i32, i32, i32
  }
  func.func @transform_3(%arg0: i32) -> (i32, i32, i32) {
    %c0_i32 = arith.constant 0 : i32
    %c0_i32_0 = arith.constant 0 : i32
    %c0_i32_1 = arith.constant 0 : i32
    %c0_i32_2 = arith.constant 0 : i32
    return %c0_i32, %c0_i32_0, %c0_i32_1 : i32, i32, i32
  }
  func.func @transform_4(%arg0: i32) -> (i32, i32) {
    %c0_i32 = arith.constant 0 : i32
    %c0_i32_0 = arith.constant 0 : i32
    %c0_i32_1 = arith.constant 0 : i32
    return %c0_i32, %c0_i32_0 : i32, i32
  }
  func.func @transform_5(%arg0: i32) -> (i32, i32) {
    %c0_i32 = arith.constant 0 : i32
    %c0_i32_0 = arith.constant 0 : i32
    %c0_i32_1 = arith.constant 0 : i32
    return %c0_i32, %c0_i32_0 : i32, i32
  }
  func.func @transform_6(%arg0: i32) -> (i32, i32) {
    %c0_i32 = arith.constant 0 : i32
    %c0_i32_0 = arith.constant 0 : i32
    return %c0_i32, %arg0 : i32, i32
  }
}

</mosaic_0001>

<llo_original>
// kernel: tpu_custom_call.1
$region0: #{tpu_custom_call.1}
  #allocation0 [shape = 'u32[]', space=smem, size = 0x4, offset = 0x4, fixed_abs, tag = 'smem constant byte address 0x4 - core index']
  #allocation1 [shape = 'u32[144,128]{1,0:T(1,128)}', space=vmem, size = 0x12000, scoped, tag = 'internal scratch']
  %s0 = inlined_call_operand.vmem [shape: f32[8,384], index: 0, kind: input, shape index: {}]
  %s1 = inlined_call_operand.vmem [shape: f32[64,8], index: 1, kind: input, shape index: {}]
  %s2 = inlined_call_operand.vmem [shape: f32[2,64,64], index: 2, kind: input, shape index: {}]
  %s3 = inlined_call_operand.vmem [shape: f32[2,64,1], index: 3, kind: input, shape index: {}]
  %s4 = inlined_call_operand.vmem [shape: f32[16,64], index: 4, kind: input, shape index: {}]
  %s5 = inlined_call_operand.vmem [shape: f32[16,1], index: 5, kind: input, shape index: {}]
  %s6 = inlined_call_operand.hbm [shape: f32[1,384], index: 6, kind: output, shape index: {}]
  %s7 = sld [smem:[#allocation0]]
  $region57: #{tpu_custom_call.1} parent=0
    _
  %s9 = ssub.s32 1, %s7
  %s10 = scalar_select 0, %s9, %s7
  $region1: #{tpu_custom_call.1} parent=0
    #allocation2 [shape = 'u8[1024]{0}', space=vmem, size = 0x400, scoped, tag = 'output window, operand 0']
    #allocation3 [shape = 's32[2]{0}', space=sflag, size = 0x8, scoped, tag = 'scoped memory for tpu_custom_call.1']
    %11 = vsyncpa [#allocation3], 0
    %s12 = scalar_lea.sflag [#allocation3], 1
    %13 = vsyncpa %s12, 0
    loop: start=0, step=1, limit=5
    $region2: #{tpu_custom_call.1} parent=1 // loop_pre_header
      _
    $region3: #{tpu_custom_call.1} parent=1 // loop_header
      %s15 = sphi 0, %s19
      %p16 = scmp.ge.s32.totalorder %s15, 5
      %s25 = sphi 0, %s27
      %s28 = sphi 0, %s25
      %s29 = sphi 0, %s28
      %s45 = sphi 0, %s29
      %s49 = sphi 0, %s49
      %s51 = sphi 0, %s49
      %s52 = sphi 0, %s51
      %s66 = sphi 0, %s52
      %s70 = sphi 0, %s70
      %s72 = sphi 0, %s70
      %s73 = sphi 0, %s72
      %s87 = sphi 0, %s73
      %s91 = sphi 0, %s91
      %s93 = sphi 0, %s91
      %s94 = sphi 0, %s93
      %s108 = sphi 0, %s94
      %s112 = sphi 0, %s112
      %s114 = sphi 0, %s112
      %s115 = sphi 0, %s114
      %s129 = sphi 0, %s115
      %s133 = sphi 0, %s133
      %s135 = sphi 0, %s133
      %s136 = sphi 0, %s135
      %s150 = sphi 0, %s136
      %s156 = sphi 0, %s158
      %s159 = sphi 0, %s156
      %s160 = sphi 0, %s159
      %s176 = sphi 0, %s160
    $region4: #{tpu_custom_call.1} parent=1 // loop_header_branch
      %18 = sbr.rel (%p16) target = $region8
    $region5: #{tpu_custom_call.1} parent=1 // loop_body
      %s20 = ssub.s32 %s15, 1
      %s21 = ssub.s32 %s15, 2
      %s22 = sadd.s32 %s15, 1
      %s23 = ssub.s32 %s15, %s22
      %p24 = scmp.eq.s32.totalorder %s23, 0
      %s26 = sadd.s32 %s25, 1
      %s27 = scalar_select %p24, %s25, %s26
      %p30 = pneg %p24
      %p31 = scmp.eq.s32.totalorder %s15, 2
      %p32 = por %p30, %p31
      %p33 = scmp.ne.s32.totalorder %s25, %s28
      %p34 = scmp.eq.s32.totalorder %s15, 0
      %p35 = por %p33, %p34
      %p36 = scmp.ne.s32.totalorder %s25, %s28
      %p37 = scmp.eq.s32.totalorder %s20, 2
      %p38 = por %p36, %p37
      %p39 = scmp.ne.s32.totalorder %s28, %s29
      %p40 = scmp.eq.s32.totalorder %s20, 0
      %p41 = por %p39, %p40
      %p42 = scmp.ne.s32.totalorder %s28, %s29
      %p43 = scmp.eq.s32.totalorder %s21, 2
      %p44 = por %p42, %p43
      %p46 = scmp.ne.s32.totalorder %s29, %s45
      %p47 = scmp.eq.s32.totalorder %s21, 0
      %p48 = por %p46, %p47
      %s50 = sadd.s32 %s49, 1
      %p53 = scmp.eq.s32.totalorder %s15, 2
      %p54 = scmp.ne.s32.totalorder %s49, %s51
      %p55 = scmp.eq.s32.totalorder %s15, 0
      %p56 = por %p54, %p55
      %p57 = scmp.ne.s32.totalorder %s49, %s51
      %p58 = scmp.eq.s32.totalorder %s20, 2
      %p59 = por %p57, %p58
      %p60 = scmp.ne.s32.totalorder %s51, %s52
      %p61 = scmp.eq.s32.totalorder %s20, 0
      %p62 = por %p60, %p61
      %p63 = scmp.ne.s32.totalorder %s51, %s52
      %p64 = scmp.eq.s32.totalorder %s21, 2
      %p65 = por %p63, %p64
      %p67 = scmp.ne.s32.totalorder %s52, %s66
      %p68 = scmp.eq.s32.totalorder %s21, 0
      %p69 = por %p67, %p68
      %s71 = sadd.s32 %s70, 1
      %p74 = scmp.eq.s32.totalorder %s15, 2
      %p75 = scmp.ne.s32.totalorder %s70, %s72
      %p76 = scmp.eq.s32.totalorder %s15, 0
      %p77 = por %p75, %p76
      %p78 = scmp.ne.s32.totalorder %s70, %s72
      %p79 = scmp.eq.s32.totalorder %s20, 2
      %p80 = por %p78, %p79
      %p81 = scmp.ne.s32.totalorder %s72, %s73
      %p82 = scmp.eq.s32.totalorder %s20, 0
      %p83 = por %p81, %p82
      %p84 = scmp.ne.s32.totalorder %s72, %s73
      %p85 = scmp.eq.s32.totalorder %s21, 2
      %p86 = por %p84, %p85
      %p88 = scmp.ne.s32.totalorder %s73, %s87
      %p89 = scmp.eq.s32.totalorder %s21, 0
      %p90 = por %p88, %p89
      %s92 = sadd.s32 %s91, 1
      %p95 = scmp.eq.s32.totalorder %s15, 2
      %p96 = scmp.ne.s32.totalorder %s91, %s93
      %p97 = scmp.eq.s32.totalorder %s15, 0
      %p98 = por %p96, %p97
      %p99 = scmp.ne.s32.totalorder %s91, %s93
      %p100 = scmp.eq.s32.totalorder %s20, 2
      %p101 = por %p99, %p100
      %p102 = scmp.ne.s32.totalorder %s93, %s94
      %p103 = scmp.eq.s32.totalorder %s20, 0
      %p104 = por %p102, %p103
      %p105 = scmp.ne.s32.totalorder %s93, %s94
      %p106 = scmp.eq.s32.totalorder %s21, 2
      %p107 = por %p105, %p106
      %p109 = scmp.ne.s32.totalorder %s94, %s108
      %p110 = scmp.eq.s32.totalorder %s21, 0
      %p111 = por %p109, %p110
      %s113 = sadd.s32 %s112, 1
      %p116 = scmp.eq.s32.totalorder %s15, 2
      %p117 = scmp.ne.s32.totalorder %s112, %s114
      %p118 = scmp.eq.s32.totalorder %s15, 0
      %p119 = por %p117, %p118
      %p120 = scmp.ne.s32.totalorder %s112, %s114
      %p121 = scmp.eq.s32.totalorder %s20, 2
      %p122 = por %p120, %p121
      %p123 = scmp.ne.s32.totalorder %s114, %s115
      %p124 = scmp.eq.s32.totalorder %s20, 0
      %p125 = por %p123, %p124
      %p126 = scmp.ne.s32.totalorder %s114, %s115
      %p127 = scmp.eq.s32.totalorder %s21, 2
      %p128 = por %p126, %p127
      %p130 = scmp.ne.s32.totalorder %s115, %s129
      %p131 = scmp.eq.s32.totalorder %s21, 0
      %p132 = por %p130, %p131
      %s134 = sadd.s32 %s133, 1
      %p137 = scmp.eq.s32.totalorder %s15, 2
      %p138 = scmp.ne.s32.totalorder %s133, %s135
      %p139 = scmp.eq.s32.totalorder %s15, 0
      %p140 = por %p138, %p139
      %p141 = scmp.ne.s32.totalorder %s133, %s135
      %p142 = scmp.eq.s32.totalorder %s20, 2
      %p143 = por %p141, %p142
      %p144 = scmp.ne.s32.totalorder %s135, %s136
      %p145 = scmp.eq.s32.totalorder %s20, 0
      %p146 = por %p144, %p145
      %p147 = scmp.ne.s32.totalorder %s135, %s136
      %p148 = scmp.eq.s32.totalorder %s21, 2
      %p149 = por %p147, %p148
      %p151 = scmp.ne.s32.totalorder %s136, %s150
      %p152 = scmp.eq.s32.totalorder %s21, 0
      %p153 = por %p151, %p152
      %s154 = ssub.s32 %s15, %s22
      %p155 = scmp.eq.s32.totalorder %s154, 0
      %s157 = sadd.s32 %s156, 1
      %s158 = scalar_select %p155, %s156, %s157
      %p161 = pneg %p155
      %p162 = scmp.eq.s32.totalorder %s15, 2
      %p163 = por %p161, %p162
      %p164 = scmp.ne.s32.totalorder %s156, %s159
      %p165 = scmp.eq.s32.totalorder %s15, 0
      %p166 = por %p164, %p165
      %p167 = scmp.ne.s32.totalorder %s156, %s159
      %p168 = scmp.eq.s32.totalorder %s20, 2
      %p169 = por %p167, %p168
      %p170 = scmp.ne.s32.totalorder %s159, %s160
      %p171 = scmp.eq.s32.totalorder %s20, 0
      %p172 = por %p170, %p171
      %p173 = scmp.ne.s32.totalorder %s159, %s160
      %p174 = scmp.eq.s32.totalorder %s21, 2
      %p175 = por %p173, %p174
      %p177 = scmp.ne.s32.totalorder %s160, %s176
      %p178 = scmp.eq.s32.totalorder %s21, 0
      %p179 = por %p177, %p178
      %p180 = scmp.le.s32.totalorder 1, %s15
      %p181 = scmp.lt.s32.totalorder %s15, 4
      %p182 = pnand %p180, %p181
      %p183 = pneg %p182
      // Predicated region
      $region9: #{tpu_custom_call.1} parent=5 // pred_check
        _
      $region10: #{tpu_custom_call.1} parent=5 // pred_check_branch
        %185 = sbr.rel (%p182) target = $region12
      $region11: #{tpu_custom_call.1} parent=5 // pred_region
        %s186 = ssub.s32 %s15, 1
        // Predicated region
        $region13: #{tpu_custom_call.1} parent=11 // pred_check
          %p187 = pneg %p62
        $region14: #{tpu_custom_call.1} parent=11 // pred_check_branch
          %189 = sbr.rel (%p187) target = $region16
        $region15: #{tpu_custom_call.1} parent=11 // pred_region
          _
        $region16: #{tpu_custom_call.1} parent=11 // pred_fallthru
          _
        // Predicated region
        $region17: #{tpu_custom_call.1} parent=11 // pred_check
          %p190 = pneg %p83
        $region18: #{tpu_custom_call.1} parent=11 // pred_check_branch
          %192 = sbr.rel (%p190) target = $region20
        $region19: #{tpu_custom_call.1} parent=11 // pred_region
          _
        $region20: #{tpu_custom_call.1} parent=11 // pred_fallthru
          _
        // Predicated region
        $region21: #{tpu_custom_call.1} parent=11 // pred_check
          %p193 = pneg %p104
        $region22: #{tpu_custom_call.1} parent=11 // pred_check_branch
          %195 = sbr.rel (%p193) target = $region24
        $region23: #{tpu_custom_call.1} parent=11 // pred_region
          _
        $region24: #{tpu_custom_call.1} parent=11 // pred_fallthru
          _
        // Predicated region
        $region25: #{tpu_custom_call.1} parent=11 // pred_check
          %p196 = pneg %p125
        $region26: #{tpu_custom_call.1} parent=11 // pred_check_branch
          %198 = sbr.rel (%p196) target = $region28
        $region27: #{tpu_custom_call.1} parent=11 // pred_region
          _
        $region28: #{tpu_custom_call.1} parent=11 // pred_fallthru
          _
        // Predicated region
        $region29: #{tpu_custom_call.1} parent=11 // pred_check
          %p199 = pneg %p146
        $region30: #{tpu_custom_call.1} parent=11 // pred_check_branch
          %201 = sbr.rel (%p199) target = $region32
        $region31: #{tpu_custom_call.1} parent=11 // pred_region
          _
        $region32: #{tpu_custom_call.1} parent=11 // pred_fallthru
          _
      $region12: #{tpu_custom_call.1} parent=5 // pred_fallthru
        _
      %p202 = scmp.lt.s32.totalorder %s15, 3
      // Predicated region
      $region33: #{tpu_custom_call.1} parent=5 // pred_check
        %p203 = pneg %p202
      $region34: #{tpu_custom_call.1} parent=5 // pred_check_branch
        %205 = sbr.rel (%p203) target = $region36
      $region35: #{tpu_custom_call.1} parent=5 // pred_region
        // Predicated region
        $region37: #{tpu_custom_call.1} parent=35 // pred_check
          %p206 = pneg %p35
        $region38: #{tpu_custom_call.1} parent=35 // pred_check_branch
          %208 = sbr.rel (%p206) target = $region40
        $region39: #{tpu_custom_call.1} parent=35 // pred_region
          %p209 = scmp.lt.s32.totalorder %s15, 2
          %s210 = scalar_select %p209, %s15, 2
          %s211 = smul.addr %s210, 8
          %s212 = scalar_lea.vmem %s0, %s211
        $region40: #{tpu_custom_call.1} parent=35 // pred_fallthru
          _
      $region36: #{tpu_custom_call.1} parent=5 // pred_fallthru
        _
      %p213 = scmp.le.s32.totalorder 1, %s15
      %p214 = scmp.lt.s32.totalorder %s15, 4
      %p215 = pnand %p213, %p214
      %p216 = pneg %p215
      // Predicated region
      $region41: #{tpu_custom_call.1} parent=5 // pred_check
        _
      $region42: #{tpu_custom_call.1} parent=5 // pred_check_branch
        %218 = sbr.rel (%p215) target = $region44
      $region43: #{tpu_custom_call.1} parent=5 // pred_region
        %s219 = ssub.s32 %s15, 1
        %p220 = scmp.lt.s32.totalorder %s20, 2
        %s221 = scalar_select %p220, %s20, 2
        %s222 = smul.addr %s221, 8
        %s223 = scalar_lea.vmem %s0, %s222
        %p224 = pneg %p41
        %p225 = pneg %p38
        %p226 = pneg %p62
        %p227 = pneg %p59
        %p228 = pneg %p83
        %p229 = pneg %p80
        %p230 = pneg %p104
        %p231 = pneg %p101
        %p232 = pneg %p125
        %p233 = pneg %p122
        %p234 = pneg %p146
        %p235 = pneg %p143
        %p236 = pneg %p172
        %p237 = pneg %p169
        %s238 = sand.u32 %s159, 1
        %s239 = scalar_lea.sflag [#allocation3], %s238
        %s240 = sand.u32 %s159, 1
        %s241 = scalar_lea.vmem [#allocation2], %s240
        %p242 = scmp.lt.s32.totalorder %s20, 2
        %s243 = scalar_select %p242, %s20, 2
        %s244 = smul.addr %s243, 8
        %s245 = scalar_lea.vmem %s0, %s244
        %v246 = vld [vmem:[%s1] sm:$0xff]
        %v247 = vld [vmem:[%s1 + $0x8] sm:$0xff]
        %v248 = vld [vmem:[%s1 + $0x10] sm:$0xff]
        %v249 = vld [vmem:[%s1 + $0x18] sm:$0xff]
        %v250 = vld [vmem:[%s1 + $0x20] sm:$0xff]
        %v251 = vld [vmem:[%s1 + $0x28] sm:$0xff]
        %v252 = vld [vmem:[%s1 + $0x30] sm:$0xff]
        %v253 = vld [vmem:[%s1 + $0x38] sm:$0xff]
        %v254 = vld [vmem:[%s245] sm:$0xff]
        %vm255 = vcmask 64512
        %v257 = vsel %vm255, %v246, 0
        %v260 = vsel %vm255, %v247, 0
        %v263 = vsel %vm255, %v248, 0
        %v266 = vsel %vm255, %v249, 0
        %v269 = vsel %vm255, %v250, 0
        %v272 = vsel %vm255, %v251, 0
        %v275 = vsel %vm255, %v252, 0
        %v278 = vsel %vm255, %v253, 0
        %280 = vmatprep.subr.mxu0 0.0
        %281 = vmatpush1.msra.mxu0 %v254
        %282 = vmatprep.subr.mxu0 0.0
        %283 = vmatpush1.msra.mxu0 0.0
        %284 = vmatprep.subr.mxu0 0.0
        %285 = vmatpush1.msra.mxu0 0.0
        %286 = vmatprep.subr.mxu0 0.0
        %287 = vmatpush1.msra.mxu0 0.0
        %288 = vmatprep.subr.mxu0 0.0
        %289 = vmatpush1.msra.mxu0 0.0
        %290 = vmatprep.subr.mxu0 0.0
        %291 = vmatpush1.msra.mxu0 0.0
        %292 = vmatprep.subr.mxu0 0.0
        %293 = vmatpush1.msra.mxu0 0.0
        %294 = vmatprep.subr.mxu0 0.0
        %295 = vmatpush1.msra.mxu0 0.0
        %296 = vmatprep.subr.mxu0 0.0
        %297 = vmatpush1.msra.mxu0 0.0
        %298 = vmatprep.subr.mxu0 0.0
        %299 = vmatpush1.msra.mxu0 0.0
        %300 = vmatprep.subr.mxu0 0.0
        %301 = vmatpush1.msra.mxu0 0.0
        %302 = vmatprep.subr.mxu0 0.0
        %303 = vmatpush1.msra.mxu0 0.0
        %304 = vmatprep.subr.mxu0 0.0
        %305 = vmatpush1.msra.mxu0 0.0
        %306 = vmatprep.subr.mxu0 0.0
        %307 = vmatpush1.msra.mxu0 0.0
        %308 = vmatprep.subr.mxu0 0.0
        %309 = vmatpush1.msra.mxu0 0.0
        %310 = vmatprep.subr.mxu0 0.0
        %311 = vmatpush1.msra.mxu0 0.0
        %312 = vmatprep.subr.mxu0 0.0
        %313 = vmatpush1.msra.mxu0 0.0
        %314 = vmatprep.subr.mxu0 0.0
        %315 = vmatpush1.msra.mxu0 0.0
        %316 = vmatprep.subr.mxu0 0.0
        %317 = vmatpush1.msra.mxu0 0.0
        %318 = vmatprep.subr.mxu0 0.0
        %319 = vmatpush1.msra.mxu0 0.0
        %320 = vmatprep.subr.mxu0 0.0
        %321 = vmatpush1.msra.mxu0 0.0
        %322 = vmatprep.subr.mxu0 0.0
        %323 = vmatpush1.msra.mxu0 0.0
        %324 = vmatprep.subr.mxu0 0.0
        %325 = vmatpush1.msra.mxu0 0.0
        %326 = vmatprep.subr.mxu0 0.0
        %327 = vmatpush1.msra.mxu0 0.0
        %328 = vmatprep.subr.mxu0 0.0
        %329 = vmatpush1.msra.mxu0 0.0
        %330 = vmatprep.subr.mxu0 0.0
        %331 = vmatpush1.msra.mxu0 0.0
        %332 = vmatprep.subr.mxu0 0.0
        %333 = vmatpush1.msra.mxu0 0.0
        %334 = vmatprep.subr.mxu0 0.0
        %335 = vmatpush1.msra.mxu0 0.0
        %336 = vmatprep.subr.mxu0 0.0
        %337 = vmatpush1.msra.mxu0 0.0
        %338 = vmatprep.subr.mxu0 0.0
        %339 = vmatpush1.msra.mxu0 0.0
        %340 = vmatprep.subr.mxu0 0.0
        %341 = vmatpush1.msra.mxu0 0.0
        %342 = vmatprep.subr.mxu0 0.0
        %343 = vmatpush1.msra.mxu0 0.0
        %344 = vmatprep.mubr.f32.mxu0 0.0
        %345 = vmatmul.mubr.f32.gmra.mrb[0].mxu0 %v257
        %v346 = vpop.f32.mrb[0].mxu0
        %v347 = vadd.f32 0.0, %v346
        %v348 = vpop.f32.mrb[0].mxu0
        %349 = vmatprep.mubr.f32.mxu0 0.0
        %350 = vmatmul.mubr.f32.gmra.mrb[0].mxu0 %v260
        %v351 = vpop.f32.mrb[0].mxu0
        %v352 = vadd.f32 0.0, %v351
        %v353 = vpop.f32.mrb[0].mxu0
        %354 = vmatprep.mubr.f32.mxu0 0.0
        %355 = vmatmul.mubr.f32.gmra.mrb[0].mxu0 %v263
        %v356 = vpop.f32.mrb[0].mxu0
        %v357 = vadd.f32 0.0, %v356
        %v358 = vpop.f32.mrb[0].mxu0
        %359 = vmatprep.mubr.f32.mxu0 0.0
        %360 = vmatmul.mubr.f32.gmra.mrb[0].mxu0 %v266
        %v361 = vpop.f32.mrb[0].mxu0
        %v362 = vadd.f32 0.0, %v361
        %v363 = vpop.f32.mrb[0].mxu0
        %364 = vmatprep.mubr.f32.mxu0 0.0
        %365 = vmatmul.mubr.f32.gmra.mrb[0].mxu0 %v269
        %v366 = vpop.f32.mrb[0].mxu0
        %v367 = vadd.f32 0.0, %v366
        %v368 = vpop.f32.mrb[0].mxu0
        %369 = vmatprep.mubr.f32.mxu0 0.0
        %370 = vmatmul.mubr.f32.gmra.mrb[0].mxu0 %v272
        %v371 = vpop.f32.mrb[0].mxu0
        %v372 = vadd.f32 0.0, %v371
        %v373 = vpop.f32.mrb[0].mxu0
        %374 = vmatprep.mubr.f32.mxu0 0.0
        %375 = vmatmul.mubr.f32.gmra.mrb[0].mxu0 %v275
        %v376 = vpop.f32.mrb[0].mxu0
        %v377 = vadd.f32 0.0, %v376
        %v378 = vpop.f32.mrb[0].mxu0
        %379 = vmatprep.mubr.f32.mxu0 0.0
        %380 = vmatmul.mubr.f32.gmra.mrb[0].mxu0 %v278
        %v381 = vpop.f32.mrb[0].mxu0
        %v382 = vadd.f32 0.0, %v381
        %v383 = vpop.f32.mrb[0].mxu0
        %384 = vdwg.mxu0
        %v385 = vand.u32 2147483647, %v347
        %vm386 = vcmp.le.f32.partialorder %v385, 0.7853982
        %vm387 = vcmp.lt.s32.totalorder %v347, 0
        %v388 = vand.u32 %v347, 2139095040
        %v389 = vshrl.u32 %v388, 23
        %v390 = vsub.s32 %v389, 127
        %v391 = vand.u32 2147483647, %v347
        %v392 = vand.u32 %v391, 8388607
        %v393 = vor.u32 %v392, 8388608
        %v394 = vsub.s32 0, %v393
        %v395 = vadd.s32 %v390, 1
        %vm396 = vcmp.gt.s32.totalorder %v395, 0
        %v397 = vsel %vm396, %v395, 0
        %v398 = vshrl.u32 %v397, 5
        %v399 = vand.u32 %v397, 31
        %v400 = vsub.s32 32, %v399
        %v401 = vshrl.u32 683565275, %v400
        %v402 = vshll.u32 683565275, %v399
        %v403 = vshrl.u32 2475754826, %v400
        %v404 = vor.u32 %v402, %v403
        %v405 = vshll.u32 2475754826, %v399
        %v406 = vshrl.u32 2131351028, %v400
        %v407 = vor.u32 %v405, %v406
        %v408 = vshll.u32 2131351028, %v399
        %v409 = vshrl.u32 2102212464, %v400
        %v410 = vor.u32 %v408, %v409
        %v411 = vshll.u32 2102212464, %v399
        %v412 = vshrl.u32 920167782, %v400
        %v413 = vor.u32 %v411, %v412
        %v414 = vshll.u32 920167782, %v399
        %v415 = vshrl.u32 1326507024, %v400
        %v416 = vor.u32 %v414, %v415
        %vm417 = vcmp.lt.s32.totalorder %v398, 1
        %vm418 = vcmp.lt.s32.totalorder %v398, 2
        %vm419 = vcmp.lt.s32.totalorder %v398, 3
        %vm420 = vcmp.lt.s32.totalorder %v398, 4
        %v421 = vsel %vm417, %v401, %v404
        %v422 = vsel %vm420, %v410, 2102212464
        %v423 = vsel %vm419, %v407, %v422
        %v424 = vsel %vm418, %v421, %v423
        %v425 = vsel %vm417, %v404, %v407
        %v426 = vsel %vm420, %v413, 920167782
        %v427 = vsel %vm419, %v410, %v426
        %v428 = vsel %vm418, %v425, %v427
        %v429 = vsel %vm417, %v407, %v410
        %v430 = vsel %vm420, %v416, 1326507024
        %v431 = vsel %vm419, %v413, %v430
        %v432 = vsel %vm418, %v429, %v431
        %v433 = vshll.u32 %v393, 8
        %v434 = vmul.u32.u64.compose %v433, %v432
        %v435 = vextract.low.u32 %v434
        %v436 = vextract.high.u32 %v434
        %v437 = vmul.u32.u64.compose %v433, %v428
        %v438 = vextract.low.u32 %v437
        %v439 = vextract.high.u32 %v437
        %v440 = vmul.u32 %v433, %v424
        %v441 = vadd.s32 %v436, %v438
        %vm442 = vc.u32 %v436, %v438
        %v443 = vadd.s32 %v439, 1
        %v444 = vsel %vm442, %v443, %v439
        %v445 = vadd.s32 %v440, %v444
        %v446 = vadd.s32 %v445, 536870912
        %v447 = vshrl.u32 %v446, 30
        %v448 = vshll.u32 %v447, 30
        %v449 = vsub.s32 %v445, %v448
        %vm450 = vcmp.lt.s32.totalorder %v449, 0
        %v451 = vsub.s32 0, %v449
        %v452 = vsel %vm450, %v451, %v449
        %v453 = vclz %v452
        %v454 = vsub.s32 %v453, 2
        %vm455 = vcmp.gt.s32.totalorder 0, %v454
        %v456 = vsel %vm455, 0, %v454
        %v457 = vsub.s32 32, %v456
        %v458 = vshll.u32 %v449, %v456
        %v459 = vshrl.u32 %v441, %v457
        %v460 = vor.u32 %v458, %v459
        %v461 = vsub.s32 4294967266, %v456
        %v462 = vadd.s32 %v461, 127
        %v463 = vshll.u32 %v462, 23
        %v464 = vor.u32 4788187, %v463
        %v465 = vand.u32 2147483647, %v464
        %v467 = vcvt.s32.f32 %v460
        %v468 = vmul.f32 %v467, %v465
        %v469 = vxor.u32 %v468, 2147483648
        %v470 = vsel %vm387, %v469, %v468
        %v471 = vsub.s32 4, %v447
        %v472 = vsel %vm387, %v471, %v447
        %v473 = vsel %vm386, %v347, %v470
        %v474 = vsel %vm386, 0, %v472
        %v475 = vcosq.f32.pop %v473
        %v476 = vsinq.f32.pop %v473
        %vm477 = vweird.f32 %v347
        %v478 = vadd.s32 %v474, 3
        %v479 = vand.u32 %v478, 3
        %vm480 = vcmp.lt.s32.totalorder %v479, 2
        %vm481 = vcmp.eq.s32.totalorder %v479, 0
        %v482 = vxor.u32 %v476, 2147483648
        %v483 = vsel %vm481, %v475, %v482
        %vm484 = vcmp.eq.s32.totalorder %v479, 2
        %v485 = vxor.u32 %v475, 2147483648
        %v486 = vsel %vm484, %v485, %v476
        %v487 = vsel %vm480, %v483, %v486
        %v488 = vsel %vm477, nan, %v487
        %v489 = vand.u32 2147483647, %v352
        %vm490 = vcmp.le.f32.partialorder %v489, 0.7853982
        %vm491 = vcmp.lt.s32.totalorder %v352, 0
        %v492 = vand.u32 %v352, 2139095040
        %v493 = vshrl.u32 %v492, 23
        %v494 = vsub.s32 %v493, 127
        %v495 = vand.u32 2147483647, %v352
        %v496 = vand.u32 %v495, 8388607
        %v497 = vor.u32 %v496, 8388608
        %v498 = vsub.s32 0, %v497
        %v499 = vadd.s32 %v494, 1
        %vm500 = vcmp.gt.s32.totalorder %v499, 0
        %v501 = vsel %vm500, %v499, 0
        %v502 = vshrl.u32 %v501, 5
        %v503 = vand.u32 %v501, 31
        %v504 = vsub.s32 32, %v503
        %v505 = vshrl.u32 683565275, %v504
        %v506 = vshll.u32 683565275, %v503
        %v507 = vshrl.u32 2475754826, %v504
        %v508 = vor.u32 %v506, %v507
        %v509 = vshll.u32 2475754826, %v503
        %v510 = vshrl.u32 2131351028, %v504
        %v511 = vor.u32 %v509, %v510
        %v512 = vshll.u32 2131351028, %v503
        %v513 = vshrl.u32 2102212464, %v504
        %v514 = vor.u32 %v512, %v513
        %v515 = vshll.u32 2102212464, %v503
        %v516 = vshrl.u32 920167782, %v504
        %v517 = vor.u32 %v515, %v516
        %v518 = vshll.u32 920167782, %v503
        %v519 = vshrl.u32 1326507024, %v504
        %v520 = vor.u32 %v518, %v519
        %vm521 = vcmp.lt.s32.totalorder %v502, 1
        %vm522 = vcmp.lt.s32.totalorder %v502, 2
        %vm523 = vcmp.lt.s32.totalorder %v502, 3
        %vm524 = vcmp.lt.s32.totalorder %v502, 4
        %v525 = vsel %vm521, %v505, %v508
        %v526 = vsel %vm524, %v514, 2102212464
        %v527 = vsel %vm523, %v511, %v526
        %v528 = vsel %vm522, %v525, %v527
        %v529 = vsel %vm521, %v508, %v511
        %v530 = vsel %vm524, %v517, 920167782
        %v531 = vsel %vm523, %v514, %v530
        %v532 = vsel %vm522, %v529, %v531
        %v533 = vsel %vm521, %v511, %v514
        %v534 = vsel %vm524, %v520, 1326507024
        %v535 = vsel %vm523, %v517, %v534
        %v536 = vsel %vm522, %v533, %v535
        %v537 = vshll.u32 %v497, 8
        %v538 = vmul.u32.u64.compose %v537, %v536
        %v539 = vextract.low.u32 %v538
        %v540 = vextract.high.u32 %v538
        %v541 = vmul.u32.u64.compose %v537, %v532
        %v542 = vextract.low.u32 %v541
        %v543 = vextract.high.u32 %v541
        %v544 = vmul.u32 %v537, %v528
        %v545 = vadd.s32 %v540, %v542
        %vm546 = vc.u32 %v540, %v542
        %v547 = vadd.s32 %v543, 1
        %v548 = vsel %vm546, %v547, %v543
        %v549 = vadd.s32 %v544, %v548
        %v550 = vadd.s32 %v549, 536870912
        %v551 = vshrl.u32 %v550, 30
        %v552 = vshll.u32 %v551, 30
        %v553 = vsub.s32 %v549, %v552
        %vm554 = vcmp.lt.s32.totalorder %v553, 0
        %v555 = vsub.s32 0, %v553
        %v556 = vsel %vm554, %v555, %v553
        %v557 = vclz %v556
        %v558 = vsub.s32 %v557, 2
        %vm559 = vcmp.gt.s32.totalorder 0, %v558
        %v560 = vsel %vm559, 0, %v558
        %v561 = vsub.s32 32, %v560
        %v562 = vshll.u32 %v553, %v560
        %v563 = vshrl.u32 %v545, %v561
        %v564 = vor.u32 %v562, %v563
        %v565 = vsub.s32 4294967266, %v560
        %v566 = vadd.s32 %v565, 127
        %v567 = vshll.u32 %v566, 23
        %v568 = vor.u32 4788187, %v567
        %v569 = vand.u32 2147483647, %v568
        %v571 = vcvt.s32.f32 %v564
        %v572 = vmul.f32 %v571, %v569
        %v573 = vxor.u32 %v572, 2147483648
        %v574 = vsel %vm491, %v573, %v572
        %v575 = vsub.s32 4, %v551
        %v576 = vsel %vm491, %v575, %v551
        %v577 = vsel %vm490, %v352, %v574
        %v578 = vsel %vm490, 0, %v576
        %v579 = vcosq.f32.pop %v577
        %v580 = vsinq.f32.pop %v577
        %vm581 = vweird.f32 %v352
        %v582 = vadd.s32 %v578, 3
        %v583 = vand.u32 %v582, 3
        %vm584 = vcmp.lt.s32.totalorder %v583, 2
        %vm585 = vcmp.eq.s32.totalorder %v583, 0
        %v586 = vxor.u32 %v580, 2147483648
        %v587 = vsel %vm585, %v579, %v586
        %vm588 = vcmp.eq.s32.totalorder %v583, 2
        %v589 = vxor.u32 %v579, 2147483648
        %v590 = vsel %vm588, %v589, %v580
        %v591 = vsel %vm584, %v587, %v590
        %v592 = vsel %vm581, nan, %v591
        %v593 = vand.u32 2147483647, %v357
        %vm594 = vcmp.le.f32.partialorder %v593, 0.7853982
        %vm595 = vcmp.lt.s32.totalorder %v357, 0
        %v596 = vand.u32 %v357, 2139095040
        %v597 = vshrl.u32 %v596, 23
        %v598 = vsub.s32 %v597, 127
        %v599 = vand.u32 2147483647, %v357
        %v600 = vand.u32 %v599, 8388607
        %v601 = vor.u32 %v600, 8388608
        %v602 = vsub.s32 0, %v601
        %v603 = vadd.s32 %v598, 1
        %vm604 = vcmp.gt.s32.totalorder %v603, 0
        %v605 = vsel %vm604, %v603, 0
        %v606 = vshrl.u32 %v605, 5
        %v607 = vand.u32 %v605, 31
        %v608 = vsub.s32 32, %v607
        %v609 = vshrl.u32 683565275, %v608
        %v610 = vshll.u32 683565275, %v607
        %v611 = vshrl.u32 2475754826, %v608
        %v612 = vor.u32 %v610, %v611
        %v613 = vshll.u32 2475754826, %v607
        %v614 = vshrl.u32 2131351028, %v608
        %v615 = vor.u32 %v613, %v614
        %v616 = vshll.u32 2131351028, %v607
        %v617 = vshrl.u32 2102212464, %v608
        %v618 = vor.u32 %v616, %v617
        %v619 = vshll.u32 2102212464, %v607
        %v620 = vshrl.u32 920167782, %v608
        %v621 = vor.u32 %v619, %v620
        %v622 = vshll.u32 920167782, %v607
        %v623 = vshrl.u32 1326507024, %v608
        %v624 = vor.u32 %v622, %v623
        %vm625 = vcmp.lt.s32.totalorder %v606, 1
        %vm626 = vcmp.lt.s32.totalorder %v606, 2
        %vm627 = vcmp.lt.s32.totalorder %v606, 3
        %vm628 = vcmp.lt.s32.totalorder %v606, 4
        %v629 = vsel %vm625, %v609, %v612
        %v630 = vsel %vm628, %v618, 2102212464
        %v631 = vsel %vm627, %v615, %v630
        %v632 = vsel %vm626, %v629, %v631
        %v633 = vsel %vm625, %v612, %v615
        %v634 = vsel %vm628, %v621, 920167782
        %v635 = vsel %vm627, %v618, %v634
        %v636 = vsel %vm626, %v633, %v635
        %v637 = vsel %vm625, %v615, %v618
        %v638 = vsel %vm628, %v624, 1326507024
        %v639 = vsel %vm627, %v621, %v638
        %v640 = vsel %vm626, %v637, %v639
        %v641 = vshll.u32 %v601, 8
        %v642 = vmul.u32.u64.compose %v641, %v640
        %v643 = vextract.low.u32 %v642
        %v644 = vextract.high.u32 %v642
        %v645 = vmul.u32.u64.compose %v641, %v636
        %v646 = vextract.low.u32 %v645
        %v647 = vextract.high.u32 %v645
        %v648 = vmul.u32 %v641, %v632
        %v649 = vadd.s32 %v644, %v646
        %vm650 = vc.u32 %v644, %v646
        %v651 = vadd.s32 %v647, 1
        %v652 = vsel %vm650, %v651, %v647
        %v653 = vadd.s32 %v648, %v652
        %v654 = vadd.s32 %v653, 536870912
        %v655 = vshrl.u32 %v654, 30
        %v656 = vshll.u32 %v655, 30
        %v657 = vsub.s32 %v653, %v656
        %vm658 = vcmp.lt.s32.totalorder %v657, 0
        %v659 = vsub.s32 0, %v657
        %v660 = vsel %vm658, %v659, %v657
        %v661 = vclz %v660
        %v662 = vsub.s32 %v661, 2
        %vm663 = vcmp.gt.s32.totalorder 0, %v662
        %v664 = vsel %vm663, 0, %v662
        %v665 = vsub.s32 32, %v664
        %v666 = vshll.u32 %v657, %v664
        %v667 = vshrl.u32 %v649, %v665
        %v668 = vor.u32 %v666, %v667
        %v669 = vsub.s32 4294967266, %v664
        %v670 = vadd.s32 %v669, 127
        %v671 = vshll.u32 %v670, 23
        %v672 = vor.u32 4788187, %v671
        %v673 = vand.u32 2147483647, %v672
        %v675 = vcvt.s32.f32 %v668
        %v676 = vmul.f32 %v675, %v673
        %v677 = vxor.u32 %v676, 2147483648
        %v678 = vsel %vm595, %v677, %v676
        %v679 = vsub.s32 4, %v655
        %v680 = vsel %vm595, %v679, %v655
        %v681 = vsel %vm594, %v357, %v678
        %v682 = vsel %vm594, 0, %v680
        %v683 = vcosq.f32.pop %v681
        %v684 = vsinq.f32.pop %v681
        %vm685 = vweird.f32 %v357
        %v686 = vadd.s32 %v682, 3
        %v687 = vand.u32 %v686, 3
        %vm688 = vcmp.lt.s32.totalorder %v687, 2
        %vm689 = vcmp.eq.s32.totalorder %v687, 0
        %v690 = vxor.u32 %v684, 2147483648
        %v691 = vsel %vm689, %v683, %v690
        %vm692 = vcmp.eq.s32.totalorder %v687, 2
        %v693 = vxor.u32 %v683, 2147483648
        %v694 = vsel %vm692, %v693, %v684
        %v695 = vsel %vm688, %v691, %v694
        %v696 = vsel %vm685, nan, %v695
        %v697 = vand.u32 2147483647, %v362
        %vm698 = vcmp.le.f32.partialorder %v697, 0.7853982
        %vm699 = vcmp.lt.s32.totalorder %v362, 0
        %v700 = vand.u32 %v362, 2139095040
        %v701 = vshrl.u32 %v700, 23
        %v702 = vsub.s32 %v701, 127
        %v703 = vand.u32 2147483647, %v362
        %v704 = vand.u32 %v703, 8388607
        %v705 = vor.u32 %v704, 8388608
        %v706 = vsub.s32 0, %v705
        %v707 = vadd.s32 %v702, 1
        %vm708 = vcmp.gt.s32.totalorder %v707, 0
        %v709 = vsel %vm708, %v707, 0
        %v710 = vshrl.u32 %v709, 5
        %v711 = vand.u32 %v709, 31
        %v712 = vsub.s32 32, %v711
        %v713 = vshrl.u32 683565275, %v712
        %v714 = vshll.u32 683565275, %v711
        %v715 = vshrl.u32 2475754826, %v712
        %v716 = vor.u32 %v714, %v715
        %v717 = vshll.u32 2475754826, %v711
        %v718 = vshrl.u32 2131351028, %v712
        %v719 = vor.u32 %v717, %v718
        %v720 = vshll.u32 2131351028, %v711
        %v721 = vshrl.u32 2102212464, %v712
        %v722 = vor.u32 %v720, %v721
        %v723 = vshll.u32 2102212464, %v711
        %v724 = vshrl.u32 920167782, %v712
        %v725 = vor.u32 %v723, %v724
        %v726 = vshll.u32 920167782, %v711
        %v727 = vshrl.u32 1326507024, %v712
        %v728 = vor.u32 %v726, %v727
        %vm729 = vcmp.lt.s32.totalorder %v710, 1
        %vm730 = vcmp.lt.s32.totalorder %v710, 2
        %vm731 = vcmp.lt.s32.totalorder %v710, 3
        %vm732 = vcmp.lt.s32.totalorder %v710, 4
        %v733 = vsel %vm729, %v713, %v716
        %v734 = vsel %vm732, %v722, 2102212464
        %v735 = vsel %vm731, %v719, %v734
        %v736 = vsel %vm730, %v733, %v735
        %v737 = vsel %vm729, %v716, %v719
        %v738 = vsel %vm732, %v725, 920167782
        %v739 = vsel %vm731, %v722, %v738
        %v740 = vsel %vm730, %v737, %v739
        %v741 = vsel %vm729, %v719, %v722
        %v742 = vsel %vm732, %v728, 1326507024
        %v743 = vsel %vm731, %v725, %v742
        %v744 = vsel %vm730, %v741, %v743
        %v745 = vshll.u32 %v705, 8
        %v746 = vmul.u32.u64.compose %v745, %v744
        %v747 = vextract.low.u32 %v746
        %v748 = vextract.high.u32 %v746
        %v749 = vmul.u32.u64.compose %v745, %v740
        %v750 = vextract.low.u32 %v749
        %v751 = vextract.high.u32 %v749
        %v752 = vmul.u32 %v745, %v736
        %v753 = vadd.s32 %v748, %v750
        %vm754 = vc.u32 %v748, %v750
        %v755 = vadd.s32 %v751, 1
        %v756 = vsel %vm754, %v755, %v751
        %v757 = vadd.s32 %v752, %v756
        %v758 = vadd.s32 %v757, 536870912
        %v759 = vshrl.u32 %v758, 30
        %v760 = vshll.u32 %v759, 30
        %v761 = vsub.s32 %v757, %v760
        %vm762 = vcmp.lt.s32.totalorder %v761, 0
        %v763 = vsub.s32 0, %v761
        %v764 = vsel %vm762, %v763, %v761
        %v765 = vclz %v764
        %v766 = vsub.s32 %v765, 2
        %vm767 = vcmp.gt.s32.totalorder 0, %v766
        %v768 = vsel %vm767, 0, %v766
        %v769 = vsub.s32 32, %v768
        %v770 = vshll.u32 %v761, %v768
        %v771 = vshrl.u32 %v753, %v769
        %v772 = vor.u32 %v770, %v771
        %v773 = vsub.s32 4294967266, %v768
        %v774 = vadd.s32 %v773, 127
        %v775 = vshll.u32 %v774, 23
        %v776 = vor.u32 4788187, %v775
        %v777 = vand.u32 2147483647, %v776
        %v779 = vcvt.s32.f32 %v772
        %v780 = vmul.f32 %v779, %v777
        %v781 = vxor.u32 %v780, 2147483648
        %v782 = vsel %vm699, %v781, %v780
        %v783 = vsub.s32 4, %v759
        %v784 = vsel %vm699, %v783, %v759
        %v785 = vsel %vm698, %v362, %v782
        %v786 = vsel %vm698, 0, %v784
        %v787 = vcosq.f32.pop %v785
        %v788 = vsinq.f32.pop %v785
        %vm789 = vweird.f32 %v362
        %v790 = vadd.s32 %v786, 3
        %v791 = vand.u32 %v790, 3
        %vm792 = vcmp.lt.s32.totalorder %v791, 2
        %vm793 = vcmp.eq.s32.totalorder %v791, 0
        %v794 = vxor.u32 %v788, 2147483648
        %v795 = vsel %vm793, %v787, %v794
        %vm796 = vcmp.eq.s32.totalorder %v791, 2
        %v797 = vxor.u32 %v787, 2147483648
        %v798 = vsel %vm796, %v797, %v788
        %v799 = vsel %vm792, %v795, %v798
        %v800 = vsel %vm789, nan, %v799
        %v801 = vand.u32 2147483647, %v367
        %vm802 = vcmp.le.f32.partialorder %v801, 0.7853982
        %vm803 = vcmp.lt.s32.totalorder %v367, 0
        %v804 = vand.u32 %v367, 2139095040
        %v805 = vshrl.u32 %v804, 23
        %v806 = vsub.s32 %v805, 127
        %v807 = vand.u32 2147483647, %v367
        %v808 = vand.u32 %v807, 8388607
        %v809 = vor.u32 %v808, 8388608
        %v810 = vsub.s32 0, %v809
        %v811 = vadd.s32 %v806, 1
        %vm812 = vcmp.gt.s32.totalorder %v811, 0
        %v813 = vsel %vm812, %v811, 0
        %v814 = vshrl.u32 %v813, 5
        %v815 = vand.u32 %v813, 31
        %v816 = vsub.s32 32, %v815
        %v817 = vshrl.u32 683565275, %v816
        %v818 = vshll.u32 683565275, %v815
        %v819 = vshrl.u32 2475754826, %v816
        %v820 = vor.u32 %v818, %v819
        %v821 = vshll.u32 2475754826, %v815
        %v822 = vshrl.u32 2131351028, %v816
        %v823 = vor.u32 %v821, %v822
        %v824 = vshll.u32 2131351028, %v815
        %v825 = vshrl.u32 2102212464, %v816
        %v826 = vor.u32 %v824, %v825
        %v827 = vshll.u32 2102212464, %v815
        %v828 = vshrl.u32 920167782, %v816
        %v829 = vor.u32 %v827, %v828
        %v830 = vshll.u32 920167782, %v815
        %v831 = vshrl.u32 1326507024, %v816
        %v832 = vor.u32 %v830, %v831
        %vm833 = vcmp.lt.s32.totalorder %v814, 1
        %vm834 = vcmp.lt.s32.totalorder %v814, 2
        %vm835 = vcmp.lt.s32.totalorder %v814, 3
        %vm836 = vcmp.lt.s32.totalorder %v814, 4
        %v837 = vsel %vm833, %v817, %v820
        %v838 = vsel %vm836, %v826, 2102212464
        %v839 = vsel %vm835, %v823, %v838
        %v840 = vsel %vm834, %v837, %v839
        %v841 = vsel %vm833, %v820, %v823
        %v842 = vsel %vm836, %v829, 920167782
        %v843 = vsel %vm835, %v826, %v842
        %v844 = vsel %vm834, %v841, %v843
        %v845 = vsel %vm833, %v823, %v826
        %v846 = vsel %vm836, %v832, 1326507024
        %v847 = vsel %vm835, %v829, %v846
        %v848 = vsel %vm834, %v845, %v847
        %v849 = vshll.u32 %v809, 8
        %v850 = vmul.u32.u64.compose %v849, %v848
        %v851 = vextract.low.u32 %v850
        %v852 = vextract.high.u32 %v850
        %v853 = vmul.u32.u64.compose %v849, %v844
        %v854 = vextract.low.u32 %v853
        %v855 = vextract.high.u32 %v853
        %v856 = vmul.u32 %v849, %v840
        %v857 = vadd.s32 %v852, %v854
        %vm858 = vc.u32 %v852, %v854
        %v859 = vadd.s32 %v855, 1
        %v860 = vsel %vm858, %v859, %v855
        %v861 = vadd.s32 %v856, %v860
        %v862 = vadd.s32 %v861, 536870912
        %v863 = vshrl.u32 %v862, 30
        %v864 = vshll.u32 %v863, 30
        %v865 = vsub.s32 %v861, %v864
        %vm866 = vcmp.lt.s32.totalorder %v865, 0
        %v867 = vsub.s32 0, %v865
        %v868 = vsel %vm866, %v867, %v865
        %v869 = vclz %v868
        %v870 = vsub.s32 %v869, 2
        %vm871 = vcmp.gt.s32.totalorder 0, %v870
        %v872 = vsel %vm871, 0, %v870
        %v873 = vsub.s32 32, %v872
        %v874 = vshll.u32 %v865, %v872
        %v875 = vshrl.u32 %v857, %v873
        %v876 = vor.u32 %v874, %v875
        %v877 = vsub.s32 4294967266, %v872
        %v878 = vadd.s32 %v877, 127
        %v879 = vshll.u32 %v878, 23
        %v880 = vor.u32 4788187, %v879
        %v881 = vand.u32 2147483647, %v880
        %v883 = vcvt.s32.f32 %v876
        %v884 = vmul.f32 %v883, %v881
        %v885 = vxor.u32 %v884, 2147483648
        %v886 = vsel %vm803, %v885, %v884
        %v887 = vsub.s32 4, %v863
        %v888 = vsel %vm803, %v887, %v863
        %v889 = vsel %vm802, %v367, %v886
        %v890 = vsel %vm802, 0, %v888
        %v891 = vcosq.f32.pop %v889
        %v892 = vsinq.f32.pop %v889
        %vm893 = vweird.f32 %v367
        %v894 = vadd.s32 %v890, 3
        %v895 = vand.u32 %v894, 3
        %vm896 = vcmp.lt.s32.totalorder %v895, 2
        %vm897 = vcmp.eq.s32.totalorder %v895, 0
        %v898 = vxor.u32 %v892, 2147483648
        %v899 = vsel %vm897, %v891, %v898
        %vm900 = vcmp.eq.s32.totalorder %v895, 2
        %v901 = vxor.u32 %v891, 2147483648
        %v902 = vsel %vm900, %v901, %v892
        %v903 = vsel %vm896, %v899, %v902
        %v904 = vsel %vm893, nan, %v903
        %v905 = vand.u32 2147483647, %v372
        %vm906 = vcmp.le.f32.partialorder %v905, 0.7853982
        %vm907 = vcmp.lt.s32.totalorder %v372, 0
        %v908 = vand.u32 %v372, 2139095040
        %v909 = vshrl.u32 %v908, 23
        %v910 = vsub.s32 %v909, 127
        %v911 = vand.u32 2147483647, %v372
        %v912 = vand.u32 %v911, 8388607
        %v913 = vor.u32 %v912, 8388608
        %v914 = vsub.s32 0, %v913
        %v915 = vadd.s32 %v910, 1
        %vm916 = vcmp.gt.s32.totalorder %v915, 0
        %v917 = vsel %vm916, %v915, 0
        %v918 = vshrl.u32 %v917, 5
        %v919 = vand.u32 %v917, 31
        %v920 = vsub.s32 32, %v919
        %v921 = vshrl.u32 683565275, %v920
        %v922 = vshll.u32 683565275, %v919
        %v923 = vshrl.u32 2475754826, %v920
        %v924 = vor.u32 %v922, %v923
        %v925 = vshll.u32 2475754826, %v919
        %v926 = vshrl.u32 2131351028, %v920
        %v927 = vor.u32 %v925, %v926
        %v928 = vshll.u32 2131351028, %v919
        %v929 = vshrl.u32 2102212464, %v920
        %v930 = vor.u32 %v928, %v929
        %v931 = vshll.u32 2102212464, %v919
        %v932 = vshrl.u32 920167782, %v920
        %v933 = vor.u32 %v931, %v932
        %v934 = vshll.u32 920167782, %v919
        %v935 = vshrl.u32 1326507024, %v920
        %v936 = vor.u32 %v934, %v935
        %vm937 = vcmp.lt.s32.totalorder %v918, 1
        %vm938 = vcmp.lt.s32.totalorder %v918, 2
        %vm939 = vcmp.lt.s32.totalorder %v918, 3
        %vm940 = vcmp.lt.s32.totalorder %v918, 4
        %v941 = vsel %vm937, %v921, %v924
        %v942 = vsel %vm940, %v930, 2102212464
        %v943 = vsel %vm939, %v927, %v942
        %v944 = vsel %vm938, %v941, %v943
        %v945 = vsel %vm937, %v924, %v927
        %v946 = vsel %vm940, %v933, 920167782
        %v947 = vsel %vm939, %v930, %v946
        %v948 = vsel %vm938, %v945, %v947
        %v949 = vsel %vm937, %v927, %v930
        %v950 = vsel %vm940, %v936, 1326507024
        %v951 = vsel %vm939, %v933, %v950
        %v952 = vsel %vm938, %v949, %v951
        %v953 = vshll.u32 %v913, 8
        %v954 = vmul.u32.u64.compose %v953, %v952
        %v955 = vextract.low.u32 %v954
        %v956 = vextract.high.u32 %v954
        %v957 = vmul.u32.u64.compose %v953, %v948
        %v958 = vextract.low.u32 %v957
        %v959 = vextract.high.u32 %v957
        %v960 = vmul.u32 %v953, %v944
        %v961 = vadd.s32 %v956, %v958
        %vm962 = vc.u32 %v956, %v958
        %v963 = vadd.s32 %v959, 1
        %v964 = vsel %vm962, %v963, %v959
        %v965 = vadd.s32 %v960, %v964
        %v966 = vadd.s32 %v965, 536870912
        %v967 = vshrl.u32 %v966, 30
        %v968 = vshll.u32 %v967, 30
        %v969 = vsub.s32 %v965, %v968
        %vm970 = vcmp.lt.s32.totalorder %v969, 0
        %v971 = vsub.s32 0, %v969
        %v972 = vsel %vm970, %v971, %v969
        %v973 = vclz %v972
        %v974 = vsub.s32 %v973, 2
        %vm975 = vcmp.gt.s32.totalorder 0, %v974
        %v976 = vsel %vm975, 0, %v974
        %v977 = vsub.s32 32, %v976
        %v978 = vshll.u32 %v969, %v976
        %v979 = vshrl.u32 %v961, %v977
        %v980 = vor.u32 %v978, %v979
        %v981 = vsub.s32 4294967266, %v976
        %v982 = vadd.s32 %v981, 127
        %v983 = vshll.u32 %v982, 23
        %v984 = vor.u32 4788187, %v983
        %v985 = vand.u32 2147483647, %v984
        %v987 = vcvt.s32.f32 %v980
        %v988 = vmul.f32 %v987, %v985
        %v989 = vxor.u32 %v988, 2147483648
        %v990 = vsel %vm907, %v989, %v988
        %v991 = vsub.s32 4, %v967
        %v992 = vsel %vm907, %v991, %v967
        %v993 = vsel %vm906, %v372, %v990
        %v994 = vsel %vm906, 0, %v992
        %v995 = vcosq.f32.pop %v993
        %v996 = vsinq.f32.pop %v993
        %vm997 = vweird.f32 %v372
        %v998 = vadd.s32 %v994, 3
        %v999 = vand.u32 %v998, 3
        %vm1000 = vcmp.lt.s32.totalorder %v999, 2
        %vm1001 = vcmp.eq.s32.totalorder %v999, 0
        %v1002 = vxor.u32 %v996, 2147483648
        %v1003 = vsel %vm1001, %v995, %v1002
        %vm1004 = vcmp.eq.s32.totalorder %v999, 2
        %v1005 = vxor.u32 %v995, 2147483648
        %v1006 = vsel %vm1004, %v1005, %v996
        %v1007 = vsel %vm1000, %v1003, %v1006
        %v1008 = vsel %vm997, nan, %v1007
        %v1009 = vand.u32 2147483647, %v377
        %vm1010 = vcmp.le.f32.partialorder %v1009, 0.7853982
        %vm1011 = vcmp.lt.s32.totalorder %v377, 0
        %v1012 = vand.u32 %v377, 2139095040
        %v1013 = vshrl.u32 %v1012, 23
        %v1014 = vsub.s32 %v1013, 127
        %v1015 = vand.u32 2147483647, %v377
        %v1016 = vand.u32 %v1015, 8388607
        %v1017 = vor.u32 %v1016, 8388608
        %v1018 = vsub.s32 0, %v1017
        %v1019 = vadd.s32 %v1014, 1
        %vm1020 = vcmp.gt.s32.totalorder %v1019, 0
        %v1021 = vsel %vm1020, %v1019, 0
        %v1022 = vshrl.u32 %v1021, 5
        %v1023 = vand.u32 %v1021, 31
        %v1024 = vsub.s32 32, %v1023
        %v1025 = vshrl.u32 683565275, %v1024
        %v1026 = vshll.u32 683565275, %v1023
        %v1027 = vshrl.u32 2475754826, %v1024
        %v1028 = vor.u32 %v1026, %v1027
        %v1029 = vshll.u32 2475754826, %v1023
        %v1030 = vshrl.u32 2131351028, %v1024
        %v1031 = vor.u32 %v1029, %v1030
        %v1032 = vshll.u32 2131351028, %v1023
        %v1033 = vshrl.u32 2102212464, %v1024
        %v1034 = vor.u32 %v1032, %v1033
        %v1035 = vshll.u32 2102212464, %v1023
        %v1036 = vshrl.u32 920167782, %v1024
        %v1037 = vor.u32 %v1035, %v1036
        %v1038 = vshll.u32 920167782, %v1023
        %v1039 = vshrl.u32 1326507024, %v1024
        %v1040 = vor.u32 %v1038, %v1039
        %vm1041 = vcmp.lt.s32.totalorder %v1022, 1
        %vm1042 = vcmp.lt.s32.totalorder %v1022, 2
        %vm1043 = vcmp.lt.s32.totalorder %v1022, 3
        %vm1044 = vcmp.lt.s32.totalorder %v1022, 4
        %v1045 = vsel %vm1041, %v1025, %v1028
        %v1046 = vsel %vm1044, %v1034, 2102212464
        %v1047 = vsel %vm1043, %v1031, %v1046
        %v1048 = vsel %vm1042, %v1045, %v1047
        %v1049 = vsel %vm1041, %v1028, %v1031
        %v1050 = vsel %vm1044, %v1037, 920167782
        %v1051 = vsel %vm1043, %v1034, %v1050
        %v1052 = vsel %vm1042, %v1049, %v1051
        %v1053 = vsel %vm1041, %v1031, %v1034
        %v1054 = vsel %vm1044, %v1040, 1326507024
        %v1055 = vsel %vm1043, %v1037, %v1054
        %v1056 = vsel %vm1042, %v1053, %v1055
        %v1057 = vshll.u32 %v1017, 8
        %v1058 = vmul.u32.u64.compose %v1057, %v1056
        %v1059 = vextract.low.u32 %v1058
        %v1060 = vextract.high.u32 %v1058
        %v1061 = vmul.u32.u64.compose %v1057, %v1052
        %v1062 = vextract.low.u32 %v1061
        %v1063 = vextract.high.u32 %v1061
        %v1064 = vmul.u32 %v1057, %v1048
        %v1065 = vadd.s32 %v1060, %v1062
        %vm1066 = vc.u32 %v1060, %v1062
        %v1067 = vadd.s32 %v1063, 1
        %v1068 = vsel %vm1066, %v1067, %v1063
        %v1069 = vadd.s32 %v1064, %v1068
        %v1070 = vadd.s32 %v1069, 536870912
        %v1071 = vshrl.u32 %v1070, 30
        %v1072 = vshll.u32 %v1071, 30
        %v1073 = vsub.s32 %v1069, %v1072
        %vm1074 = vcmp.lt.s32.totalorder %v1073, 0
        %v1075 = vsub.s32 0, %v1073
        %v1076 = vsel %vm1074, %v1075, %v1073
        %v1077 = vclz %v1076
        %v1078 = vsub.s32 %v1077, 2
        %vm1079 = vcmp.gt.s32.totalorder 0, %v1078
        %v1080 = vsel %vm1079, 0, %v1078
        %v1081 = vsub.s32 32, %v1080
        %v1082 = vshll.u32 %v1073, %v1080
        %v1083 = vshrl.u32 %v1065, %v1081
        %v1084 = vor.u32 %v1082, %v1083
        %v1085 = vsub.s32 4294967266, %v1080
        %v1086 = vadd.s32 %v1085, 127
        %v1087 = vshll.u32 %v1086, 23
        %v1088 = vor.u32 4788187, %v1087
        %v1089 = vand.u32 2147483647, %v1088
        %v1091 = vcvt.s32.f32 %v1084
        %v1092 = vmul.f32 %v1091, %v1089
        %v1093 = vxor.u32 %v1092, 2147483648
        %v1094 = vsel %vm1011, %v1093, %v1092
        %v1095 = vsub.s32 4, %v1071
        %v1096 = vsel %vm1011, %v1095, %v1071
        %v1097 = vsel %vm1010, %v377, %v1094
        %v1098 = vsel %vm1010, 0, %v1096
        %v1099 = vcosq.f32.pop %v1097
        %v1100 = vsinq.f32.pop %v1097
        %vm1101 = vweird.f32 %v377
        %v1102 = vadd.s32 %v1098, 3
        %v1103 = vand.u32 %v1102, 3
        %vm1104 = vcmp.lt.s32.totalorder %v1103, 2
        %vm1105 = vcmp.eq.s32.totalorder %v1103, 0
        %v1106 = vxor.u32 %v1100, 2147483648
        %v1107 = vsel %vm1105, %v1099, %v1106
        %vm1108 = vcmp.eq.s32.totalorder %v1103, 2
        %v1109 = vxor.u32 %v1099, 2147483648
        %v1110 = vsel %vm1108, %v1109, %v1100
        %v1111 = vsel %vm1104, %v1107, %v1110
        %v1112 = vsel %vm1101, nan, %v1111
        %v1113 = vand.u32 2147483647, %v382
        %vm1114 = vcmp.le.f32.partialorder %v1113, 0.7853982
        %vm1115 = vcmp.lt.s32.totalorder %v382, 0
        %v1116 = vand.u32 %v382, 2139095040
        %v1117 = vshrl.u32 %v1116, 23
        %v1118 = vsub.s32 %v1117, 127
        %v1119 = vand.u32 2147483647, %v382
        %v1120 = vand.u32 %v1119, 8388607
        %v1121 = vor.u32 %v1120, 8388608
        %v1122 = vsub.s32 0, %v1121
        %v1123 = vadd.s32 %v1118, 1
        %vm1124 = vcmp.gt.s32.totalorder %v1123, 0
        %v1125 = vsel %vm1124, %v1123, 0
        %v1126 = vshrl.u32 %v1125, 5
        %v1127 = vand.u32 %v1125, 31
        %v1128 = vsub.s32 32, %v1127
        %v1129 = vshrl.u32 683565275, %v1128
        %v1130 = vshll.u32 683565275, %v1127
        %v1131 = vshrl.u32 2475754826, %v1128
        %v1132 = vor.u32 %v1130, %v1131
        %v1133 = vshll.u32 2475754826, %v1127
        %v1134 = vshrl.u32 2131351028, %v1128
        %v1135 = vor.u32 %v1133, %v1134
        %v1136 = vshll.u32 2131351028, %v1127
        %v1137 = vshrl.u32 2102212464, %v1128
        %v1138 = vor.u32 %v1136, %v1137
        %v1139 = vshll.u32 2102212464, %v1127
        %v1140 = vshrl.u32 920167782, %v1128
        %v1141 = vor.u32 %v1139, %v1140
        %v1142 = vshll.u32 920167782, %v1127
        %v1143 = vshrl.u32 1326507024, %v1128
        %v1144 = vor.u32 %v1142, %v1143
        %vm1145 = vcmp.lt.s32.totalorder %v1126, 1
        %vm1146 = vcmp.lt.s32.totalorder %v1126, 2
        %vm1147 = vcmp.lt.s32.totalorder %v1126, 3
        %vm1148 = vcmp.lt.s32.totalorder %v1126, 4
        %v1149 = vsel %vm1145, %v1129, %v1132
        %v1150 = vsel %vm1148, %v1138, 2102212464
        %v1151 = vsel %vm1147, %v1135, %v1150
        %v1152 = vsel %vm1146, %v1149, %v1151
        %v1153 = vsel %vm1145, %v1132, %v1135
        %v1154 = vsel %vm1148, %v1141, 920167782
        %v1155 = vsel %vm1147, %v1138, %v1154
        %v1156 = vsel %vm1146, %v1153, %v1155
        %v1157 = vsel %vm1145, %v1135, %v1138
        %v1158 = vsel %vm1148, %v1144, 1326507024
        %v1159 = vsel %vm1147, %v1141, %v1158
        %v1160 = vsel %vm1146, %v1157, %v1159
        %v1161 = vshll.u32 %v1121, 8
        %v1162 = vmul.u32.u64.compose %v1161, %v1160
        %v1163 = vextract.low.u32 %v1162
        %v1164 = vextract.high.u32 %v1162
        %v1165 = vmul.u32.u64.compose %v1161, %v1156
        %v1166 = vextract.low.u32 %v1165
        %v1167 = vextract.high.u32 %v1165
        %v1168 = vmul.u32 %v1161, %v1152
        %v1169 = vadd.s32 %v1164, %v1166
        %vm1170 = vc.u32 %v1164, %v1166
        %v1171 = vadd.s32 %v1167, 1
        %v1172 = vsel %vm1170, %v1171, %v1167
        %v1173 = vadd.s32 %v1168, %v1172
        %v1174 = vadd.s32 %v1173, 536870912
        %v1175 = vshrl.u32 %v1174, 30
        %v1176 = vshll.u32 %v1175, 30
        %v1177 = vsub.s32 %v1173, %v1176
        %vm1178 = vcmp.lt.s32.totalorder %v1177, 0
        %v1179 = vsub.s32 0, %v1177
        %v1180 = vsel %vm1178, %v1179, %v1177
        %v1181 = vclz %v1180
        %v1182 = vsub.s32 %v1181, 2
        %vm1183 = vcmp.gt.s32.totalorder 0, %v1182
        %v1184 = vsel %vm1183, 0, %v1182
        %v1185 = vsub.s32 32, %v1184
        %v1186 = vshll.u32 %v1177, %v1184
        %v1187 = vshrl.u32 %v1169, %v1185
        %v1188 = vor.u32 %v1186, %v1187
        %v1189 = vsub.s32 4294967266, %v1184
        %v1190 = vadd.s32 %v1189, 127
        %v1191 = vshll.u32 %v1190, 23
        %v1192 = vor.u32 4788187, %v1191
        %v1193 = vand.u32 2147483647, %v1192
        %v1195 = vcvt.s32.f32 %v1188
        %v1196 = vmul.f32 %v1195, %v1193
        %v1197 = vxor.u32 %v1196, 2147483648
        %v1198 = vsel %vm1115, %v1197, %v1196
        %v1199 = vsub.s32 4, %v1175
        %v1200 = vsel %vm1115, %v1199, %v1175
        %v1201 = vsel %vm1114, %v382, %v1198
        %v1202 = vsel %vm1114, 0, %v1200
        %v1203 = vcosq.f32.pop %v1201
        %v1204 = vsinq.f32.pop %v1201
        %vm1205 = vweird.f32 %v382
        %v1206 = vadd.s32 %v1202, 3
        %v1207 = vand.u32 %v1206, 3
        %vm1208 = vcmp.lt.s32.totalorder %v1207, 2
        %vm1209 = vcmp.eq.s32.totalorder %v1207, 0
        %v1210 = vxor.u32 %v1204, 2147483648
        %v1211 = vsel %vm1209, %v1203, %v1210
        %vm1212 = vcmp.eq.s32.totalorder %v1207, 2
        %v1213 = vxor.u32 %v1203, 2147483648
        %v1214 = vsel %vm1212, %v1213, %v1204
        %v1215 = vsel %vm1208, %v1211, %v1214
        %v1216 = vsel %vm1205, nan, %v1215
        %v1217 = vld [vmem:[%s2] sm:$0xff]
        %v1218 = vld [vmem:[%s2 + $0x8] sm:$0xff]
        %v1219 = vld [vmem:[%s2 + $0x10] sm:$0xff]
        %v1220 = vld [vmem:[%s2 + $0x18] sm:$0xff]
        %v1221 = vld [vmem:[%s2 + $0x20] sm:$0xff]
        %v1222 = vld [vmem:[%s2 + $0x28] sm:$0xff]
        %v1223 = vld [vmem:[%s2 + $0x30] sm:$0xff]
        %v1224 = vld [vmem:[%s2 + $0x38] sm:$0xff]
        %v1225 = vld [vmem:[%s3] sm:$0xff]
        %v1226 = vld [vmem:[%s3 + $0x8] sm:$0xff]
        %v1227 = vld [vmem:[%s3 + $0x10] sm:$0xff]
        %v1228 = vld [vmem:[%s3 + $0x18] sm:$0xff]
        %v1229 = vld [vmem:[%s3 + $0x20] sm:$0xff]
        %v1230 = vld [vmem:[%s3 + $0x28] sm:$0xff]
        %v1231 = vld [vmem:[%s3 + $0x30] sm:$0xff]
        %v1232 = vld [vmem:[%s3 + $0x38] sm:$0xff]
        %1234 = vset.pattern.permute.xlu0 0
        %1235 = vperm.xlu0 %1234, %v1225
        %v1236 = vpop.permute.xlu0 %1235
        %1239 = vset.pattern.permute.xlu0 0
        %1240 = vperm.xlu0 %1239, %v1226
        %v1241 = vpop.permute.xlu0 %1240
        %1244 = vset.pattern.permute.xlu0 0
        %1245 = vperm.xlu0 %1244, %v1227
        %v1246 = vpop.permute.xlu0 %1245
        %1249 = vset.pattern.permute.xlu0 0
        %1250 = vperm.xlu0 %1249, %v1228
        %v1251 = vpop.permute.xlu0 %1250
        %1254 = vset.pattern.permute.xlu0 0
        %1255 = vperm.xlu0 %1254, %v1229
        %v1256 = vpop.permute.xlu0 %1255
        %1259 = vset.pattern.permute.xlu0 0
        %1260 = vperm.xlu0 %1259, %v1230
        %v1261 = vpop.permute.xlu0 %1260
        %1264 = vset.pattern.permute.xlu0 0
        %1265 = vperm.xlu0 %1264, %v1231
        %v1266 = vpop.permute.xlu0 %1265
        %1269 = vset.pattern.permute.xlu0 0
        %1270 = vperm.xlu0 %1269, %v1232
        %v1271 = vpop.permute.xlu0 %1270
        %vm1273 = vcmask 523264
        %v1275 = vsel %vm1273, %v1217, 0
        %v1278 = vsel %vm1273, %v1218, 0
        %v1281 = vsel %vm1273, %v1219, 0
        %v1284 = vsel %vm1273, %v1220, 0
        %v1287 = vsel %vm1273, %v1221, 0
        %v1290 = vsel %vm1273, %v1222, 0
        %v1293 = vsel %vm1273, %v1223, 0
        %v1296 = vsel %vm1273, %v1224, 0
        %1298 = vmatprep.subr.mxu0 0.0
        %1299 = vmatpush1.msra.mxu0 %v488
        %1300 = vmatprep.subr.mxu0 0.0
        %1301 = vmatpush1.msra.mxu0 %v592
        %1302 = vmatprep.subr.mxu0 0.0
        %1303 = vmatpush1.msra.mxu0 %v696
        %1304 = vmatprep.subr.mxu0 0.0
        %1305 = vmatpush1.msra.mxu0 %v800
        %1306 = vmatprep.subr.mxu0 0.0
        %1307 = vmatpush1.msra.mxu0 %v904
        %1308 = vmatprep.subr.mxu0 0.0
        %1309 = vmatpush1.msra.mxu0 %v1008
        %1310 = vmatprep.subr.mxu0 0.0
        %1311 = vmatpush1.msra.mxu0 %v1112
        %1312 = vmatprep.subr.mxu0 0.0
        %1313 = vmatpush1.msra.mxu0 %v1216
        %1314 = vmatprep.subr.mxu0 0.0
        %1315 = vmatpush1.msra.mxu0 0.0
        %1316 = vmatprep.subr.mxu0 0.0
        %1317 = vmatpush1.msra.mxu0 0.0
        %1318 = vmatprep.subr.mxu0 0.0
        %1319 = vmatpush1.msra.mxu0 0.0
        %1320 = vmatprep.subr.mxu0 0.0
        %1321 = vmatpush1.msra.mxu0 0.0
        %1322 = vmatprep.subr.mxu0 0.0
        %1323 = vmatpush1.msra.mxu0 0.0
        %1324 = vmatprep.subr.mxu0 0.0
        %1325 = vmatpush1.msra.mxu0 0.0
        %1326 = vmatprep.subr.mxu0 0.0
        %1327 = vmatpush1.msra.mxu0 0.0
        %1328 = vmatprep.subr.mxu0 0.0
        %1329 = vmatpush1.msra.mxu0 0.0
        %1330 = vmatprep.subr.mxu0 0.0
        %1331 = vmatpush1.msra.mxu0 0.0
        %1332 = vmatprep.subr.mxu0 0.0
        %1333 = vmatpush1.msra.mxu0 0.0
        %1334 = vmatprep.subr.mxu0 0.0
        %1335 = vmatpush1.msra.mxu0 0.0
        %1336 = vmatprep.subr.mxu0 0.0
        %1337 = vmatpush1.msra.mxu0 0.0
        %1338 = vmatprep.subr.mxu0 0.0
        %1339 = vmatpush1.msra.mxu0 0.0
        %1340 = vmatprep.subr.mxu0 0.0
        %1341 = vmatpush1.msra.mxu0 0.0
        %1342 = vmatprep.subr.mxu0 0.0
        %1343 = vmatpush1.msra.mxu0 0.0
        %1344 = vmatprep.subr.mxu0 0.0
        %1345 = vmatpush1.msra.mxu0 0.0
        %1346 = vmatprep.subr.mxu0 0.0
        %1347 = vmatpush1.msra.mxu0 0.0
        %1348 = vmatprep.subr.mxu0 0.0
        %1349 = vmatpush1.msra.mxu0 0.0
        %1350 = vmatprep.subr.mxu0 0.0
        %1351 = vmatpush1.msra.mxu0 0.0
        %1352 = vmatprep.subr.mxu0 0.0
        %1353 = vmatpush1.msra.mxu0 0.0
        %1354 = vmatprep.subr.mxu0 0.0
        %1355 = vmatpush1.msra.mxu0 0.0
        %1356 = vmatprep.subr.mxu0 0.0
        %1357 = vmatpush1.msra.mxu0 0.0
        %1358 = vmatprep.subr.mxu0 0.0
        %1359 = vmatpush1.msra.mxu0 0.0
        %1360 = vmatprep.subr.mxu0 0.0
        %1361 = vmatpush1.msra.mxu0 0.0
        %1362 = vmatprep.mubr.f32.mxu0 0.0
        %1363 = vmatmul.mubr.f32.gmra.mrb[0].mxu0 %v1275
        %v1364 = vpop.f32.mrb[0].mxu0
        %v1365 = vadd.f32 %v1236, %v1364
        %v1366 = vpop.f32.mrb[0].mxu0
        %1367 = vmatprep.mubr.f32.mxu0 0.0
        %1368 = vmatmul.mubr.f32.gmra.mrb[0].mxu0 %v1278
        %v1369 = vpop.f32.mrb[0].mxu0
        %v1370 = vadd.f32 %v1241, %v1369
        %v1371 = vpop.f32.mrb[0].mxu0
        %1372 = vmatprep.mubr.f32.mxu0 0.0
        %1373 = vmatmul.mubr.f32.gmra.mrb[0].mxu0 %v1281
        %v1374 = vpop.f32.mrb[0].mxu0
        %v1375 = vadd.f32 %v1246, %v1374
        %v1376 = vpop.f32.mrb[0].mxu0
        %1377 = vmatprep.mubr.f32.mxu0 0.0
        %1378 = vmatmul.mubr.f32.gmra.mrb[0].mxu0 %v1284
        %v1379 = vpop.f32.mrb[0].mxu0
        %v1380 = vadd.f32 %v1251, %v1379
        %v1381 = vpop.f32.mrb[0].mxu0
        %1382 = vmatprep.mubr.f32.mxu0 0.0
        %1383 = vmatmul.mubr.f32.gmra.mrb[0].mxu0 %v1287
        %v1384 = vpop.f32.mrb[0].mxu0
        %v1385 = vadd.f32 %v1256, %v1384
        %v1386 = vpop.f32.mrb[0].mxu0
        %1387 = vmatprep.mubr.f32.mxu0 0.0
        %1388 = vmatmul.mubr.f32.gmra.mrb[0].mxu0 %v1290
        %v1389 = vpop.f32.mrb[0].mxu0
        %v1390 = vadd.f32 %v1261, %v1389
        %v1391 = vpop.f32.mrb[0].mxu0
        %1392 = vmatprep.mubr.f32.mxu0 0.0
        %1393 = vmatmul.mubr.f32.gmra.mrb[0].mxu0 %v1293
        %v1394 = vpop.f32.mrb[0].mxu0
        %v1395 = vadd.f32 %v1266, %v1394
        %v1396 = vpop.f32.mrb[0].mxu0
        %1397 = vmatprep.mubr.f32.mxu0 0.0
        %1398 = vmatmul.mubr.f32.gmra.mrb[0].mxu0 %v1296
        %v1399 = vpop.f32.mrb[0].mxu0
        %v1400 = vadd.f32 %v1271, %v1399
        %v1401 = vpop.f32.mrb[0].mxu0
        %1402 = vdwg.mxu0
        %v1403 = vand.u32 2147483647, %v1365
        %vm1404 = vcmp.le.f32.partialorder %v1403, 0.7853982
        %vm1405 = vcmp.lt.s32.totalorder %v1365, 0
        %v1406 = vand.u32 %v1365, 2139095040
        %v1407 = vshrl.u32 %v1406, 23
        %v1408 = vsub.s32 %v1407, 127
        %v1409 = vand.u32 2147483647, %v1365
        %v1410 = vand.u32 %v1409, 8388607
        %v1411 = vor.u32 %v1410, 8388608
        %v1412 = vsub.s32 0, %v1411
        %v1413 = vadd.s32 %v1408, 1
        %vm1414 = vcmp.gt.s32.totalorder %v1413, 0
        %v1415 = vsel %vm1414, %v1413, 0
        %v1416 = vshrl.u32 %v1415, 5
        %v1417 = vand.u32 %v1415, 31
        %v1418 = vsub.s32 32, %v1417
        %v1419 = vshrl.u32 683565275, %v1418
        %v1420 = vshll.u32 683565275, %v1417
        %v1421 = vshrl.u32 2475754826, %v1418
        %v1422 = vor.u32 %v1420, %v1421
        %v1423 = vshll.u32 2475754826, %v1417
        %v1424 = vshrl.u32 2131351028, %v1418
        %v1425 = vor.u32 %v1423, %v1424
        %v1426 = vshll.u32 2131351028, %v1417
        %v1427 = vshrl.u32 2102212464, %v1418
        %v1428 = vor.u32 %v1426, %v1427
        %v1429 = vshll.u32 2102212464, %v1417
        %v1430 = vshrl.u32 920167782, %v1418
        %v1431 = vor.u32 %v1429, %v1430
        %v1432 = vshll.u32 920167782, %v1417
        %v1433 = vshrl.u32 1326507024, %v1418
        %v1434 = vor.u32 %v1432, %v1433
        %vm1435 = vcmp.lt.s32.totalorder %v1416, 1
        %vm1436 = vcmp.lt.s32.totalorder %v1416, 2
        %vm1437 = vcmp.lt.s32.totalorder %v1416, 3
        %vm1438 = vcmp.lt.s32.totalorder %v1416, 4
        %v1439 = vsel %vm1435, %v1419, %v1422
        %v1440 = vsel %vm1438, %v1428, 2102212464
        %v1441 = vsel %vm1437, %v1425, %v1440
        %v1442 = vsel %vm1436, %v1439, %v1441
        %v1443 = vsel %vm1435, %v1422, %v1425
        %v1444 = vsel %vm1438, %v1431, 920167782
        %v1445 = vsel %vm1437, %v1428, %v1444
        %v1446 = vsel %vm1436, %v1443, %v1445
        %v1447 = vsel %vm1435, %v1425, %v1428
        %v1448 = vsel %vm1438, %v1434, 1326507024
        %v1449 = vsel %vm1437, %v1431, %v1448
        %v1450 = vsel %vm1436, %v1447, %v1449
        %v1451 = vshll.u32 %v1411, 8
        %v1452 = vmul.u32.u64.compose %v1451, %v1450
        %v1453 = vextract.low.u32 %v1452
        %v1454 = vextract.high.u32 %v1452
        %v1455 = vmul.u32.u64.compose %v1451, %v1446
        %v1456 = vextract.low.u32 %v1455
        %v1457 = vextract.high.u32 %v1455
        %v1458 = vmul.u32 %v1451, %v1442
        %v1459 = vadd.s32 %v1454, %v1456
        %vm1460 = vc.u32 %v1454, %v1456
        %v1461 = vadd.s32 %v1457, 1
        %v1462 = vsel %vm1460, %v1461, %v1457
        %v1463 = vadd.s32 %v1458, %v1462
        %v1464 = vadd.s32 %v1463, 536870912
        %v1465 = vshrl.u32 %v1464, 30
        %v1466 = vshll.u32 %v1465, 30
        %v1467 = vsub.s32 %v1463, %v1466
        %vm1468 = vcmp.lt.s32.totalorder %v1467, 0
        %v1469 = vsub.s32 0, %v1467
        %v1470 = vsel %vm1468, %v1469, %v1467
        %v1471 = vclz %v1470
        %v1472 = vsub.s32 %v1471, 2
        %vm1473 = vcmp.gt.s32.totalorder 0, %v1472
        %v1474 = vsel %vm1473, 0, %v1472
        %v1475 = vsub.s32 32, %v1474
        %v1476 = vshll.u32 %v1467, %v1474
        %v1477 = vshrl.u32 %v1459, %v1475
        %v1478 = vor.u32 %v1476, %v1477
        %v1479 = vsub.s32 4294967266, %v1474
        %v1480 = vadd.s32 %v1479, 127
        %v1481 = vshll.u32 %v1480, 23
        %v1482 = vor.u32 4788187, %v1481
        %v1483 = vand.u32 2147483647, %v1482
        %v1485 = vcvt.s32.f32 %v1478
        %v1486 = vmul.f32 %v1485, %v1483
        %v1487 = vxor.u32 %v1486, 2147483648
        %v1488 = vsel %vm1405, %v1487, %v1486
        %v1489 = vsub.s32 4, %v1465
        %v1490 = vsel %vm1405, %v1489, %v1465
        %v1491 = vsel %vm1404, %v1365, %v1488
        %v1492 = vsel %vm1404, 0, %v1490
        %v1493 = vcosq.f32.pop %v1491
        %v1494 = vsinq.f32.pop %v1491
        %vm1495 = vweird.f32 %v1365
        %v1496 = vadd.s32 %v1492, 3
        %v1497 = vand.u32 %v1496, 3
        %vm1498 = vcmp.lt.s32.totalorder %v1497, 2
        %vm1499 = vcmp.eq.s32.totalorder %v1497, 0
        %v1500 = vxor.u32 %v1494, 2147483648
        %v1501 = vsel %vm1499, %v1493, %v1500
        %vm1502 = vcmp.eq.s32.totalorder %v1497, 2
        %v1503 = vxor.u32 %v1493, 2147483648
        %v1504 = vsel %vm1502, %v1503, %v1494
        %v1505 = vsel %vm1498, %v1501, %v1504
        %v1506 = vsel %vm1495, nan, %v1505
        %v1507 = vand.u32 2147483647, %v1370
        %vm1508 = vcmp.le.f32.partialorder %v1507, 0.7853982
        %vm1509 = vcmp.lt.s32.totalorder %v1370, 0
        %v1510 = vand.u32 %v1370, 2139095040
        %v1511 = vshrl.u32 %v1510, 23
        %v1512 = vsub.s32 %v1511, 127
        %v1513 = vand.u32 2147483647, %v1370
        %v1514 = vand.u32 %v1513, 8388607
        %v1515 = vor.u32 %v1514, 8388608
        %v1516 = vsub.s32 0, %v1515
        %v1517 = vadd.s32 %v1512, 1
        %vm1518 = vcmp.gt.s32.totalorder %v1517, 0
        %v1519 = vsel %vm1518, %v1517, 0
        %v1520 = vshrl.u32 %v1519, 5
        %v1521 = vand.u32 %v1519, 31
        %v1522 = vsub.s32 32, %v1521
        %v1523 = vshrl.u32 683565275, %v1522
        %v1524 = vshll.u32 683565275, %v1521
        %v1525 = vshrl.u32 2475754826, %v1522
        %v1526 = vor.u32 %v1524, %v1525
        %v1527 = vshll.u32 2475754826, %v1521
        %v1528 = vshrl.u32 2131351028, %v1522
        %v1529 = vor.u32 %v1527, %v1528
        %v1530 = vshll.u32 2131351028, %v1521
        %v1531 = vshrl.u32 2102212464, %v1522
        %v1532 = vor.u32 %v1530, %v1531
        %v1533 = vshll.u32 2102212464, %v1521
        %v1534 = vshrl.u32 920167782, %v1522
        %v1535 = vor.u32 %v1533, %v1534
        %v1536 = vshll.u32 920167782, %v1521
        %v1537 = vshrl.u32 1326507024, %v1522
        %v1538 = vor.u32 %v1536, %v1537
        %vm1539 = vcmp.lt.s32.totalorder %v1520, 1
        %vm1540 = vcmp.lt.s32.totalorder %v1520, 2
        %vm1541 = vcmp.lt.s32.totalorder %v1520, 3
        %vm1542 = vcmp.lt.s32.totalorder %v1520, 4
        %v1543 = vsel %vm1539, %v1523, %v1526
        %v1544 = vsel %vm1542, %v1532, 2102212464
        %v1545 = vsel %vm1541, %v1529, %v1544
        %v1546 = vsel %vm1540, %v1543, %v1545
        %v1547 = vsel %vm1539, %v1526, %v1529
        %v1548 = vsel %vm1542, %v1535, 920167782
        %v1549 = vsel %vm1541, %v1532, %v1548
        %v1550 = vsel %vm1540, %v1547, %v1549
        %v1551 = vsel %vm1539, %v1529, %v1532
        %v1552 = vsel %vm1542, %v1538, 1326507024
        %v1553 = vsel %vm1541, %v1535, %v1552
        %v1554 = vsel %vm1540, %v1551, %v1553
        %v1555 = vshll.u32 %v1515, 8
        %v1556 = vmul.u32.u64.compose %v1555, %v1554
        %v1557 = vextract.low.u32 %v1556
        %v1558 = vextract.high.u32 %v1556
        %v1559 = vmul.u32.u64.compose %v1555, %v1550
        %v1560 = vextract.low.u32 %v1559
        %v1561 = vextract.high.u32 %v1559
        %v1562 = vmul.u32 %v1555, %v1546
        %v1563 = vadd.s32 %v1558, %v1560
        %vm1564 = vc.u32 %v1558, %v1560
        %v1565 = vadd.s32 %v1561, 1
        %v1566 = vsel %vm1564, %v1565, %v1561
        %v1567 = vadd.s32 %v1562, %v1566
        %v1568 = vadd.s32 %v1567, 536870912
        %v1569 = vshrl.u32 %v1568, 30
        %v1570 = vshll.u32 %v1569, 30
        %v1571 = vsub.s32 %v1567, %v1570
        %vm1572 = vcmp.lt.s32.totalorder %v1571, 0
        %v1573 = vsub.s32 0, %v1571
        %v1574 = vsel %vm1572, %v1573, %v1571
        %v1575 = vclz %v1574
        %v1576 = vsub.s32 %v1575, 2
        %vm1577 = vcmp.gt.s32.totalorder 0, %v1576
        %v1578 = vsel %vm1577, 0, %v1576
        %v1579 = vsub.s32 32, %v1578
        %v1580 = vshll.u32 %v1571, %v1578
        %v1581 = vshrl.u32 %v1563, %v1579
        %v1582 = vor.u32 %v1580, %v1581
        %v1583 = vsub.s32 4294967266, %v1578
        %v1584 = vadd.s32 %v1583, 127
        %v1585 = vshll.u32 %v1584, 23
        %v1586 = vor.u32 4788187, %v1585
        %v1587 = vand.u32 2147483647, %v1586
        %v1589 = vcvt.s32.f32 %v1582
        %v1590 = vmul.f32 %v1589, %v1587
        %v1591 = vxor.u32 %v1590, 2147483648
        %v1592 = vsel %vm1509, %v1591, %v1590
        %v1593 = vsub.s32 4, %v1569
        %v1594 = vsel %vm1509, %v1593, %v1569
        %v1595 = vsel %vm1508, %v1370, %v1592
        %v1596 = vsel %vm1508, 0, %v1594
        %v1597 = vcosq.f32.pop %v1595
        %v1598 = vsinq.f32.pop %v1595
        %vm1599 = vweird.f32 %v1370
        %v1600 = vadd.s32 %v1596, 3
        %v1601 = vand.u32 %v1600, 3
        %vm1602 = vcmp.lt.s32.totalorder %v1601, 2
        %vm1603 = vcmp.eq.s32.totalorder %v1601, 0
        %v1604 = vxor.u32 %v1598, 2147483648
        %v1605 = vsel %vm1603, %v1597, %v1604
        %vm1606 = vcmp.eq.s32.totalorder %v1601, 2
        %v1607 = vxor.u32 %v1597, 2147483648
        %v1608 = vsel %vm1606, %v1607, %v1598
        %v1609 = vsel %vm1602, %v1605, %v1608
        %v1610 = vsel %vm1599, nan, %v1609
        %v1611 = vand.u32 2147483647, %v1375
        %vm1612 = vcmp.le.f32.partialorder %v1611, 0.7853982
        %vm1613 = vcmp.lt.s32.totalorder %v1375, 0
        %v1614 = vand.u32 %v1375, 2139095040
        %v1615 = vshrl.u32 %v1614, 23
        %v1616 = vsub.s32 %v1615, 127
        %v1617 = vand.u32 2147483647, %v1375
        %v1618 = vand.u32 %v1617, 8388607
        %v1619 = vor.u32 %v1618, 8388608
        %v1620 = vsub.s32 0, %v1619
        %v1621 = vadd.s32 %v1616, 1
        %vm1622 = vcmp.gt.s32.totalorder %v1621, 0
        %v1623 = vsel %vm1622, %v1621, 0
        %v1624 = vshrl.u32 %v1623, 5
        %v1625 = vand.u32 %v1623, 31
        %v1626 = vsub.s32 32, %v1625
        %v1627 = vshrl.u32 683565275, %v1626
        %v1628 = vshll.u32 683565275, %v1625
        %v1629 = vshrl.u32 2475754826, %v1626
        %v1630 = vor.u32 %v1628, %v1629
        %v1631 = vshll.u32 2475754826, %v1625
        %v1632 = vshrl.u32 2131351028, %v1626
        %v1633 = vor.u32 %v1631, %v1632
        %v1634 = vshll.u32 2131351028, %v1625
        %v1635 = vshrl.u32 2102212464, %v1626
        %v1636 = vor.u32 %v1634, %v1635
        %v1637 = vshll.u32 2102212464, %v1625
        %v1638 = vshrl.u32 920167782, %v1626
        %v1639 = vor.u32 %v1637, %v1638
        %v1640 = vshll.u32 920167782, %v1625
        %v1641 = vshrl.u32 1326507024, %v1626
        %v1642 = vor.u32 %v1640, %v1641
        %vm1643 = vcmp.lt.s32.totalorder %v1624, 1
        %vm1644 = vcmp.lt.s32.totalorder %v1624, 2
        %vm1645 = vcmp.lt.s32.totalorder %v1624, 3
        %vm1646 = vcmp.lt.s32.totalorder %v1624, 4
        %v1647 = vsel %vm1643, %v1627, %v1630
        %v1648 = vsel %vm1646, %v1636, 2102212464
        %v1649 = vsel %vm1645, %v1633, %v1648
        %v1650 = vsel %vm1644, %v1647, %v1649
        %v1651 = vsel %vm1643, %v1630, %v1633
        %v1652 = vsel %vm1646, %v1639, 920167782
        %v1653 = vsel %vm1645, %v1636, %v1652
        %v1654 = vsel %vm1644, %v1651, %v1653
        %v1655 = vsel %vm1643, %v1633, %v1636
        %v1656 = vsel %vm1646, %v1642, 1326507024
        %v1657 = vsel %vm1645, %v1639, %v1656
        %v1658 = vsel %vm1644, %v1655, %v1657
        %v1659 = vshll.u32 %v1619, 8
        %v1660 = vmul.u32.u64.compose %v1659, %v1658
        %v1661 = vextract.low.u32 %v1660
        %v1662 = vextract.high.u32 %v1660
        %v1663 = vmul.u32.u64.compose %v1659, %v1654
        %v1664 = vextract.low.u32 %v1663
        %v1665 = vextract.high.u32 %v1663
        %v1666 = vmul.u32 %v1659, %v1650
        %v1667 = vadd.s32 %v1662, %v1664
        %vm1668 = vc.u32 %v1662, %v1664
        %v1669 = vadd.s32 %v1665, 1
        %v1670 = vsel %vm1668, %v1669, %v1665
        %v1671 = vadd.s32 %v1666, %v1670
        %v1672 = vadd.s32 %v1671, 536870912
        %v1673 = vshrl.u32 %v1672, 30
        %v1674 = vshll.u32 %v1673, 30
        %v1675 = vsub.s32 %v1671, %v1674
        %vm1676 = vcmp.lt.s32.totalorder %v1675, 0
        %v1677 = vsub.s32 0, %v1675
        %v1678 = vsel %vm1676, %v1677, %v1675
        %v1679 = vclz %v1678
        %v1680 = vsub.s32 %v1679, 2
        %vm1681 = vcmp.gt.s32.totalorder 0, %v1680
        %v1682 = vsel %vm1681, 0, %v1680
        %v1683 = vsub.s32 32, %v1682
        %v1684 = vshll.u32 %v1675, %v1682
        %v1685 = vshrl.u32 %v1667, %v1683
        %v1686 = vor.u32 %v1684, %v1685
        %v1687 = vsub.s32 4294967266, %v1682
        %v1688 = vadd.s32 %v1687, 127
        %v1689 = vshll.u32 %v1688, 23
        %v1690 = vor.u32 4788187, %v1689
        %v1691 = vand.u32 2147483647, %v1690
        %v1693 = vcvt.s32.f32 %v1686
        %v1694 = vmul.f32 %v1693, %v1691
        %v1695 = vxor.u32 %v1694, 2147483648
        %v1696 = vsel %vm1613, %v1695, %v1694
        %v1697 = vsub.s32 4, %v1673
        %v1698 = vsel %vm1613, %v1697, %v1673
        %v1699 = vsel %vm1612, %v1375, %v1696
        %v1700 = vsel %vm1612, 0, %v1698
        %v1701 = vcosq.f32.pop %v1699
        %v1702 = vsinq.f32.pop %v1699
        %vm1703 = vweird.f32 %v1375
        %v1704 = vadd.s32 %v1700, 3
        %v1705 = vand.u32 %v1704, 3
        %vm1706 = vcmp.lt.s32.totalorder %v1705, 2
        %vm1707 = vcmp.eq.s32.totalorder %v1705, 0
        %v1708 = vxor.u32 %v1702, 2147483648
        %v1709 = vsel %vm1707, %v1701, %v1708
        %vm1710 = vcmp.eq.s32.totalorder %v1705, 2
        %v1711 = vxor.u32 %v1701, 2147483648
        %v1712 = vsel %vm1710, %v1711, %v1702
        %v1713 = vsel %vm1706, %v1709, %v1712
        %v1714 = vsel %vm1703, nan, %v1713
        %v1715 = vand.u32 2147483647, %v1380
        %vm1716 = vcmp.le.f32.partialorder %v1715, 0.7853982
        %vm1717 = vcmp.lt.s32.totalorder %v1380, 0
        %v1718 = vand.u32 %v1380, 2139095040
        %v1719 = vshrl.u32 %v1718, 23
        %v1720 = vsub.s32 %v1719, 127
        %v1721 = vand.u32 2147483647, %v1380
        %v1722 = vand.u32 %v1721, 8388607
        %v1723 = vor.u32 %v1722, 8388608
        %v1724 = vsub.s32 0, %v1723
        %v1725 = vadd.s32 %v1720, 1
        %vm1726 = vcmp.gt.s32.totalorder %v1725, 0
        %v1727 = vsel %vm1726, %v1725, 0
        %v1728 = vshrl.u32 %v1727, 5
        %v1729 = vand.u32 %v1727, 31
        %v1730 = vsub.s32 32, %v1729
        %v1731 = vshrl.u32 683565275, %v1730
        %v1732 = vshll.u32 683565275, %v1729
        %v1733 = vshrl.u32 2475754826, %v1730
        %v1734 = vor.u32 %v1732, %v1733
        %v1735 = vshll.u32 2475754826, %v1729
        %v1736 = vshrl.u32 2131351028, %v1730
        %v1737 = vor.u32 %v1735, %v1736
        %v1738 = vshll.u32 2131351028, %v1729
        %v1739 = vshrl.u32 2102212464, %v1730
        %v1740 = vor.u32 %v1738, %v1739
        %v1741 = vshll.u32 2102212464, %v1729
        %v1742 = vshrl.u32 920167782, %v1730
        %v1743 = vor.u32 %v1741, %v1742
        %v1744 = vshll.u32 920167782, %v1729
        %v1745 = vshrl.u32 1326507024, %v1730
        %v1746 = vor.u32 %v1744, %v1745
        %vm1747 = vcmp.lt.s32.totalorder %v1728, 1
        %vm1748 = vcmp.lt.s32.totalorder %v1728, 2
        %vm1749 = vcmp.lt.s32.totalorder %v1728, 3
        %vm1750 = vcmp.lt.s32.totalorder %v1728, 4
        %v1751 = vsel %vm1747, %v1731, %v1734
        %v1752 = vsel %vm1750, %v1740, 2102212464
        %v1753 = vsel %vm1749, %v1737, %v1752
        %v1754 = vsel %vm1748, %v1751, %v1753
        %v1755 = vsel %vm1747, %v1734, %v1737
        %v1756 = vsel %vm1750, %v1743, 920167782
        %v1757 = vsel %vm1749, %v1740, %v1756
        %v1758 = vsel %vm1748, %v1755, %v1757
        %v1759 = vsel %vm1747, %v1737, %v1740
        %v1760 = vsel %vm1750, %v1746, 1326507024
        %v1761 = vsel %vm1749, %v1743, %v1760
        %v1762 = vsel %vm1748, %v1759, %v1761
        %v1763 = vshll.u32 %v1723, 8
        %v1764 = vmul.u32.u64.compose %v1763, %v1762
        %v1765 = vextract.low.u32 %v1764
        %v1766 = vextract.high.u32 %v1764
        %v1767 = vmul.u32.u64.compose %v1763, %v1758
        %v1768 = vextract.low.u32 %v1767
        %v1769 = vextract.high.u32 %v1767
        %v1770 = vmul.u32 %v1763, %v1754
        %v1771 = vadd.s32 %v1766, %v1768
        %vm1772 = vc.u32 %v1766, %v1768
        %v1773 = vadd.s32 %v1769, 1
        %v1774 = vsel %vm1772, %v1773, %v1769
        %v1775 = vadd.s32 %v1770, %v1774
        %v1776 = vadd.s32 %v1775, 536870912
        %v1777 = vshrl.u32 %v1776, 30
        %v1778 = vshll.u32 %v1777, 30
        %v1779 = vsub.s32 %v1775, %v1778
        %vm1780 = vcmp.lt.s32.totalorder %v1779, 0
        %v1781 = vsub.s32 0, %v1779
        %v1782 = vsel %vm1780, %v1781, %v1779
        %v1783 = vclz %v1782
        %v1784 = vsub.s32 %v1783, 2
        %vm1785 = vcmp.gt.s32.totalorder 0, %v1784
        %v1786 = vsel %vm1785, 0, %v1784
        %v1787 = vsub.s32 32, %v1786
        %v1788 = vshll.u32 %v1779, %v1786
        %v1789 = vshrl.u32 %v1771, %v1787
        %v1790 = vor.u32 %v1788, %v1789
        %v1791 = vsub.s32 4294967266, %v1786
        %v1792 = vadd.s32 %v1791, 127
        %v1793 = vshll.u32 %v1792, 23
        %v1794 = vor.u32 4788187, %v1793
        %v1795 = vand.u32 2147483647, %v1794
        %v1797 = vcvt.s32.f32 %v1790
        %v1798 = vmul.f32 %v1797, %v1795
        %v1799 = vxor.u32 %v1798, 2147483648
        %v1800 = vsel %vm1717, %v1799, %v1798
        %v1801 = vsub.s32 4, %v1777
        %v1802 = vsel %vm1717, %v1801, %v1777
        %v1803 = vsel %vm1716, %v1380, %v1800
        %v1804 = vsel %vm1716, 0, %v1802
        %v1805 = vcosq.f32.pop %v1803
        %v1806 = vsinq.f32.pop %v1803
        %vm1807 = vweird.f32 %v1380
        %v1808 = vadd.s32 %v1804, 3
        %v1809 = vand.u32 %v1808, 3
        %vm1810 = vcmp.lt.s32.totalorder %v1809, 2
        %vm1811 = vcmp.eq.s32.totalorder %v1809, 0
        %v1812 = vxor.u32 %v1806, 2147483648
        %v1813 = vsel %vm1811, %v1805, %v1812
        %vm1814 = vcmp.eq.s32.totalorder %v1809, 2
        %v1815 = vxor.u32 %v1805, 2147483648
        %v1816 = vsel %vm1814, %v1815, %v1806
        %v1817 = vsel %vm1810, %v1813, %v1816
        %v1818 = vsel %vm1807, nan, %v1817
        %v1819 = vand.u32 2147483647, %v1385
        %vm1820 = vcmp.le.f32.partialorder %v1819, 0.7853982
        %vm1821 = vcmp.lt.s32.totalorder %v1385, 0
        %v1822 = vand.u32 %v1385, 2139095040
        %v1823 = vshrl.u32 %v1822, 23
        %v1824 = vsub.s32 %v1823, 127
        %v1825 = vand.u32 2147483647, %v1385
        %v1826 = vand.u32 %v1825, 8388607
        %v1827 = vor.u32 %v1826, 8388608
        %v1828 = vsub.s32 0, %v1827
        %v1829 = vadd.s32 %v1824, 1
        %vm1830 = vcmp.gt.s32.totalorder %v1829, 0
        %v1831 = vsel %vm1830, %v1829, 0
        %v1832 = vshrl.u32 %v1831, 5
        %v1833 = vand.u32 %v1831, 31
        %v1834 = vsub.s32 32, %v1833
        %v1835 = vshrl.u32 683565275, %v1834
        %v1836 = vshll.u32 683565275, %v1833
        %v1837 = vshrl.u32 2475754826, %v1834
        %v1838 = vor.u32 %v1836, %v1837
        %v1839 = vshll.u32 2475754826, %v1833
        %v1840 = vshrl.u32 2131351028, %v1834
        %v1841 = vor.u32 %v1839, %v1840
        %v1842 = vshll.u32 2131351028, %v1833
        %v1843 = vshrl.u32 2102212464, %v1834
        %v1844 = vor.u32 %v1842, %v1843
        %v1845 = vshll.u32 2102212464, %v1833
        %v1846 = vshrl.u32 920167782, %v1834
        %v1847 = vor.u32 %v1845, %v1846
        %v1848 = vshll.u32 920167782, %v1833
        %v1849 = vshrl.u32 1326507024, %v1834
        %v1850 = vor.u32 %v1848, %v1849
        %vm1851 = vcmp.lt.s32.totalorder %v1832, 1
        %vm1852 = vcmp.lt.s32.totalorder %v1832, 2
        %vm1853 = vcmp.lt.s32.totalorder %v1832, 3
        %vm1854 = vcmp.lt.s32.totalorder %v1832, 4
        %v1855 = vsel %vm1851, %v1835, %v1838
        %v1856 = vsel %vm1854, %v1844, 2102212464
        %v1857 = vsel %vm1853, %v1841, %v1856
        %v1858 = vsel %vm1852, %v1855, %v1857
        %v1859 = vsel %vm1851, %v1838, %v1841
        %v1860 = vsel %vm1854, %v1847, 920167782
        %v1861 = vsel %vm1853, %v1844, %v1860
        %v1862 = vsel %vm1852, %v1859, %v1861
        %v1863 = vsel %vm1851, %v1841, %v1844
        %v1864 = vsel %vm1854, %v1850, 1326507024
        %v1865 = vsel %vm1853, %v1847, %v1864
        %v1866 = vsel %vm1852, %v1863, %v1865
        %v1867 = vshll.u32 %v1827, 8
        %v1868 = vmul.u32.u64.compose %v1867, %v1866
        %v1869 = vextract.low.u32 %v1868
        %v1870 = vextract.high.u32 %v1868
        %v1871 = vmul.u32.u64.compose %v1867, %v1862
        %v1872 = vextract.low.u32 %v1871
        %v1873 = vextract.high.u32 %v1871
        %v1874 = vmul.u32 %v1867, %v1858
        %v1875 = vadd.s32 %v1870, %v1872
        %vm1876 = vc.u32 %v1870, %v1872
        %v1877 = vadd.s32 %v1873, 1
        %v1878 = vsel %vm1876, %v1877, %v1873
        %v1879 = vadd.s32 %v1874, %v1878
        %v1880 = vadd.s32 %v1879, 536870912
        %v1881 = vshrl.u32 %v1880, 30
        %v1882 = vshll.u32 %v1881, 30
        %v1883 = vsub.s32 %v1879, %v1882
        %vm1884 = vcmp.lt.s32.totalorder %v1883, 0
        %v1885 = vsub.s32 0, %v1883
        %v1886 = vsel %vm1884, %v1885, %v1883
        %v1887 = vclz %v1886
        %v1888 = vsub.s32 %v1887, 2
        %vm1889 = vcmp.gt.s32.totalorder 0, %v1888
        %v1890 = vsel %vm1889, 0, %v1888
        %v1891 = vsub.s32 32, %v1890
        %v1892 = vshll.u32 %v1883, %v1890
        %v1893 = vshrl.u32 %v1875, %v1891
        %v1894 = vor.u32 %v1892, %v1893
        %v1895 = vsub.s32 4294967266, %v1890
        %v1896 = vadd.s32 %v1895, 127
        %v1897 = vshll.u32 %v1896, 23
        %v1898 = vor.u32 4788187, %v1897
        %v1899 = vand.u32 2147483647, %v1898
        %v1901 = vcvt.s32.f32 %v1894
        %v1902 = vmul.f32 %v1901, %v1899
        %v1903 = vxor.u32 %v1902, 2147483648
        %v1904 = vsel %vm1821, %v1903, %v1902
        %v1905 = vsub.s32 4, %v1881
        %v1906 = vsel %vm1821, %v1905, %v1881
        %v1907 = vsel %vm1820, %v1385, %v1904
        %v1908 = vsel %vm1820, 0, %v1906
        %v1909 = vcosq.f32.pop %v1907
        %v1910 = vsinq.f32.pop %v1907
        %vm1911 = vweird.f32 %v1385
        %v1912 = vadd.s32 %v1908, 3
        %v1913 = vand.u32 %v1912, 3
        %vm1914 = vcmp.lt.s32.totalorder %v1913, 2
        %vm1915 = vcmp.eq.s32.totalorder %v1913, 0
        %v1916 = vxor.u32 %v1910, 2147483648
        %v1917 = vsel %vm1915, %v1909, %v1916
        %vm1918 = vcmp.eq.s32.totalorder %v1913, 2
        %v1919 = vxor.u32 %v1909, 2147483648
        %v1920 = vsel %vm1918, %v1919, %v1910
        %v1921 = vsel %vm1914, %v1917, %v1920
        %v1922 = vsel %vm1911, nan, %v1921
        %v1923 = vand.u32 2147483647, %v1390
        %vm1924 = vcmp.le.f32.partialorder %v1923, 0.7853982
        %vm1925 = vcmp.lt.s32.totalorder %v1390, 0
        %v1926 = vand.u32 %v1390, 2139095040
        %v1927 = vshrl.u32 %v1926, 23
        %v1928 = vsub.s32 %v1927, 127
        %v1929 = vand.u32 2147483647, %v1390
        %v1930 = vand.u32 %v1929, 8388607
        %v1931 = vor.u32 %v1930, 8388608
        %v1932 = vsub.s32 0, %v1931
        %v1933 = vadd.s32 %v1928, 1
        %vm1934 = vcmp.gt.s32.totalorder %v1933, 0
        %v1935 = vsel %vm1934, %v1933, 0
        %v1936 = vshrl.u32 %v1935, 5
        %v1937 = vand.u32 %v1935, 31
        %v1938 = vsub.s32 32, %v1937
        %v1939 = vshrl.u32 683565275, %v1938
        %v1940 = vshll.u32 683565275, %v1937
        %v1941 = vshrl.u32 2475754826, %v1938
        %v1942 = vor.u32 %v1940, %v1941
        %v1943 = vshll.u32 2475754826, %v1937
        %v1944 = vshrl.u32 2131351028, %v1938
        %v1945 = vor.u32 %v1943, %v1944
        %v1946 = vshll.u32 2131351028, %v1937
        %v1947 = vshrl.u32 2102212464, %v1938
        %v1948 = vor.u32 %v1946, %v1947
        %v1949 = vshll.u32 2102212464, %v1937
        %v1950 = vshrl.u32 920167782, %v1938
        %v1951 = vor.u32 %v1949, %v1950
        %v1952 = vshll.u32 920167782, %v1937
        %v1953 = vshrl.u32 1326507024, %v1938
        %v1954 = vor.u32 %v1952, %v1953
        %vm1955 = vcmp.lt.s32.totalorder %v1936, 1
        %vm1956 = vcmp.lt.s32.totalorder %v1936, 2
        %vm1957 = vcmp.lt.s32.totalorder %v1936, 3
        %vm1958 = vcmp.lt.s32.totalorder %v1936, 4
        %v1959 = vsel %vm1955, %v1939, %v1942
        %v1960 = vsel %vm1958, %v1948, 2102212464
        %v1961 = vsel %vm1957, %v1945, %v1960
        %v1962 = vsel %vm1956, %v1959, %v1961
        %v1963 = vsel %vm1955, %v1942, %v1945
        %v1964 = vsel %vm1958, %v1951, 920167782
        %v1965 = vsel %vm1957, %v1948, %v1964
        %v1966 = vsel %vm1956, %v1963, %v1965
        %v1967 = vsel %vm1955, %v1945, %v1948
        %v1968 = vsel %vm1958, %v1954, 1326507024
        %v1969 = vsel %vm1957, %v1951, %v1968
        %v1970 = vsel %vm1956, %v1967, %v1969
        %v1971 = vshll.u32 %v1931, 8
        %v1972 = vmul.u32.u64.compose %v1971, %v1970
        %v1973 = vextract.low.u32 %v1972
        %v1974 = vextract.high.u32 %v1972
        %v1975 = vmul.u32.u64.compose %v1971, %v1966
        %v1976 = vextract.low.u32 %v1975
        %v1977 = vextract.high.u32 %v1975
        %v1978 = vmul.u32 %v1971, %v1962
        %v1979 = vadd.s32 %v1974, %v1976
        %vm1980 = vc.u32 %v1974, %v1976
        %v1981 = vadd.s32 %v1977, 1
        %v1982 = vsel %vm1980, %v1981, %v1977
        %v1983 = vadd.s32 %v1978, %v1982
        %v1984 = vadd.s32 %v1983, 536870912
        %v1985 = vshrl.u32 %v1984, 30
        %v1986 = vshll.u32 %v1985, 30
        %v1987 = vsub.s32 %v1983, %v1986
        %vm1988 = vcmp.lt.s32.totalorder %v1987, 0
        %v1989 = vsub.s32 0, %v1987
        %v1990 = vsel %vm1988, %v1989, %v1987
        %v1991 = vclz %v1990
        %v1992 = vsub.s32 %v1991, 2
        %vm1993 = vcmp.gt.s32.totalorder 0, %v1992
        %v1994 = vsel %vm1993, 0, %v1992
        %v1995 = vsub.s32 32, %v1994
        %v1996 = vshll.u32 %v1987, %v1994
        %v1997 = vshrl.u32 %v1979, %v1995
        %v1998 = vor.u32 %v1996, %v1997
        %v1999 = vsub.s32 4294967266, %v1994
        %v2000 = vadd.s32 %v1999, 127
        %v2001 = vshll.u32 %v2000, 23
        %v2002 = vor.u32 4788187, %v2001
        %v2003 = vand.u32 2147483647, %v2002
        %v2005 = vcvt.s32.f32 %v1998
        %v2006 = vmul.f32 %v2005, %v2003
        %v2007 = vxor.u32 %v2006, 2147483648
        %v2008 = vsel %vm1925, %v2007, %v2006
        %v2009 = vsub.s32 4, %v1985
        %v2010 = vsel %vm1925, %v2009, %v1985
        %v2011 = vsel %vm1924, %v1390, %v2008
        %v2012 = vsel %vm1924, 0, %v2010
        %v2013 = vcosq.f32.pop %v2011
        %v2014 = vsinq.f32.pop %v2011
        %vm2015 = vweird.f32 %v1390
        %v2016 = vadd.s32 %v2012, 3
        %v2017 = vand.u32 %v2016, 3
        %vm2018 = vcmp.lt.s32.totalorder %v2017, 2
        %vm2019 = vcmp.eq.s32.totalorder %v2017, 0
        %v2020 = vxor.u32 %v2014, 2147483648
        %v2021 = vsel %vm2019, %v2013, %v2020
        %vm2022 = vcmp.eq.s32.totalorder %v2017, 2
        %v2023 = vxor.u32 %v2013, 2147483648
        %v2024 = vsel %vm2022, %v2023, %v2014
        %v2025 = vsel %vm2018, %v2021, %v2024
        %v2026 = vsel %vm2015, nan, %v2025
        %v2027 = vand.u32 2147483647, %v1395
        %vm2028 = vcmp.le.f32.partialorder %v2027, 0.7853982
        %vm2029 = vcmp.lt.s32.totalorder %v1395, 0
        %v2030 = vand.u32 %v1395, 2139095040
        %v2031 = vshrl.u32 %v2030, 23
        %v2032 = vsub.s32 %v2031, 127
        %v2033 = vand.u32 2147483647, %v1395
        %v2034 = vand.u32 %v2033, 8388607
        %v2035 = vor.u32 %v2034, 8388608
        %v2036 = vsub.s32 0, %v2035
        %v2037 = vadd.s32 %v2032, 1
        %vm2038 = vcmp.gt.s32.totalorder %v2037, 0
        %v2039 = vsel %vm2038, %v2037, 0
        %v2040 = vshrl.u32 %v2039, 5
        %v2041 = vand.u32 %v2039, 31
        %v2042 = vsub.s32 32, %v2041
        %v2043 = vshrl.u32 683565275, %v2042
        %v2044 = vshll.u32 683565275, %v2041
        %v2045 = vshrl.u32 2475754826, %v2042
        %v2046 = vor.u32 %v2044, %v2045
        %v2047 = vshll.u32 2475754826, %v2041
        %v2048 = vshrl.u32 2131351028, %v2042
        %v2049 = vor.u32 %v2047, %v2048
        %v2050 = vshll.u32 2131351028, %v2041
        %v2051 = vshrl.u32 2102212464, %v2042
        %v2052 = vor.u32 %v2050, %v2051
        %v2053 = vshll.u32 2102212464, %v2041
        %v2054 = vshrl.u32 920167782, %v2042
        %v2055 = vor.u32 %v2053, %v2054
        %v2056 = vshll.u32 920167782, %v2041
        %v2057 = vshrl.u32 1326507024, %v2042
        %v2058 = vor.u32 %v2056, %v2057
        %vm2059 = vcmp.lt.s32.totalorder %v2040, 1
        %vm2060 = vcmp.lt.s32.totalorder %v2040, 2
        %vm2061 = vcmp.lt.s32.totalorder %v2040, 3
        %vm2062 = vcmp.lt.s32.totalorder %v2040, 4
        %v2063 = vsel %vm2059, %v2043, %v2046
        %v2064 = vsel %vm2062, %v2052, 2102212464
        %v2065 = vsel %vm2061, %v2049, %v2064
        %v2066 = vsel %vm2060, %v2063, %v2065
        %v2067 = vsel %vm2059, %v2046, %v2049
        %v2068 = vsel %vm2062, %v2055, 920167782
        %v2069 = vsel %vm2061, %v2052, %v2068
        %v2070 = vsel %vm2060, %v2067, %v2069
        %v2071 = vsel %vm2059, %v2049, %v2052
        %v2072 = vsel %vm2062, %v2058, 1326507024
        %v2073 = vsel %vm2061, %v2055, %v2072
        %v2074 = vsel %vm2060, %v2071, %v2073
        %v2075 = vshll.u32 %v2035, 8
        %v2076 = vmul.u32.u64.compose %v2075, %v2074
        %v2077 = vextract.low.u32 %v2076
        %v2078 = vextract.high.u32 %v2076
        %v2079 = vmul.u32.u64.compose %v2075, %v2070
        %v2080 = vextract.low.u32 %v2079
        %v2081 = vextract.high.u32 %v2079
        %v2082 = vmul.u32 %v2075, %v2066
        %v2083 = vadd.s32 %v2078, %v2080
        %vm2084 = vc.u32 %v2078, %v2080
        %v2085 = vadd.s32 %v2081, 1
        %v2086 = vsel %vm2084, %v2085, %v2081
        %v2087 = vadd.s32 %v2082, %v2086
        %v2088 = vadd.s32 %v2087, 536870912
        %v2089 = vshrl.u32 %v2088, 30
        %v2090 = vshll.u32 %v2089, 30
        %v2091 = vsub.s32 %v2087, %v2090
        %vm2092 = vcmp.lt.s32.totalorder %v2091, 0
        %v2093 = vsub.s32 0, %v2091
        %v2094 = vsel %vm2092, %v2093, %v2091
        %v2095 = vclz %v2094
        %v2096 = vsub.s32 %v2095, 2
        %vm2097 = vcmp.gt.s32.totalorder 0, %v2096
        %v2098 = vsel %vm2097, 0, %v2096
        %v2099 = vsub.s32 32, %v2098
        %v2100 = vshll.u32 %v2091, %v2098
        %v2101 = vshrl.u32 %v2083, %v2099
        %v2102 = vor.u32 %v2100, %v2101
        %v2103 = vsub.s32 4294967266, %v2098
        %v2104 = vadd.s32 %v2103, 127
        %v2105 = vshll.u32 %v2104, 23
        %v2106 = vor.u32 4788187, %v2105
        %v2107 = vand.u32 2147483647, %v2106
        %v2109 = vcvt.s32.f32 %v2102
        %v2110 = vmul.f32 %v2109, %v2107
        %v2111 = vxor.u32 %v2110, 2147483648
        %v2112 = vsel %vm2029, %v2111, %v2110
        %v2113 = vsub.s32 4, %v2089
        %v2114 = vsel %vm2029, %v2113, %v2089
        %v2115 = vsel %vm2028, %v1395, %v2112
        %v2116 = vsel %vm2028, 0, %v2114
        %v2117 = vcosq.f32.pop %v2115
        %v2118 = vsinq.f32.pop %v2115
        %vm2119 = vweird.f32 %v1395
        %v2120 = vadd.s32 %v2116, 3
        %v2121 = vand.u32 %v2120, 3
        %vm2122 = vcmp.lt.s32.totalorder %v2121, 2
        %vm2123 = vcmp.eq.s32.totalorder %v2121, 0
        %v2124 = vxor.u32 %v2118, 2147483648
        %v2125 = vsel %vm2123, %v2117, %v2124
        %vm2126 = vcmp.eq.s32.totalorder %v2121, 2
        %v2127 = vxor.u32 %v2117, 2147483648
        %v2128 = vsel %vm2126, %v2127, %v2118
        %v2129 = vsel %vm2122, %v2125, %v2128
        %v2130 = vsel %vm2119, nan, %v2129
        %v2131 = vand.u32 2147483647, %v1400
        %vm2132 = vcmp.le.f32.partialorder %v2131, 0.7853982
        %vm2133 = vcmp.lt.s32.totalorder %v1400, 0
        %v2134 = vand.u32 %v1400, 2139095040
        %v2135 = vshrl.u32 %v2134, 23
        %v2136 = vsub.s32 %v2135, 127
        %v2137 = vand.u32 2147483647, %v1400
        %v2138 = vand.u32 %v2137, 8388607
        %v2139 = vor.u32 %v2138, 8388608
        %v2140 = vsub.s32 0, %v2139
        %v2141 = vadd.s32 %v2136, 1
        %vm2142 = vcmp.gt.s32.totalorder %v2141, 0
        %v2143 = vsel %vm2142, %v2141, 0
        %v2144 = vshrl.u32 %v2143, 5
        %v2145 = vand.u32 %v2143, 31
        %v2146 = vsub.s32 32, %v2145
        %v2147 = vshrl.u32 683565275, %v2146
        %v2148 = vshll.u32 683565275, %v2145
        %v2149 = vshrl.u32 2475754826, %v2146
        %v2150 = vor.u32 %v2148, %v2149
        %v2151 = vshll.u32 2475754826, %v2145
        %v2152 = vshrl.u32 2131351028, %v2146
        %v2153 = vor.u32 %v2151, %v2152
        %v2154 = vshll.u32 2131351028, %v2145
        %v2155 = vshrl.u32 2102212464, %v2146
        %v2156 = vor.u32 %v2154, %v2155
        %v2157 = vshll.u32 2102212464, %v2145
        %v2158 = vshrl.u32 920167782, %v2146
        %v2159 = vor.u32 %v2157, %v2158
        %v2160 = vshll.u32 920167782, %v2145
        %v2161 = vshrl.u32 1326507024, %v2146
        %v2162 = vor.u32 %v2160, %v2161
        %vm2163 = vcmp.lt.s32.totalorder %v2144, 1
        %vm2164 = vcmp.lt.s32.totalorder %v2144, 2
        %vm2165 = vcmp.lt.s32.totalorder %v2144, 3
        %vm2166 = vcmp.lt.s32.totalorder %v2144, 4
        %v2167 = vsel %vm2163, %v2147, %v2150
        %v2168 = vsel %vm2166, %v2156, 2102212464
        %v2169 = vsel %vm2165, %v2153, %v2168
        %v2170 = vsel %vm2164, %v2167, %v2169
        %v2171 = vsel %vm2163, %v2150, %v2153
        %v2172 = vsel %vm2166, %v2159, 920167782
        %v2173 = vsel %vm2165, %v2156, %v2172
        %v2174 = vsel %vm2164, %v2171, %v2173
        %v2175 = vsel %vm2163, %v2153, %v2156
        %v2176 = vsel %vm2166, %v2162, 1326507024
        %v2177 = vsel %vm2165, %v2159, %v2176
        %v2178 = vsel %vm2164, %v2175, %v2177
        %v2179 = vshll.u32 %v2139, 8
        %v2180 = vmul.u32.u64.compose %v2179, %v2178
        %v2181 = vextract.low.u32 %v2180
        %v2182 = vextract.high.u32 %v2180
        %v2183 = vmul.u32.u64.compose %v2179, %v2174
        %v2184 = vextract.low.u32 %v2183
        %v2185 = vextract.high.u32 %v2183
        %v2186 = vmul.u32 %v2179, %v2170
        %v2187 = vadd.s32 %v2182, %v2184
        %vm2188 = vc.u32 %v2182, %v2184
        %v2189 = vadd.s32 %v2185, 1
        %v2190 = vsel %vm2188, %v2189, %v2185
        %v2191 = vadd.s32 %v2186, %v2190
        %v2192 = vadd.s32 %v2191, 536870912
        %v2193 = vshrl.u32 %v2192, 30
        %v2194 = vshll.u32 %v2193, 30
        %v2195 = vsub.s32 %v2191, %v2194
        %vm2196 = vcmp.lt.s32.totalorder %v2195, 0
        %v2197 = vsub.s32 0, %v2195
        %v2198 = vsel %vm2196, %v2197, %v2195
        %v2199 = vclz %v2198
        %v2200 = vsub.s32 %v2199, 2
        %vm2201 = vcmp.gt.s32.totalorder 0, %v2200
        %v2202 = vsel %vm2201, 0, %v2200
        %v2203 = vsub.s32 32, %v2202
        %v2204 = vshll.u32 %v2195, %v2202
        %v2205 = vshrl.u32 %v2187, %v2203
        %v2206 = vor.u32 %v2204, %v2205
        %v2207 = vsub.s32 4294967266, %v2202
        %v2208 = vadd.s32 %v2207, 127
        %v2209 = vshll.u32 %v2208, 23
        %v2210 = vor.u32 4788187, %v2209
        %v2211 = vand.u32 2147483647, %v2210
        %v2213 = vcvt.s32.f32 %v2206
        %v2214 = vmul.f32 %v2213, %v2211
        %v2215 = vxor.u32 %v2214, 2147483648
        %v2216 = vsel %vm2133, %v2215, %v2214
        %v2217 = vsub.s32 4, %v2193
        %v2218 = vsel %vm2133, %v2217, %v2193
        %v2219 = vsel %vm2132, %v1400, %v2216
        %v2220 = vsel %vm2132, 0, %v2218
        %v2221 = vcosq.f32.pop %v2219
        %v2222 = vsinq.f32.pop %v2219
        %vm2223 = vweird.f32 %v1400
        %v2224 = vadd.s32 %v2220, 3
        %v2225 = vand.u32 %v2224, 3
        %vm2226 = vcmp.lt.s32.totalorder %v2225, 2
        %vm2227 = vcmp.eq.s32.totalorder %v2225, 0
        %v2228 = vxor.u32 %v2222, 2147483648
        %v2229 = vsel %vm2227, %v2221, %v2228
        %vm2230 = vcmp.eq.s32.totalorder %v2225, 2
        %v2231 = vxor.u32 %v2221, 2147483648
        %v2232 = vsel %vm2230, %v2231, %v2222
        %v2233 = vsel %vm2226, %v2229, %v2232
        %v2234 = vsel %vm2223, nan, %v2233
        %s2235 = scalar_lea.vmem %s2, 64
        %v2236 = vld [vmem:[%s2235] sm:$0xff]
        %v2237 = vld [vmem:[%s2235 + $0x8] sm:$0xff]
        %v2238 = vld [vmem:[%s2235 + $0x10] sm:$0xff]
        %v2239 = vld [vmem:[%s2235 + $0x18] sm:$0xff]
        %v2240 = vld [vmem:[%s2235 + $0x20] sm:$0xff]
        %v2241 = vld [vmem:[%s2235 + $0x28] sm:$0xff]
        %v2242 = vld [vmem:[%s2235 + $0x30] sm:$0xff]
        %v2243 = vld [vmem:[%s2235 + $0x38] sm:$0xff]
        %s2244 = scalar_lea.vmem %s3, 64
        %v2245 = vld [vmem:[%s2244] sm:$0xff]
        %v2246 = vld [vmem:[%s2244 + $0x8] sm:$0xff]
        %v2247 = vld [vmem:[%s2244 + $0x10] sm:$0xff]
        %v2248 = vld [vmem:[%s2244 + $0x18] sm:$0xff]
        %v2249 = vld [vmem:[%s2244 + $0x20] sm:$0xff]
        %v2250 = vld [vmem:[%s2244 + $0x28] sm:$0xff]
        %v2251 = vld [vmem:[%s2244 + $0x30] sm:$0xff]
        %v2252 = vld [vmem:[%s2244 + $0x38] sm:$0xff]
        %2254 = vset.pattern.permute.xlu0 0
        %2255 = vperm.xlu0 %2254, %v2245
        %v2256 = vpop.permute.xlu0 %2255
        %2259 = vset.pattern.permute.xlu0 0
        %2260 = vperm.xlu0 %2259, %v2246
        %v2261 = vpop.permute.xlu0 %2260
        %2264 = vset.pattern.permute.xlu0 0
        %2265 = vperm.xlu0 %2264, %v2247
        %v2266 = vpop.permute.xlu0 %2265
        %2269 = vset.pattern.permute.xlu0 0
        %2270 = vperm.xlu0 %2269, %v2248
        %v2271 = vpop.permute.xlu0 %2270
        %2274 = vset.pattern.permute.xlu0 0
        %2275 = vperm.xlu0 %2274, %v2249
        %v2276 = vpop.permute.xlu0 %2275
        %2279 = vset.pattern.permute.xlu0 0
        %2280 = vperm.xlu0 %2279, %v2250
        %v2281 = vpop.permute.xlu0 %2280
        %2284 = vset.pattern.permute.xlu0 0
        %2285 = vperm.xlu0 %2284, %v2251
        %v2286 = vpop.permute.xlu0 %2285
        %2289 = vset.pattern.permute.xlu0 0
        %2290 = vperm.xlu0 %2289, %v2252
        %v2291 = vpop.permute.xlu0 %2290
        %v2294 = vsel %vm1273, %v2236, 0
        %v2297 = vsel %vm1273, %v2237, 0
        %v2300 = vsel %vm1273, %v2238, 0
        %v2303 = vsel %vm1273, %v2239, 0
        %v2306 = vsel %vm1273, %v2240, 0
        %v2309 = vsel %vm1273, %v2241, 0
        %v2312 = vsel %vm1273, %v2242, 0
        %v2315 = vsel %vm1273, %v2243, 0
        %2317 = vmatprep.subr.mxu0 0.0
        %2318 = vmatpush1.msra.mxu0 %v1506
        %2319 = vmatprep.subr.mxu0 0.0
        %2320 = vmatpush1.msra.mxu0 %v1610
        %2321 = vmatprep.subr.mxu0 0.0
        %2322 = vmatpush1.msra.mxu0 %v1714
        %2323 = vmatprep.subr.mxu0 0.0
        %2324 = vmatpush1.msra.mxu0 %v1818
        %2325 = vmatprep.subr.mxu0 0.0
        %2326 = vmatpush1.msra.mxu0 %v1922
        %2327 = vmatprep.subr.mxu0 0.0
        %2328 = vmatpush1.msra.mxu0 %v2026
        %2329 = vmatprep.subr.mxu0 0.0
        %2330 = vmatpush1.msra.mxu0 %v2130
        %2331 = vmatprep.subr.mxu0 0.0
        %2332 = vmatpush1.msra.mxu0 %v2234
        %2333 = vmatprep.subr.mxu0 0.0
        %2334 = vmatpush1.msra.mxu0 0.0
        %2335 = vmatprep.subr.mxu0 0.0
        %2336 = vmatpush1.msra.mxu0 0.0
        %2337 = vmatprep.subr.mxu0 0.0
        %2338 = vmatpush1.msra.mxu0 0.0
        %2339 = vmatprep.subr.mxu0 0.0
        %2340 = vmatpush1.msra.mxu0 0.0
        %2341 = vmatprep.subr.mxu0 0.0
        %2342 = vmatpush1.msra.mxu0 0.0
        %2343 = vmatprep.subr.mxu0 0.0
        %2344 = vmatpush1.msra.mxu0 0.0
        %2345 = vmatprep.subr.mxu0 0.0
        %2346 = vmatpush1.msra.mxu0 0.0
        %2347 = vmatprep.subr.mxu0 0.0
        %2348 = vmatpush1.msra.mxu0 0.0
        %2349 = vmatprep.subr.mxu0 0.0
        %2350 = vmatpush1.msra.mxu0 0.0
        %2351 = vmatprep.subr.mxu0 0.0
        %2352 = vmatpush1.msra.mxu0 0.0
        %2353 = vmatprep.subr.mxu0 0.0
        %2354 = vmatpush1.msra.mxu0 0.0
        %2355 = vmatprep.subr.mxu0 0.0
        %2356 = vmatpush1.msra.mxu0 0.0
        %2357 = vmatprep.subr.mxu0 0.0
        %2358 = vmatpush1.msra.mxu0 0.0
        %2359 = vmatprep.subr.mxu0 0.0
        %2360 = vmatpush1.msra.mxu0 0.0
        %2361 = vmatprep.subr.mxu0 0.0
        %2362 = vmatpush1.msra.mxu0 0.0
        %2363 = vmatprep.subr.mxu0 0.0
        %2364 = vmatpush1.msra.mxu0 0.0
        %2365 = vmatprep.subr.mxu0 0.0
        %2366 = vmatpush1.msra.mxu0 0.0
        %2367 = vmatprep.subr.mxu0 0.0
        %2368 = vmatpush1.msra.mxu0 0.0
        %2369 = vmatprep.subr.mxu0 0.0
        %2370 = vmatpush1.msra.mxu0 0.0
        %2371 = vmatprep.subr.mxu0 0.0
        %2372 = vmatpush1.msra.mxu0 0.0
        %2373 = vmatprep.subr.mxu0 0.0
        %2374 = vmatpush1.msra.mxu0 0.0
        %2375 = vmatprep.subr.mxu0 0.0
        %2376 = vmatpush1.msra.mxu0 0.0
        %2377 = vmatprep.subr.mxu0 0.0
        %2378 = vmatpush1.msra.mxu0 0.0
        %2379 = vmatprep.subr.mxu0 0.0
        %2380 = vmatpush1.msra.mxu0 0.0
        %2381 = vmatprep.mubr.f32.mxu0 0.0
        %2382 = vmatmul.mubr.f32.gmra.mrb[0].mxu0 %v2294
        %v2383 = vpop.f32.mrb[0].mxu0
        %v2384 = vadd.f32 %v2256, %v2383
        %v2385 = vpop.f32.mrb[0].mxu0
        %2386 = vmatprep.mubr.f32.mxu0 0.0
        %2387 = vmatmul.mubr.f32.gmra.mrb[0].mxu0 %v2297
        %v2388 = vpop.f32.mrb[0].mxu0
        %v2389 = vadd.f32 %v2261, %v2388
        %v2390 = vpop.f32.mrb[0].mxu0
        %2391 = vmatprep.mubr.f32.mxu0 0.0
        %2392 = vmatmul.mubr.f32.gmra.mrb[0].mxu0 %v2300
        %v2393 = vpop.f32.mrb[0].mxu0
        %v2394 = vadd.f32 %v2266, %v2393
        %v2395 = vpop.f32.mrb[0].mxu0
        %2396 = vmatprep.mubr.f32.mxu0 0.0
        %2397 = vmatmul.mubr.f32.gmra.mrb[0].mxu0 %v2303
        %v2398 = vpop.f32.mrb[0].mxu0
        %v2399 = vadd.f32 %v2271, %v2398
        %v2400 = vpop.f32.mrb[0].mxu0
        %2401 = vmatprep.mubr.f32.mxu0 0.0
        %2402 = vmatmul.mubr.f32.gmra.mrb[0].mxu0 %v2306
        %v2403 = vpop.f32.mrb[0].mxu0
        %v2404 = vadd.f32 %v2276, %v2403
        %v2405 = vpop.f32.mrb[0].mxu0
        %2406 = vmatprep.mubr.f32.mxu0 0.0
        %2407 = vmatmul.mubr.f32.gmra.mrb[0].mxu0 %v2309
        %v2408 = vpop.f32.mrb[0].mxu0
        %v2409 = vadd.f32 %v2281, %v2408
        %v2410 = vpop.f32.mrb[0].mxu0
        %2411 = vmatprep.mubr.f32.mxu0 0.0
        %2412 = vmatmul.mubr.f32.gmra.mrb[0].mxu0 %v2312
        %v2413 = vpop.f32.mrb[0].mxu0
        %v2414 = vadd.f32 %v2286, %v2413
        %v2415 = vpop.f32.mrb[0].mxu0
        %2416 = vmatprep.mubr.f32.mxu0 0.0
        %2417 = vmatmul.mubr.f32.gmra.mrb[0].mxu0 %v2315
        %v2418 = vpop.f32.mrb[0].mxu0
        %v2419 = vadd.f32 %v2291, %v2418
        %v2420 = vpop.f32.mrb[0].mxu0
        %2421 = vdwg.mxu0
        %v2422 = vand.u32 2147483647, %v2384
        %vm2423 = vcmp.le.f32.partialorder %v2422, 0.7853982
        %vm2424 = vcmp.lt.s32.totalorder %v2384, 0
        %v2425 = vand.u32 %v2384, 2139095040
        %v2426 = vshrl.u32 %v2425, 23
        %v2427 = vsub.s32 %v2426, 127
        %v2428 = vand.u32 2147483647, %v2384
        %v2429 = vand.u32 %v2428, 8388607
        %v2430 = vor.u32 %v2429, 8388608
        %v2431 = vsub.s32 0, %v2430
        %v2432 = vadd.s32 %v2427, 1
        %vm2433 = vcmp.gt.s32.totalorder %v2432, 0
        %v2434 = vsel %vm2433, %v2432, 0
        %v2435 = vshrl.u32 %v2434, 5
        %v2436 = vand.u32 %v2434, 31
        %v2437 = vsub.s32 32, %v2436
        %v2438 = vshrl.u32 683565275, %v2437
        %v2439 = vshll.u32 683565275, %v2436
        %v2440 = vshrl.u32 2475754826, %v2437
        %v2441 = vor.u32 %v2439, %v2440
        %v2442 = vshll.u32 2475754826, %v2436
        %v2443 = vshrl.u32 2131351028, %v2437
        %v2444 = vor.u32 %v2442, %v2443
        %v2445 = vshll.u32 2131351028, %v2436
        %v2446 = vshrl.u32 2102212464, %v2437
        %v2447 = vor.u32 %v2445, %v2446
        %v2448 = vshll.u32 2102212464, %v2436
        %v2449 = vshrl.u32 920167782, %v2437
        %v2450 = vor.u32 %v2448, %v2449
        %v2451 = vshll.u32 920167782, %v2436
        %v2452 = vshrl.u32 1326507024, %v2437
        %v2453 = vor.u32 %v2451, %v2452
        %vm2454 = vcmp.lt.s32.totalorder %v2435, 1
        %vm2455 = vcmp.lt.s32.totalorder %v2435, 2
        %vm2456 = vcmp.lt.s32.totalorder %v2435, 3
        %vm2457 = vcmp.lt.s32.totalorder %v2435, 4
        %v2458 = vsel %vm2454, %v2438, %v2441
        %v2459 = vsel %vm2457, %v2447, 2102212464
        %v2460 = vsel %vm2456, %v2444, %v2459
        %v2461 = vsel %vm2455, %v2458, %v2460
        %v2462 = vsel %vm2454, %v2441, %v2444
        %v2463 = vsel %vm2457, %v2450, 920167782
        %v2464 = vsel %vm2456, %v2447, %v2463
        %v2465 = vsel %vm2455, %v2462, %v2464
        %v2466 = vsel %vm2454, %v2444, %v2447
        %v2467 = vsel %vm2457, %v2453, 1326507024
        %v2468 = vsel %vm2456, %v2450, %v2467
        %v2469 = vsel %vm2455, %v2466, %v2468
        %v2470 = vshll.u32 %v2430, 8
        %v2471 = vmul.u32.u64.compose %v2470, %v2469
        %v2472 = vextract.low.u32 %v2471
        %v2473 = vextract.high.u32 %v2471
        %v2474 = vmul.u32.u64.compose %v2470, %v2465
        %v2475 = vextract.low.u32 %v2474
        %v2476 = vextract.high.u32 %v2474
        %v2477 = vmul.u32 %v2470, %v2461
        %v2478 = vadd.s32 %v2473, %v2475
        %vm2479 = vc.u32 %v2473, %v2475
        %v2480 = vadd.s32 %v2476, 1
        %v2481 = vsel %vm2479, %v2480, %v2476
        %v2482 = vadd.s32 %v2477, %v2481
        %v2483 = vadd.s32 %v2482, 536870912
        %v2484 = vshrl.u32 %v2483, 30
        %v2485 = vshll.u32 %v2484, 30
        %v2486 = vsub.s32 %v2482, %v2485
        %vm2487 = vcmp.lt.s32.totalorder %v2486, 0
        %v2488 = vsub.s32 0, %v2486
        %v2489 = vsel %vm2487, %v2488, %v2486
        %v2490 = vclz %v2489
        %v2491 = vsub.s32 %v2490, 2
        %vm2492 = vcmp.gt.s32.totalorder 0, %v2491
        %v2493 = vsel %vm2492, 0, %v2491
        %v2494 = vsub.s32 32, %v2493
        %v2495 = vshll.u32 %v2486, %v2493
        %v2496 = vshrl.u32 %v2478, %v2494
        %v2497 = vor.u32 %v2495, %v2496
        %v2498 = vsub.s32 4294967266, %v2493
        %v2499 = vadd.s32 %v2498, 127
        %v2500 = vshll.u32 %v2499, 23
        %v2501 = vor.u32 4788187, %v2500
        %v2502 = vand.u32 2147483647, %v2501
        %v2504 = vcvt.s32.f32 %v2497
        %v2505 = vmul.f32 %v2504, %v2502
        %v2506 = vxor.u32 %v2505, 2147483648
        %v2507 = vsel %vm2424, %v2506, %v2505
        %v2508 = vsub.s32 4, %v2484
        %v2509 = vsel %vm2424, %v2508, %v2484
        %v2510 = vsel %vm2423, %v2384, %v2507
        %v2511 = vsel %vm2423, 0, %v2509
        %v2512 = vcosq.f32.pop %v2510
        %v2513 = vsinq.f32.pop %v2510
        %vm2514 = vweird.f32 %v2384
        %v2515 = vadd.s32 %v2511, 3
        %v2516 = vand.u32 %v2515, 3
        %vm2517 = vcmp.lt.s32.totalorder %v2516, 2
        %vm2518 = vcmp.eq.s32.totalorder %v2516, 0
        %v2519 = vxor.u32 %v2513, 2147483648
        %v2520 = vsel %vm2518, %v2512, %v2519
        %vm2521 = vcmp.eq.s32.totalorder %v2516, 2
        %v2522 = vxor.u32 %v2512, 2147483648
        %v2523 = vsel %vm2521, %v2522, %v2513
        %v2524 = vsel %vm2517, %v2520, %v2523
        %v2525 = vsel %vm2514, nan, %v2524
        %v2526 = vand.u32 2147483647, %v2389
        %vm2527 = vcmp.le.f32.partialorder %v2526, 0.7853982
        %vm2528 = vcmp.lt.s32.totalorder %v2389, 0
        %v2529 = vand.u32 %v2389, 2139095040
        %v2530 = vshrl.u32 %v2529, 23
        %v2531 = vsub.s32 %v2530, 127
        %v2532 = vand.u32 2147483647, %v2389
        %v2533 = vand.u32 %v2532, 8388607
        %v2534 = vor.u32 %v2533, 8388608
        %v2535 = vsub.s32 0, %v2534
        %v2536 = vadd.s32 %v2531, 1
        %vm2537 = vcmp.gt.s32.totalorder %v2536, 0
        %v2538 = vsel %vm2537, %v2536, 0
        %v2539 = vshrl.u32 %v2538, 5
        %v2540 = vand.u32 %v2538, 31
        %v2541 = vsub.s32 32, %v2540
        %v2542 = vshrl.u32 683565275, %v2541
        %v2543 = vshll.u32 683565275, %v2540
        %v2544 = vshrl.u32 2475754826, %v2541
        %v2545 = vor.u32 %v2543, %v2544
        %v2546 = vshll.u32 2475754826, %v2540
        %v2547 = vshrl.u32 2131351028, %v2541
        %v2548 = vor.u32 %v2546, %v2547
        %v2549 = vshll.u32 2131351028, %v2540
        %v2550 = vshrl.u32 2102212464, %v2541
        %v2551 = vor.u32 %v2549, %v2550
        %v2552 = vshll.u32 2102212464, %v2540
        %v2553 = vshrl.u32 920167782, %v2541
        %v2554 = vor.u32 %v2552, %v2553
        %v2555 = vshll.u32 920167782, %v2540
        %v2556 = vshrl.u32 1326507024, %v2541
        %v2557 = vor.u32 %v2555, %v2556
        %vm2558 = vcmp.lt.s32.totalorder %v2539, 1
        %vm2559 = vcmp.lt.s32.totalorder %v2539, 2
        %vm2560 = vcmp.lt.s32.totalorder %v2539, 3
        %vm2561 = vcmp.lt.s32.totalorder %v2539, 4
        %v2562 = vsel %vm2558, %v2542, %v2545
        %v2563 = vsel %vm2561, %v2551, 2102212464
        %v2564 = vsel %vm2560, %v2548, %v2563
        %v2565 = vsel %vm2559, %v2562, %v2564
        %v2566 = vsel %vm2558, %v2545, %v2548
        %v2567 = vsel %vm2561, %v2554, 920167782
        %v2568 = vsel %vm2560, %v2551, %v2567
        %v2569 = vsel %vm2559, %v2566, %v2568
        %v2570 = vsel %vm2558, %v2548, %v2551
        %v2571 = vsel %vm2561, %v2557, 1326507024
        %v2572 = vsel %vm2560, %v2554, %v2571
        %v2573 = vsel %vm2559, %v2570, %v2572
        %v2574 = vshll.u32 %v2534, 8
        %v2575 = vmul.u32.u64.compose %v2574, %v2573
        %v2576 = vextract.low.u32 %v2575
        %v2577 = vextract.high.u32 %v2575
        %v2578 = vmul.u32.u64.compose %v2574, %v2569
        %v2579 = vextract.low.u32 %v2578
        %v2580 = vextract.high.u32 %v2578
        %v2581 = vmul.u32 %v2574, %v2565
        %v2582 = vadd.s32 %v2577, %v2579
        %vm2583 = vc.u32 %v2577, %v2579
        %v2584 = vadd.s32 %v2580, 1
        %v2585 = vsel %vm2583, %v2584, %v2580
        %v2586 = vadd.s32 %v2581, %v2585
        %v2587 = vadd.s32 %v2586, 536870912
        %v2588 = vshrl.u32 %v2587, 30
        %v2589 = vshll.u32 %v2588, 30
        %v2590 = vsub.s32 %v2586, %v2589
        %vm2591 = vcmp.lt.s32.totalorder %v2590, 0
        %v2592 = vsub.s32 0, %v2590
        %v2593 = vsel %vm2591, %v2592, %v2590
        %v2594 = vclz %v2593
        %v2595 = vsub.s32 %v2594, 2
        %vm2596 = vcmp.gt.s32.totalorder 0, %v2595
        %v2597 = vsel %vm2596, 0, %v2595
        %v2598 = vsub.s32 32, %v2597
        %v2599 = vshll.u32 %v2590, %v2597
        %v2600 = vshrl.u32 %v2582, %v2598
        %v2601 = vor.u32 %v2599, %v2600
        %v2602 = vsub.s32 4294967266, %v2597
        %v2603 = vadd.s32 %v2602, 127
        %v2604 = vshll.u32 %v2603, 23
        %v2605 = vor.u32 4788187, %v2604
        %v2606 = vand.u32 2147483647, %v2605
        %v2608 = vcvt.s32.f32 %v2601
        %v2609 = vmul.f32 %v2608, %v2606
        %v2610 = vxor.u32 %v2609, 2147483648
        %v2611 = vsel %vm2528, %v2610, %v2609
        %v2612 = vsub.s32 4, %v2588
        %v2613 = vsel %vm2528, %v2612, %v2588
        %v2614 = vsel %vm2527, %v2389, %v2611
        %v2615 = vsel %vm2527, 0, %v2613
        %v2616 = vcosq.f32.pop %v2614
        %v2617 = vsinq.f32.pop %v2614
        %vm2618 = vweird.f32 %v2389
        %v2619 = vadd.s32 %v2615, 3
        %v2620 = vand.u32 %v2619, 3
        %vm2621 = vcmp.lt.s32.totalorder %v2620, 2
        %vm2622 = vcmp.eq.s32.totalorder %v2620, 0
        %v2623 = vxor.u32 %v2617, 2147483648
        %v2624 = vsel %vm2622, %v2616, %v2623
        %vm2625 = vcmp.eq.s32.totalorder %v2620, 2
        %v2626 = vxor.u32 %v2616, 2147483648
        %v2627 = vsel %vm2625, %v2626, %v2617
        %v2628 = vsel %vm2621, %v2624, %v2627
        %v2629 = vsel %vm2618, nan, %v2628
        %v2630 = vand.u32 2147483647, %v2394
        %vm2631 = vcmp.le.f32.partialorder %v2630, 0.7853982
        %vm2632 = vcmp.lt.s32.totalorder %v2394, 0
        %v2633 = vand.u32 %v2394, 2139095040
        %v2634 = vshrl.u32 %v2633, 23
        %v2635 = vsub.s32 %v2634, 127
        %v2636 = vand.u32 2147483647, %v2394
        %v2637 = vand.u32 %v2636, 8388607
        %v2638 = vor.u32 %v2637, 8388608
        %v2639 = vsub.s32 0, %v2638
        %v2640 = vadd.s32 %v2635, 1
        %vm2641 = vcmp.gt.s32.totalorder %v2640, 0
        %v2642 = vsel %vm2641, %v2640, 0
        %v2643 = vshrl.u32 %v2642, 5
        %v2644 = vand.u32 %v2642, 31
        %v2645 = vsub.s32 32, %v2644
        %v2646 = vshrl.u32 683565275, %v2645
        %v2647 = vshll.u32 683565275, %v2644
        %v2648 = vshrl.u32 2475754826, %v2645
        %v2649 = vor.u32 %v2647, %v2648
        %v2650 = vshll.u32 2475754826, %v2644
        %v2651 = vshrl.u32 2131351028, %v2645
        %v2652 = vor.u32 %v2650, %v2651
        %v2653 = vshll.u32 2131351028, %v2644
        %v2654 = vshrl.u32 2102212464, %v2645
        %v2655 = vor.u32 %v2653, %v2654
        %v2656 = vshll.u32 2102212464, %v2644
        %v2657 = vshrl.u32 920167782, %v2645
        %v2658 = vor.u32 %v2656, %v2657
        %v2659 = vshll.u32 920167782, %v2644
        %v2660 = vshrl.u32 1326507024, %v2645
        %v2661 = vor.u32 %v2659, %v2660
        %vm2662 = vcmp.lt.s32.totalorder %v2643, 1
        %vm2663 = vcmp.lt.s32.totalorder %v2643, 2
        %vm2664 = vcmp.lt.s32.totalorder %v2643, 3
        %vm2665 = vcmp.lt.s32.totalorder %v2643, 4
        %v2666 = vsel %vm2662, %v2646, %v2649
        %v2667 = vsel %vm2665, %v2655, 2102212464
        %v2668 = vsel %vm2664, %v2652, %v2667
        %v2669 = vsel %vm2663, %v2666, %v2668
        %v2670 = vsel %vm2662, %v2649, %v2652
        %v2671 = vsel %vm2665, %v2658, 920167782
        %v2672 = vsel %vm2664, %v2655, %v2671
        %v2673 = vsel %vm2663, %v2670, %v2672
        %v2674 = vsel %vm2662, %v2652, %v2655
        %v2675 = vsel %vm2665, %v2661, 1326507024
        %v2676 = vsel %vm2664, %v2658, %v2675
        %v2677 = vsel %vm2663, %v2674, %v2676
        %v2678 = vshll.u32 %v2638, 8
        %v2679 = vmul.u32.u64.compose %v2678, %v2677
        %v2680 = vextract.low.u32 %v2679
        %v2681 = vextract.high.u32 %v2679
        %v2682 = vmul.u32.u64.compose %v2678, %v2673
        %v2683 = vextract.low.u32 %v2682
        %v2684 = vextract.high.u32 %v2682
        %v2685 = vmul.u32 %v2678, %v2669
        %v2686 = vadd.s32 %v2681, %v2683
        %vm2687 = vc.u32 %v2681, %v2683
        %v2688 = vadd.s32 %v2684, 1
        %v2689 = vsel %vm2687, %v2688, %v2684
        %v2690 = vadd.s32 %v2685, %v2689
        %v2691 = vadd.s32 %v2690, 536870912
        %v2692 = vshrl.u32 %v2691, 30
        %v2693 = vshll.u32 %v2692, 30
        %v2694 = vsub.s32 %v2690, %v2693
        %vm2695 = vcmp.lt.s32.totalorder %v2694, 0
        %v2696 = vsub.s32 0, %v2694
        %v2697 = vsel %vm2695, %v2696, %v2694
        %v2698 = vclz %v2697
        %v2699 = vsub.s32 %v2698, 2
        %vm2700 = vcmp.gt.s32.totalorder 0, %v2699
        %v2701 = vsel %vm2700, 0, %v2699
        %v2702 = vsub.s32 32, %v2701
        %v2703 = vshll.u32 %v2694, %v2701
        %v2704 = vshrl.u32 %v2686, %v2702
        %v2705 = vor.u32 %v2703, %v2704
        %v2706 = vsub.s32 4294967266, %v2701
        %v2707 = vadd.s32 %v2706, 127
        %v2708 = vshll.u32 %v2707, 23
        %v2709 = vor.u32 4788187, %v2708
        %v2710 = vand.u32 2147483647, %v2709
        %v2712 = vcvt.s32.f32 %v2705
        %v2713 = vmul.f32 %v2712, %v2710
        %v2714 = vxor.u32 %v2713, 2147483648
        %v2715 = vsel %vm2632, %v2714, %v2713
        %v2716 = vsub.s32 4, %v2692
        %v2717 = vsel %vm2632, %v2716, %v2692
        %v2718 = vsel %vm2631, %v2394, %v2715
        %v2719 = vsel %vm2631, 0, %v2717
        %v2720 = vcosq.f32.pop %v2718
        %v2721 = vsinq.f32.pop %v2718
        %vm2722 = vweird.f32 %v2394
        %v2723 = vadd.s32 %v2719, 3
        %v2724 = vand.u32 %v2723, 3
        %vm2725 = vcmp.lt.s32.totalorder %v2724, 2
        %vm2726 = vcmp.eq.s32.totalorder %v2724, 0
        %v2727 = vxor.u32 %v2721, 2147483648
        %v2728 = vsel %vm2726, %v2720, %v2727
        %vm2729 = vcmp.eq.s32.totalorder %v2724, 2
        %v2730 = vxor.u32 %v2720, 2147483648
        %v2731 = vsel %vm2729, %v2730, %v2721
        %v2732 = vsel %vm2725, %v2728, %v2731
        %v2733 = vsel %vm2722, nan, %v2732
        %v2734 = vand.u32 2147483647, %v2399
        %vm2735 = vcmp.le.f32.partialorder %v2734, 0.7853982
        %vm2736 = vcmp.lt.s32.totalorder %v2399, 0
        %v2737 = vand.u32 %v2399, 2139095040
        %v2738 = vshrl.u32 %v2737, 23
        %v2739 = vsub.s32 %v2738, 127
        %v2740 = vand.u32 2147483647, %v2399
        %v2741 = vand.u32 %v2740, 8388607
        %v2742 = vor.u32 %v2741, 8388608
        %v2743 = vsub.s32 0, %v2742
        %v2744 = vadd.s32 %v2739, 1
        %vm2745 = vcmp.gt.s32.totalorder %v2744, 0
        %v2746 = vsel %vm2745, %v2744, 0
        %v2747 = vshrl.u32 %v2746, 5
        %v2748 = vand.u32 %v2746, 31
        %v2749 = vsub.s32 32, %v2748
        %v2750 = vshrl.u32 683565275, %v2749
        %v2751 = vshll.u32 683565275, %v2748
        %v2752 = vshrl.u32 2475754826, %v2749
        %v2753 = vor.u32 %v2751, %v2752
        %v2754 = vshll.u32 2475754826, %v2748
        %v2755 = vshrl.u32 2131351028, %v2749
        %v2756 = vor.u32 %v2754, %v2755
        %v2757 = vshll.u32 2131351028, %v2748
        %v2758 = vshrl.u32 2102212464, %v2749
        %v2759 = vor.u32 %v2757, %v2758
        %v2760 = vshll.u32 2102212464, %v2748
        %v2761 = vshrl.u32 920167782, %v2749
        %v2762 = vor.u32 %v2760, %v2761
        %v2763 = vshll.u32 920167782, %v2748
        %v2764 = vshrl.u32 1326507024, %v2749
        %v2765 = vor.u32 %v2763, %v2764
        %vm2766 = vcmp.lt.s32.totalorder %v2747, 1
        %vm2767 = vcmp.lt.s32.totalorder %v2747, 2
        %vm2768 = vcmp.lt.s32.totalorder %v2747, 3
        %vm2769 = vcmp.lt.s32.totalorder %v2747, 4
        %v2770 = vsel %vm2766, %v2750, %v2753
        %v2771 = vsel %vm2769, %v2759, 2102212464
        %v2772 = vsel %vm2768, %v2756, %v2771
        %v2773 = vsel %vm2767, %v2770, %v2772
        %v2774 = vsel %vm2766, %v2753, %v2756
        %v2775 = vsel %vm2769, %v2762, 920167782
        %v2776 = vsel %vm2768, %v2759, %v2775
        %v2777 = vsel %vm2767, %v2774, %v2776
        %v2778 = vsel %vm2766, %v2756, %v2759
        %v2779 = vsel %vm2769, %v2765, 1326507024
        %v2780 = vsel %vm2768, %v2762, %v2779
        %v2781 = vsel %vm2767, %v2778, %v2780
        %v2782 = vshll.u32 %v2742, 8
        %v2783 = vmul.u32.u64.compose %v2782, %v2781
        %v2784 = vextract.low.u32 %v2783
        %v2785 = vextract.high.u32 %v2783
        %v2786 = vmul.u32.u64.compose %v2782, %v2777
        %v2787 = vextract.low.u32 %v2786
        %v2788 = vextract.high.u32 %v2786
        %v2789 = vmul.u32 %v2782, %v2773
        %v2790 = vadd.s32 %v2785, %v2787
        %vm2791 = vc.u32 %v2785, %v2787
        %v2792 = vadd.s32 %v2788, 1
        %v2793 = vsel %vm2791, %v2792, %v2788
        %v2794 = vadd.s32 %v2789, %v2793
        %v2795 = vadd.s32 %v2794, 536870912
        %v2796 = vshrl.u32 %v2795, 30
        %v2797 = vshll.u32 %v2796, 30
        %v2798 = vsub.s32 %v2794, %v2797
        %vm2799 = vcmp.lt.s32.totalorder %v2798, 0
        %v2800 = vsub.s32 0, %v2798
        %v2801 = vsel %vm2799, %v2800, %v2798
        %v2802 = vclz %v2801
        %v2803 = vsub.s32 %v2802, 2
        %vm2804 = vcmp.gt.s32.totalorder 0, %v2803
        %v2805 = vsel %vm2804, 0, %v2803
        %v2806 = vsub.s32 32, %v2805
        %v2807 = vshll.u32 %v2798, %v2805
        %v2808 = vshrl.u32 %v2790, %v2806
        %v2809 = vor.u32 %v2807, %v2808
        %v2810 = vsub.s32 4294967266, %v2805
        %v2811 = vadd.s32 %v2810, 127
        %v2812 = vshll.u32 %v2811, 23
        %v2813 = vor.u32 4788187, %v2812
        %v2814 = vand.u32 2147483647, %v2813
        %v2816 = vcvt.s32.f32 %v2809
        %v2817 = vmul.f32 %v2816, %v2814
        %v2818 = vxor.u32 %v2817, 2147483648
        %v2819 = vsel %vm2736, %v2818, %v2817
        %v2820 = vsub.s32 4, %v2796
        %v2821 = vsel %vm2736, %v2820, %v2796
        %v2822 = vsel %vm2735, %v2399, %v2819
        %v2823 = vsel %vm2735, 0, %v2821
        %v2824 = vcosq.f32.pop %v2822
        %v2825 = vsinq.f32.pop %v2822
        %vm2826 = vweird.f32 %v2399
        %v2827 = vadd.s32 %v2823, 3
        %v2828 = vand.u32 %v2827, 3
        %vm2829 = vcmp.lt.s32.totalorder %v2828, 2
        %vm2830 = vcmp.eq.s32.totalorder %v2828, 0
        %v2831 = vxor.u32 %v2825, 2147483648
        %v2832 = vsel %vm2830, %v2824, %v2831
        %vm2833 = vcmp.eq.s32.totalorder %v2828, 2
        %v2834 = vxor.u32 %v2824, 2147483648
        %v2835 = vsel %vm2833, %v2834, %v2825
        %v2836 = vsel %vm2829, %v2832, %v2835
        %v2837 = vsel %vm2826, nan, %v2836
        %v2838 = vand.u32 2147483647, %v2404
        %vm2839 = vcmp.le.f32.partialorder %v2838, 0.7853982
        %vm2840 = vcmp.lt.s32.totalorder %v2404, 0
        %v2841 = vand.u32 %v2404, 2139095040
        %v2842 = vshrl.u32 %v2841, 23
        %v2843 = vsub.s32 %v2842, 127
        %v2844 = vand.u32 2147483647, %v2404
        %v2845 = vand.u32 %v2844, 8388607
        %v2846 = vor.u32 %v2845, 8388608
        %v2847 = vsub.s32 0, %v2846
        %v2848 = vadd.s32 %v2843, 1
        %vm2849 = vcmp.gt.s32.totalorder %v2848, 0
        %v2850 = vsel %vm2849, %v2848, 0
        %v2851 = vshrl.u32 %v2850, 5
        %v2852 = vand.u32 %v2850, 31
        %v2853 = vsub.s32 32, %v2852
        %v2854 = vshrl.u32 683565275, %v2853
        %v2855 = vshll.u32 683565275, %v2852
        %v2856 = vshrl.u32 2475754826, %v2853
        %v2857 = vor.u32 %v2855, %v2856
        %v2858 = vshll.u32 2475754826, %v2852
        %v2859 = vshrl.u32 2131351028, %v2853
        %v2860 = vor.u32 %v2858, %v2859
        %v2861 = vshll.u32 2131351028, %v2852
        %v2862 = vshrl.u32 2102212464, %v2853
        %v2863 = vor.u32 %v2861, %v2862
        %v2864 = vshll.u32 2102212464, %v2852
        %v2865 = vshrl.u32 920167782, %v2853
        %v2866 = vor.u32 %v2864, %v2865
        %v2867 = vshll.u32 920167782, %v2852
        %v2868 = vshrl.u32 1326507024, %v2853
        %v2869 = vor.u32 %v2867, %v2868
        %vm2870 = vcmp.lt.s32.totalorder %v2851, 1
        %vm2871 = vcmp.lt.s32.totalorder %v2851, 2
        %vm2872 = vcmp.lt.s32.totalorder %v2851, 3
        %vm2873 = vcmp.lt.s32.totalorder %v2851, 4
        %v2874 = vsel %vm2870, %v2854, %v2857
        %v2875 = vsel %vm2873, %v2863, 2102212464
        %v2876 = vsel %vm2872, %v2860, %v2875
        %v2877 = vsel %vm2871, %v2874, %v2876
        %v2878 = vsel %vm2870, %v2857, %v2860
        %v2879 = vsel %vm2873, %v2866, 920167782
        %v2880 = vsel %vm2872, %v2863, %v2879
        %v2881 = vsel %vm2871, %v2878, %v2880
        %v2882 = vsel %vm2870, %v2860, %v2863
        %v2883 = vsel %vm2873, %v2869, 1326507024
        %v2884 = vsel %vm2872, %v2866, %v2883
        %v2885 = vsel %vm2871, %v2882, %v2884
        %v2886 = vshll.u32 %v2846, 8
        %v2887 = vmul.u32.u64.compose %v2886, %v2885
        %v2888 = vextract.low.u32 %v2887
        %v2889 = vextract.high.u32 %v2887
        %v2890 = vmul.u32.u64.compose %v2886, %v2881
        %v2891 = vextract.low.u32 %v2890
        %v2892 = vextract.high.u32 %v2890
        %v2893 = vmul.u32 %v2886, %v2877
        %v2894 = vadd.s32 %v2889, %v2891
        %vm2895 = vc.u32 %v2889, %v2891
        %v2896 = vadd.s32 %v2892, 1
        %v2897 = vsel %vm2895, %v2896, %v2892
        %v2898 = vadd.s32 %v2893, %v2897
        %v2899 = vadd.s32 %v2898, 536870912
        %v2900 = vshrl.u32 %v2899, 30
        %v2901 = vshll.u32 %v2900, 30
        %v2902 = vsub.s32 %v2898, %v2901
        %vm2903 = vcmp.lt.s32.totalorder %v2902, 0
        %v2904 = vsub.s32 0, %v2902
        %v2905 = vsel %vm2903, %v2904, %v2902
        %v2906 = vclz %v2905
        %v2907 = vsub.s32 %v2906, 2
        %vm2908 = vcmp.gt.s32.totalorder 0, %v2907
        %v2909 = vsel %vm2908, 0, %v2907
        %v2910 = vsub.s32 32, %v2909
        %v2911 = vshll.u32 %v2902, %v2909
        %v2912 = vshrl.u32 %v2894, %v2910
        %v2913 = vor.u32 %v2911, %v2912
        %v2914 = vsub.s32 4294967266, %v2909
        %v2915 = vadd.s32 %v2914, 127
        %v2916 = vshll.u32 %v2915, 23
        %v2917 = vor.u32 4788187, %v2916
        %v2918 = vand.u32 2147483647, %v2917
        %v2920 = vcvt.s32.f32 %v2913
        %v2921 = vmul.f32 %v2920, %v2918
        %v2922 = vxor.u32 %v2921, 2147483648
        %v2923 = vsel %vm2840, %v2922, %v2921
        %v2924 = vsub.s32 4, %v2900
        %v2925 = vsel %vm2840, %v2924, %v2900
        %v2926 = vsel %vm2839, %v2404, %v2923
        %v2927 = vsel %vm2839, 0, %v2925
        %v2928 = vcosq.f32.pop %v2926
        %v2929 = vsinq.f32.pop %v2926
        %vm2930 = vweird.f32 %v2404
        %v2931 = vadd.s32 %v2927, 3
        %v2932 = vand.u32 %v2931, 3
        %vm2933 = vcmp.lt.s32.totalorder %v2932, 2
        %vm2934 = vcmp.eq.s32.totalorder %v2932, 0
        %v2935 = vxor.u32 %v2929, 2147483648
        %v2936 = vsel %vm2934, %v2928, %v2935
        %vm2937 = vcmp.eq.s32.totalorder %v2932, 2
        %v2938 = vxor.u32 %v2928, 2147483648
        %v2939 = vsel %vm2937, %v2938, %v2929
        %v2940 = vsel %vm2933, %v2936, %v2939
        %v2941 = vsel %vm2930, nan, %v2940
        %v2942 = vand.u32 2147483647, %v2409
        %vm2943 = vcmp.le.f32.partialorder %v2942, 0.7853982
        %vm2944 = vcmp.lt.s32.totalorder %v2409, 0
        %v2945 = vand.u32 %v2409, 2139095040
        %v2946 = vshrl.u32 %v2945, 23
        %v2947 = vsub.s32 %v2946, 127
        %v2948 = vand.u32 2147483647, %v2409
        %v2949 = vand.u32 %v2948, 8388607
        %v2950 = vor.u32 %v2949, 8388608
        %v2951 = vsub.s32 0, %v2950
        %v2952 = vadd.s32 %v2947, 1
        %vm2953 = vcmp.gt.s32.totalorder %v2952, 0
        %v2954 = vsel %vm2953, %v2952, 0
        %v2955 = vshrl.u32 %v2954, 5
        %v2956 = vand.u32 %v2954, 31
        %v2957 = vsub.s32 32, %v2956
        %v2958 = vshrl.u32 683565275, %v2957
        %v2959 = vshll.u32 683565275, %v2956
        %v2960 = vshrl.u32 2475754826, %v2957
        %v2961 = vor.u32 %v2959, %v2960
        %v2962 = vshll.u32 2475754826, %v2956
        %v2963 = vshrl.u32 2131351028, %v2957
        %v2964 = vor.u32 %v2962, %v2963
        %v2965 = vshll.u32 2131351028, %v2956
        %v2966 = vshrl.u32 2102212464, %v2957
        %v2967 = vor.u32 %v2965, %v2966
        %v2968 = vshll.u32 2102212464, %v2956
        %v2969 = vshrl.u32 920167782, %v2957
        %v2970 = vor.u32 %v2968, %v2969
        %v2971 = vshll.u32 920167782, %v2956
        %v2972 = vshrl.u32 1326507024, %v2957
        %v2973 = vor.u32 %v2971, %v2972
        %vm2974 = vcmp.lt.s32.totalorder %v2955, 1
        %vm2975 = vcmp.lt.s32.totalorder %v2955, 2
        %vm2976 = vcmp.lt.s32.totalorder %v2955, 3
        %vm2977 = vcmp.lt.s32.totalorder %v2955, 4
        %v2978 = vsel %vm2974, %v2958, %v2961
        %v2979 = vsel %vm2977, %v2967, 2102212464
        %v2980 = vsel %vm2976, %v2964, %v2979
        %v2981 = vsel %vm2975, %v2978, %v2980
        %v2982 = vsel %vm2974, %v2961, %v2964
        %v2983 = vsel %vm2977, %v2970, 920167782
        %v2984 = vsel %vm2976, %v2967, %v2983
        %v2985 = vsel %vm2975, %v2982, %v2984
        %v2986 = vsel %vm2974, %v2964, %v2967
        %v2987 = vsel %vm2977, %v2973, 1326507024
        %v2988 = vsel %vm2976, %v2970, %v2987
        %v2989 = vsel %vm2975, %v2986, %v2988
        %v2990 = vshll.u32 %v2950, 8
        %v2991 = vmul.u32.u64.compose %v2990, %v2989
        %v2992 = vextract.low.u32 %v2991
        %v2993 = vextract.high.u32 %v2991
        %v2994 = vmul.u32.u64.compose %v2990, %v2985
        %v2995 = vextract.low.u32 %v2994
        %v2996 = vextract.high.u32 %v2994
        %v2997 = vmul.u32 %v2990, %v2981
        %v2998 = vadd.s32 %v2993, %v2995
        %vm2999 = vc.u32 %v2993, %v2995
        %v3000 = vadd.s32 %v2996, 1
        %v3001 = vsel %vm2999, %v3000, %v2996
        %v3002 = vadd.s32 %v2997, %v3001
        %v3003 = vadd.s32 %v3002, 536870912
        %v3004 = vshrl.u32 %v3003, 30
        %v3005 = vshll.u32 %v3004, 30
        %v3006 = vsub.s32 %v3002, %v3005
        %vm3007 = vcmp.lt.s32.totalorder %v3006, 0
        %v3008 = vsub.s32 0, %v3006
        %v3009 = vsel %vm3007, %v3008, %v3006
        %v3010 = vclz %v3009
        %v3011 = vsub.s32 %v3010, 2
        %vm3012 = vcmp.gt.s32.totalorder 0, %v3011
        %v3013 = vsel %vm3012, 0, %v3011
        %v3014 = vsub.s32 32, %v3013
        %v3015 = vshll.u32 %v3006, %v3013
        %v3016 = vshrl.u32 %v2998, %v3014
        %v3017 = vor.u32 %v3015, %v3016
        %v3018 = vsub.s32 4294967266, %v3013
        %v3019 = vadd.s32 %v3018, 127
        %v3020 = vshll.u32 %v3019, 23
        %v3021 = vor.u32 4788187, %v3020
        %v3022 = vand.u32 2147483647, %v3021
        %v3024 = vcvt.s32.f32 %v3017
        %v3025 = vmul.f32 %v3024, %v3022
        %v3026 = vxor.u32 %v3025, 2147483648
        %v3027 = vsel %vm2944, %v3026, %v3025
        %v3028 = vsub.s32 4, %v3004
        %v3029 = vsel %vm2944, %v3028, %v3004
        %v3030 = vsel %vm2943, %v2409, %v3027
        %v3031 = vsel %vm2943, 0, %v3029
        %v3032 = vcosq.f32.pop %v3030
        %v3033 = vsinq.f32.pop %v3030
        %vm3034 = vweird.f32 %v2409
        %v3035 = vadd.s32 %v3031, 3
        %v3036 = vand.u32 %v3035, 3
        %vm3037 = vcmp.lt.s32.totalorder %v3036, 2
        %vm3038 = vcmp.eq.s32.totalorder %v3036, 0
        %v3039 = vxor.u32 %v3033, 2147483648
        %v3040 = vsel %vm3038, %v3032, %v3039
        %vm3041 = vcmp.eq.s32.totalorder %v3036, 2
        %v3042 = vxor.u32 %v3032, 2147483648
        %v3043 = vsel %vm3041, %v3042, %v3033
        %v3044 = vsel %vm3037, %v3040, %v3043
        %v3045 = vsel %vm3034, nan, %v3044
        %v3046 = vand.u32 2147483647, %v2414
        %vm3047 = vcmp.le.f32.partialorder %v3046, 0.7853982
        %vm3048 = vcmp.lt.s32.totalorder %v2414, 0
        %v3049 = vand.u32 %v2414, 2139095040
        %v3050 = vshrl.u32 %v3049, 23
        %v3051 = vsub.s32 %v3050, 127
        %v3052 = vand.u32 2147483647, %v2414
        %v3053 = vand.u32 %v3052, 8388607
        %v3054 = vor.u32 %v3053, 8388608
        %v3055 = vsub.s32 0, %v3054
        %v3056 = vadd.s32 %v3051, 1
        %vm3057 = vcmp.gt.s32.totalorder %v3056, 0
        %v3058 = vsel %vm3057, %v3056, 0
        %v3059 = vshrl.u32 %v3058, 5
        %v3060 = vand.u32 %v3058, 31
        %v3061 = vsub.s32 32, %v3060
        %v3062 = vshrl.u32 683565275, %v3061
        %v3063 = vshll.u32 683565275, %v3060
        %v3064 = vshrl.u32 2475754826, %v3061
        %v3065 = vor.u32 %v3063, %v3064
        %v3066 = vshll.u32 2475754826, %v3060
        %v3067 = vshrl.u32 2131351028, %v3061
        %v3068 = vor.u32 %v3066, %v3067
        %v3069 = vshll.u32 2131351028, %v3060
        %v3070 = vshrl.u32 2102212464, %v3061
        %v3071 = vor.u32 %v3069, %v3070
        %v3072 = vshll.u32 2102212464, %v3060
        %v3073 = vshrl.u32 920167782, %v3061
        %v3074 = vor.u32 %v3072, %v3073
        %v3075 = vshll.u32 920167782, %v3060
        %v3076 = vshrl.u32 1326507024, %v3061
        %v3077 = vor.u32 %v3075, %v3076
        %vm3078 = vcmp.lt.s32.totalorder %v3059, 1
        %vm3079 = vcmp.lt.s32.totalorder %v3059, 2
        %vm3080 = vcmp.lt.s32.totalorder %v3059, 3
        %vm3081 = vcmp.lt.s32.totalorder %v3059, 4
        %v3082 = vsel %vm3078, %v3062, %v3065
        %v3083 = vsel %vm3081, %v3071, 2102212464
        %v3084 = vsel %vm3080, %v3068, %v3083
        %v3085 = vsel %vm3079, %v3082, %v3084
        %v3086 = vsel %vm3078, %v3065, %v3068
        %v3087 = vsel %vm3081, %v3074, 920167782
        %v3088 = vsel %vm3080, %v3071, %v3087
        %v3089 = vsel %vm3079, %v3086, %v3088
        %v3090 = vsel %vm3078, %v3068, %v3071
        %v3091 = vsel %vm3081, %v3077, 1326507024
        %v3092 = vsel %vm3080, %v3074, %v3091
        %v3093 = vsel %vm3079, %v3090, %v3092
        %v3094 = vshll.u32 %v3054, 8
        %v3095 = vmul.u32.u64.compose %v3094, %v3093
        %v3096 = vextract.low.u32 %v3095
        %v3097 = vextract.high.u32 %v3095
        %v3098 = vmul.u32.u64.compose %v3094, %v3089
        %v3099 = vextract.low.u32 %v3098
        %v3100 = vextract.high.u32 %v3098
        %v3101 = vmul.u32 %v3094, %v3085
        %v3102 = vadd.s32 %v3097, %v3099
        %vm3103 = vc.u32 %v3097, %v3099
        %v3104 = vadd.s32 %v3100, 1
        %v3105 = vsel %vm3103, %v3104, %v3100
        %v3106 = vadd.s32 %v3101, %v3105
        %v3107 = vadd.s32 %v3106, 536870912
        %v3108 = vshrl.u32 %v3107, 30
        %v3109 = vshll.u32 %v3108, 30
        %v3110 = vsub.s32 %v3106, %v3109
        %vm3111 = vcmp.lt.s32.totalorder %v3110, 0
        %v3112 = vsub.s32 0, %v3110
        %v3113 = vsel %vm3111, %v3112, %v3110
        %v3114 = vclz %v3113
        %v3115 = vsub.s32 %v3114, 2
        %vm3116 = vcmp.gt.s32.totalorder 0, %v3115
        %v3117 = vsel %vm3116, 0, %v3115
        %v3118 = vsub.s32 32, %v3117
        %v3119 = vshll.u32 %v3110, %v3117
        %v3120 = vshrl.u32 %v3102, %v3118
        %v3121 = vor.u32 %v3119, %v3120
        %v3122 = vsub.s32 4294967266, %v3117
        %v3123 = vadd.s32 %v3122, 127
        %v3124 = vshll.u32 %v3123, 23
        %v3125 = vor.u32 4788187, %v3124
        %v3126 = vand.u32 2147483647, %v3125
        %v3128 = vcvt.s32.f32 %v3121
        %v3129 = vmul.f32 %v3128, %v3126
        %v3130 = vxor.u32 %v3129, 2147483648
        %v3131 = vsel %vm3048, %v3130, %v3129
        %v3132 = vsub.s32 4, %v3108
        %v3133 = vsel %vm3048, %v3132, %v3108
        %v3134 = vsel %vm3047, %v2414, %v3131
        %v3135 = vsel %vm3047, 0, %v3133
        %v3136 = vcosq.f32.pop %v3134
        %v3137 = vsinq.f32.pop %v3134
        %vm3138 = vweird.f32 %v2414
        %v3139 = vadd.s32 %v3135, 3
        %v3140 = vand.u32 %v3139, 3
        %vm3141 = vcmp.lt.s32.totalorder %v3140, 2
        %vm3142 = vcmp.eq.s32.totalorder %v3140, 0
        %v3143 = vxor.u32 %v3137, 2147483648
        %v3144 = vsel %vm3142, %v3136, %v3143
        %vm3145 = vcmp.eq.s32.totalorder %v3140, 2
        %v3146 = vxor.u32 %v3136, 2147483648
        %v3147 = vsel %vm3145, %v3146, %v3137
        %v3148 = vsel %vm3141, %v3144, %v3147
        %v3149 = vsel %vm3138, nan, %v3148
        %v3150 = vand.u32 2147483647, %v2419
        %vm3151 = vcmp.le.f32.partialorder %v3150, 0.7853982
        %vm3152 = vcmp.lt.s32.totalorder %v2419, 0
        %v3153 = vand.u32 %v2419, 2139095040
        %v3154 = vshrl.u32 %v3153, 23
        %v3155 = vsub.s32 %v3154, 127
        %v3156 = vand.u32 2147483647, %v2419
        %v3157 = vand.u32 %v3156, 8388607
        %v3158 = vor.u32 %v3157, 8388608
        %v3159 = vsub.s32 0, %v3158
        %v3160 = vadd.s32 %v3155, 1
        %vm3161 = vcmp.gt.s32.totalorder %v3160, 0
        %v3162 = vsel %vm3161, %v3160, 0
        %v3163 = vshrl.u32 %v3162, 5
        %v3164 = vand.u32 %v3162, 31
        %v3165 = vsub.s32 32, %v3164
        %v3166 = vshrl.u32 683565275, %v3165
        %v3167 = vshll.u32 683565275, %v3164
        %v3168 = vshrl.u32 2475754826, %v3165
        %v3169 = vor.u32 %v3167, %v3168
        %v3170 = vshll.u32 2475754826, %v3164
        %v3171 = vshrl.u32 2131351028, %v3165
        %v3172 = vor.u32 %v3170, %v3171
        %v3173 = vshll.u32 2131351028, %v3164
        %v3174 = vshrl.u32 2102212464, %v3165
        %v3175 = vor.u32 %v3173, %v3174
        %v3176 = vshll.u32 2102212464, %v3164
        %v3177 = vshrl.u32 920167782, %v3165
        %v3178 = vor.u32 %v3176, %v3177
        %v3179 = vshll.u32 920167782, %v3164
        %v3180 = vshrl.u32 1326507024, %v3165
        %v3181 = vor.u32 %v3179, %v3180
        %vm3182 = vcmp.lt.s32.totalorder %v3163, 1
        %vm3183 = vcmp.lt.s32.totalorder %v3163, 2
        %vm3184 = vcmp.lt.s32.totalorder %v3163, 3
        %vm3185 = vcmp.lt.s32.totalorder %v3163, 4
        %v3186 = vsel %vm3182, %v3166, %v3169
        %v3187 = vsel %vm3185, %v3175, 2102212464
        %v3188 = vsel %vm3184, %v3172, %v3187
        %v3189 = vsel %vm3183, %v3186, %v3188
        %v3190 = vsel %vm3182, %v3169, %v3172
        %v3191 = vsel %vm3185, %v3178, 920167782
        %v3192 = vsel %vm3184, %v3175, %v3191
        %v3193 = vsel %vm3183, %v3190, %v3192
        %v3194 = vsel %vm3182, %v3172, %v3175
        %v3195 = vsel %vm3185, %v3181, 1326507024
        %v3196 = vsel %vm3184, %v3178, %v3195
        %v3197 = vsel %vm3183, %v3194, %v3196
        %v3198 = vshll.u32 %v3158, 8
        %v3199 = vmul.u32.u64.compose %v3198, %v3197
        %v3200 = vextract.low.u32 %v3199
        %v3201 = vextract.high.u32 %v3199
        %v3202 = vmul.u32.u64.compose %v3198, %v3193
        %v3203 = vextract.low.u32 %v3202
        %v3204 = vextract.high.u32 %v3202
        %v3205 = vmul.u32 %v3198, %v3189
        %v3206 = vadd.s32 %v3201, %v3203
        %vm3207 = vc.u32 %v3201, %v3203
        %v3208 = vadd.s32 %v3204, 1
        %v3209 = vsel %vm3207, %v3208, %v3204
        %v3210 = vadd.s32 %v3205, %v3209
        %v3211 = vadd.s32 %v3210, 536870912
        %v3212 = vshrl.u32 %v3211, 30
        %v3213 = vshll.u32 %v3212, 30
        %v3214 = vsub.s32 %v3210, %v3213
        %vm3215 = vcmp.lt.s32.totalorder %v3214, 0
        %v3216 = vsub.s32 0, %v3214
        %v3217 = vsel %vm3215, %v3216, %v3214
        %v3218 = vclz %v3217
        %v3219 = vsub.s32 %v3218, 2
        %vm3220 = vcmp.gt.s32.totalorder 0, %v3219
        %v3221 = vsel %vm3220, 0, %v3219
        %v3222 = vsub.s32 32, %v3221
        %v3223 = vshll.u32 %v3214, %v3221
        %v3224 = vshrl.u32 %v3206, %v3222
        %v3225 = vor.u32 %v3223, %v3224
        %v3226 = vsub.s32 4294967266, %v3221
        %v3227 = vadd.s32 %v3226, 127
        %v3228 = vshll.u32 %v3227, 23
        %v3229 = vor.u32 4788187, %v3228
        %v3230 = vand.u32 2147483647, %v3229
        %v3232 = vcvt.s32.f32 %v3225
        %v3233 = vmul.f32 %v3232, %v3230
        %v3234 = vxor.u32 %v3233, 2147483648
        %v3235 = vsel %vm3152, %v3234, %v3233
        %v3236 = vsub.s32 4, %v3212
        %v3237 = vsel %vm3152, %v3236, %v3212
        %v3238 = vsel %vm3151, %v2419, %v3235
        %v3239 = vsel %vm3151, 0, %v3237
        %v3240 = vcosq.f32.pop %v3238
        %v3241 = vsinq.f32.pop %v3238
        %vm3242 = vweird.f32 %v2419
        %v3243 = vadd.s32 %v3239, 3
        %v3244 = vand.u32 %v3243, 3
        %vm3245 = vcmp.lt.s32.totalorder %v3244, 2
        %vm3246 = vcmp.eq.s32.totalorder %v3244, 0
        %v3247 = vxor.u32 %v3241, 2147483648
        %v3248 = vsel %vm3246, %v3240, %v3247
        %vm3249 = vcmp.eq.s32.totalorder %v3244, 2
        %v3250 = vxor.u32 %v3240, 2147483648
        %v3251 = vsel %vm3249, %v3250, %v3241
        %v3252 = vsel %vm3245, %v3248, %v3251
        %v3253 = vsel %vm3242, nan, %v3252
        %v3254 = vld [vmem:[%s4] sm:$0xff]
        %v3255 = vld [vmem:[%s4 + $0x8] sm:$0xff]
        %v3256 = vld [vmem:[%s5] sm:$0xff]
        %v3257 = vld [vmem:[%s5 + $0x8] sm:$0xff]
        %3259 = vset.pattern.permute.xlu0 0
        %3260 = vperm.xlu0 %3259, %v3256
        %v3261 = vpop.permute.xlu0 %3260
        %3264 = vset.pattern.permute.xlu0 0
        %3265 = vperm.xlu0 %3264, %v3257
        %v3266 = vpop.permute.xlu0 %3265
        %v3269 = vsel %vm1273, %v3254, 0
        %v3272 = vsel %vm1273, %v3255, 0
        %3274 = vmatprep.subr.mxu0 0.0
        %3275 = vmatpush1.msra.mxu0 %v2525
        %3276 = vmatprep.subr.mxu0 0.0
        %3277 = vmatpush1.msra.mxu0 %v2629
        %3278 = vmatprep.subr.mxu0 0.0
        %3279 = vmatpush1.msra.mxu0 %v2733
        %3280 = vmatprep.subr.mxu0 0.0
        %3281 = vmatpush1.msra.mxu0 %v2837
        %3282 = vmatprep.subr.mxu0 0.0
        %3283 = vmatpush1.msra.mxu0 %v2941
        %3284 = vmatprep.subr.mxu0 0.0
        %3285 = vmatpush1.msra.mxu0 %v3045
        %3286 = vmatprep.subr.mxu0 0.0
        %3287 = vmatpush1.msra.mxu0 %v3149
        %3288 = vmatprep.subr.mxu0 0.0
        %3289 = vmatpush1.msra.mxu0 %v3253
        %3290 = vmatprep.subr.mxu0 0.0
        %3291 = vmatpush1.msra.mxu0 0.0
        %3292 = vmatprep.subr.mxu0 0.0
        %3293 = vmatpush1.msra.mxu0 0.0
        %3294 = vmatprep.subr.mxu0 0.0
        %3295 = vmatpush1.msra.mxu0 0.0
        %3296 = vmatprep.subr.mxu0 0.0
        %3297 = vmatpush1.msra.mxu0 0.0
        %3298 = vmatprep.subr.mxu0 0.0
        %3299 = vmatpush1.msra.mxu0 0.0
        %3300 = vmatprep.subr.mxu0 0.0
        %3301 = vmatpush1.msra.mxu0 0.0
        %3302 = vmatprep.subr.mxu0 0.0
        %3303 = vmatpush1.msra.mxu0 0.0
        %3304 = vmatprep.subr.mxu0 0.0
        %3305 = vmatpush1.msra.mxu0 0.0
        %3306 = vmatprep.subr.mxu0 0.0
        %3307 = vmatpush1.msra.mxu0 0.0
        %3308 = vmatprep.subr.mxu0 0.0
        %3309 = vmatpush1.msra.mxu0 0.0
        %3310 = vmatprep.subr.mxu0 0.0
        %3311 = vmatpush1.msra.mxu0 0.0
        %3312 = vmatprep.subr.mxu0 0.0
        %3313 = vmatpush1.msra.mxu0 0.0
        %3314 = vmatprep.subr.mxu0 0.0
        %3315 = vmatpush1.msra.mxu0 0.0
        %3316 = vmatprep.subr.mxu0 0.0
        %3317 = vmatpush1.msra.mxu0 0.0
        %3318 = vmatprep.subr.mxu0 0.0
        %3319 = vmatpush1.msra.mxu0 0.0
        %3320 = vmatprep.subr.mxu0 0.0
        %3321 = vmatpush1.msra.mxu0 0.0
        %3322 = vmatprep.subr.mxu0 0.0
        %3323 = vmatpush1.msra.mxu0 0.0
        %3324 = vmatprep.subr.mxu0 0.0
        %3325 = vmatpush1.msra.mxu0 0.0
        %3326 = vmatprep.subr.mxu0 0.0
        %3327 = vmatpush1.msra.mxu0 0.0
        %3328 = vmatprep.subr.mxu0 0.0
        %3329 = vmatpush1.msra.mxu0 0.0
        %3330 = vmatprep.subr.mxu0 0.0
        %3331 = vmatpush1.msra.mxu0 0.0
        %3332 = vmatprep.subr.mxu0 0.0
        %3333 = vmatpush1.msra.mxu0 0.0
        %3334 = vmatprep.subr.mxu0 0.0
        %3335 = vmatpush1.msra.mxu0 0.0
        %3336 = vmatprep.subr.mxu0 0.0
        %3337 = vmatpush1.msra.mxu0 0.0
        %3338 = vmatprep.mubr.f32.mxu0 0.0
        %3339 = vmatmul.mubr.f32.gmra.mrb[0].mxu0 %v3269
        %v3340 = vpop.f32.mrb[0].mxu0
        %v3341 = vadd.f32 %v3261, %v3340
        %v3342 = vpop.f32.mrb[0].mxu0
        %3343 = vmatprep.mubr.f32.mxu0 0.0
        %3344 = vmatmul.mubr.f32.gmra.mrb[0].mxu0 %v3272
        %v3345 = vpop.f32.mrb[0].mxu0
        %v3346 = vadd.f32 %v3266, %v3345
        %v3347 = vpop.f32.mrb[0].mxu0
        %3348 = vdwg.mxu0
        %v3349 = vmul.f32 %v3341, %v3346
        %v3350 = vrot.slane %v3349, 4
        %v3351 = vadd.f32 %v3349, %v3350
        %v3352 = vrot.slane %v3351, 2
        %v3353 = vadd.f32 %v3351, %v3352
        %v3354 = vrot.slane %v3353, 1
        %v3355 = vadd.f32 %v3353, %v3354
        %3356 = vst [vmem:[%s241] sm:$0x1] %v3355
        %s3357 = sand.u32 %s159, 1
        %s3358 = scalar_lea.sflag [#allocation3], %s3357
        %s3359 = sand.u32 %s159, 1
        %s3360 = scalar_lea.vmem [#allocation2], %s3359
        // Predicated region
        $region45: #{tpu_custom_call.1} parent=43 // pred_check
          %p3361 = pneg %p169
        $region46: #{tpu_custom_call.1} parent=43 // pred_check_branch
          %3363 = sbr.rel (%p3361) target = $region48
        $region47: #{tpu_custom_call.1} parent=43 // pred_region
          %s3365 = ssub.s32 16, 16
          %3366 = vsyncadd %s3358, %s3365
          %s3367 = smul.addr %s20, 16
          %s3368 = scalar_lea.hbm %s6, %s3367
          %s3370 = sshll.u32 %s3360, 4
          %s3371 = int_to_ptr.vmem [resolvable:$true] %s3370
          %3373 = dma.vmem_to_hbm [thread:$0]  %s3371, 16, %s3368, %s3358
        $region48: #{tpu_custom_call.1} parent=43 // pred_fallthru
          _
      $region44: #{tpu_custom_call.1} parent=5 // pred_fallthru
        _
      %p3374 = scmp.le.s32.totalorder 2, %s15
      // Predicated region
      $region49: #{tpu_custom_call.1} parent=5 // pred_check
        %p3375 = pneg %p3374
      $region50: #{tpu_custom_call.1} parent=5 // pred_check_branch
        %3377 = sbr.rel (%p3375) target = $region52
      $region51: #{tpu_custom_call.1} parent=5 // pred_region
        %s3378 = ssub.s32 %s15, 2
        // Predicated region
        $region53: #{tpu_custom_call.1} parent=51 // pred_check
          %p3379 = pneg %p175
        $region54: #{tpu_custom_call.1} parent=51 // pred_check_branch
          %3381 = sbr.rel (%p3379) target = $region56
        $region55: #{tpu_custom_call.1} parent=51 // pred_region
          %s3382 = sand.u32 %s160, 1
          %s3383 = scalar_lea.sflag [#allocation3], %s3382
          %s3384 = sand.u32 %s160, 1
          %s3385 = scalar_lea.vmem [#allocation2], %s3384
          %3386 = dma.done %s3383, 16
        $region56: #{tpu_custom_call.1} parent=51 // pred_fallthru
          _
      $region52: #{tpu_custom_call.1} parent=5 // pred_fallthru
        _
    $region6: #{tpu_custom_call.1} parent=1 // loop_footer
      %s19 = sadd.s32 1, %s15
    $region7: #{tpu_custom_call.1} parent=1 // loop_footer_branch
      %14 = sbr.rel target = $region3
    $region8: #{tpu_custom_call.1} parent=1 // loop_exit
      _
    %3387 = vsyncpa [#allocation3], 1
    %s3388 = scalar_lea.sflag [#allocation3], 1
    %3389 = vsyncpa %s3388, 1

</llo_original>
